<compile_context>
chip_gen: v6e
topology: v6e:2x2x1
jax: 0.10.0
libtpu: 0.0.40
codegen_flags: <defaults>
</compile_context>

<pallas_src>
import functools

import jax
import jax.numpy as jnp
from jax.experimental import pallas as pl
from jax.experimental.pallas import tpu as pltpu


# ---------------------------------------------------------------------------
# Pallas kernels
# ---------------------------------------------------------------------------
def _conv_mm_kernel(p_ref, w_ref, shift_ref, o_ref):
    """Fused Block: (patches @ w_bnfolded) + shift -> ReLU.  bf16 MXU, f32 epilogue."""
    y = jnp.dot(p_ref[...], w_ref[...], preferred_element_type=jnp.float32)
    y = jnp.maximum(y + shift_ref[...], 0.0)
    o_ref[...] = y.astype(o_ref.dtype)


def _head_kernel(ctx_ref, wq_ref, bq_ref, wc_ref, bc_ref, o_ref):
    """Fused head: qdown -> ReLU6 -> classifier -> LogSoftmax (Dropout = eval identity)."""
    q = jnp.dot(ctx_ref[...], wq_ref[...], preferred_element_type=jnp.float32)
    q = jnp.minimum(jnp.maximum(q + bq_ref[...], 0.0), 6.0)          # ReLU6
    # TODO(synk): Memory / MobileNetV2 glimpse path is not defined in the source
    # module; `query` is passed through as the memory readout (`myp`).
    logits = jnp.dot(q.astype(wc_ref.dtype), wc_ref[...],
                     preferred_element_type=jnp.float32)
    logits = logits + bc_ref[...]
    m = jnp.max(logits, axis=-1, keepdims=True)
    s = logits - m
    o_ref[...] = s - jnp.log(jnp.sum(jnp.exp(s), axis=-1, keepdims=True))


# ---------------------------------------------------------------------------
# Pallas call wrappers
# ---------------------------------------------------------------------------
_TILE_M = 256  # rows per grid step; 2 bufs of (256, 1152) bf16 stay far below VMEM limits


def _conv_matmul(patches, w2d, shift):
    """(M, 9C) bf16 @ (9C, OC) bf16 + shift -> ReLU, M tiled on a parallel grid."""
    M, K = patches.shape
    N = w2d.shape[1]
    tm = M if M <= _TILE_M else _TILE_M          # full-dim block allowed for any M
    grid_m = pl.cdiv(M, tm)
    return pl.pallas_call(
        _conv_mm_kernel,
        out_shape=jax.ShapeDtypeStruct((M, N), jnp.bfloat16),
        grid=(grid_m,),
        in_specs=[
            pl.BlockSpec((tm, K), lambda i: (i, 0)),
            pl.BlockSpec((K, N), lambda i: (0, 0)),
            pl.BlockSpec((1, N), lambda i: (0, 0)),
        ],
        out_specs=pl.BlockSpec((tm, N), lambda i: (i, 0)),
        compiler_params=pltpu.CompilerParams(dimension_semantics=("parallel",)),
        cost_estimate=pl.CostEstimate(
            flops=int(2 * M * K * N),
            transcendentals=0,
            bytes_accessed=int(2 * (M * K + K * N + M * N) + 4 * N),
        ),
    )(patches, w2d, shift)


def _fused_head(context, wq, bq, wc, bc):
    """qdown -> ReLU6 -> classifier -> LogSoftmax in a single pallas_call."""
    B, Kq = context.shape
    Nq = wq.shape[1]
    Nc = wc.shape[1]
    return pl.pallas_call(
        _head_kernel,
        out_shape=jax.ShapeDtypeStruct((B, Nc), jnp.float32),
        grid=(1,),
        in_specs=[
            pl.BlockSpec((B, Kq), lambda i: (0, 0)),
            pl.BlockSpec((Kq, Nq), lambda i: (0, 0)),
            pl.BlockSpec((1, Nq), lambda i: (0, 0)),
            pl.BlockSpec((Nq, Nc), lambda i: (0, 0)),
            pl.BlockSpec((1, Nc), lambda i: (0, 0)),
        ],
        out_specs=pl.BlockSpec((B, Nc), lambda i: (0, 0)),
        cost_estimate=pl.CostEstimate(
            flops=int(2 * B * Kq * Nq + 2 * B * Nq * Nc),
            transcendentals=int(B * (Nc + 1)),
            bytes_accessed=int(2 * (B * Kq + Kq * Nq + Nq * Nc)
                               + 4 * (Nq + Nc + B * Nc)),
        ),
    )(context, wq, bq, wc, bc)


# ---------------------------------------------------------------------------
# ContextNet Block: 3x3/stride-2 conv (no pad) + BN(eval) + ReLU, NHWC
# ---------------------------------------------------------------------------
def conv_block(x, w2d, shift, *, stride=2):
    """x: (B, H, W, C) bf16.  w2d: (9*C, OC) bf16 (BN scale folded).  shift: (1, OC) f32."""
    B, H, W, C = x.shape
    OH = (H - 3) // stride + 1
    OW = (W - 3) // stride + 1
    OC = w2d.shape[1]
    # channels-last tap gather: K ordered (kh, kw, c) -> matches weight flatten below.
    cols = [x[:, kh:kh + stride * OH:stride, kw:kw + stride * OW:stride, :]
            for kh in range(3) for kw in range(3)]
    patches = jnp.concatenate(cols, axis=-1).reshape(B * OH * OW, 9 * C)
    out = _conv_matmul(patches, w2d, shift)      # (M, OC) bf16
    return out.reshape(B, OH, OW, OC)            # free reshape, stays NHWC


# ---------------------------------------------------------------------------
# Parameter init / one-time prep (mirrors the PyTorch __init__ shapes)
# ---------------------------------------------------------------------------
def xavier_uniform(key, shape):
    fan_in = shape[1] * shape[2] * shape[3]
    fan_out = shape[0] * shape[2] * shape[3]
    bound = (6.0 / (fan_in + fan_out)) ** 0.5
    return jax.random.uniform(key, shape, jnp.float32, -bound, bound)


def linear_init(key, in_f, out_f):
    k1, k2 = jax.random.split(key)
    bound = 1.0 / (in_f ** 0.5)
    w = jax.random.uniform(k1, (in_f, out_f), jnp.float32, -bound, bound)
    b = jax.random.uniform(k2, (out_f,), jnp.float32, -bound, bound)
    return w, b


def fold_conv_bn(conv_w_oihw, gamma, beta, mean, var, eps=1e-5):
    """Fold eval-mode BatchNorm into the conv weight; return ((9C, OC) bf16, (1, OC) f32)."""
    scale = gamma / jnp.sqrt(var + eps)                        # (OC,)
    shift = beta - mean * scale                                # (OC,)
    w = conv_w_oihw.transpose(2, 3, 1, 0) * scale              # (KH, KW, C, OC) * scale[oc]
    w2d = w.reshape(-1, w.shape[-1])                           # K ordered (kh, kw, c)
    return w2d.astype(jnp.bfloat16), shift.reshape(1, -1).astype(jnp.float32)


def init_params(key, memory_size=32):
    ks = jax.random.split(key, 6)
    params = {}
    for idx, (cin, cout) in enumerate([(3, 64), (64, 128), (128, 256)]):
        w = xavier_uniform(ks[idx], (cout, cin, 3, 3))
        gamma, beta = jnp.ones((cout,)), jnp.zeros((cout,))
        mean, var = jnp.zeros((cout,)), jnp.ones((cout,))      # fresh BN, eval mode
        params[f"conv{idx + 1}"] = fold_conv_bn(w, gamma, beta, mean, var)

    # qdown: Linear(2304, memory_size).  PyTorch flattens the NCHW context as
    # c*9 + h*3 + w; our NHWC flatten is (h*3 + w)*256 + c.  Permute the weight
    # rows once at init so forward semantics match the torch module exactly.
    wq, bq = linear_init(ks[3], 2304, memory_size)
    hw_idx = jnp.arange(9)
    ch_idx = jnp.arange(256)
    perm = (hw_idx[:, None] + 9 * ch_idx[None, :]).reshape(-1)  # nhwc_row -> nchw_row
    params["qdown"] = (wq[perm].astype(jnp.bfloat16),
                       bq.reshape(1, -1).astype(jnp.float32))

    wc, bc = linear_init(ks[4], memory_size, 10)
    params["classifier"] = (wc.astype(jnp.bfloat16),
                            bc.reshape(1, -1).astype(jnp.float32))
    return params


# ---------------------------------------------------------------------------
# CifarClassifier forward
# ---------------------------------------------------------------------------
def cifar_classifier_forward(params, image, count):
    # one-time layout change of the small NCHW input -> NHWC, bf16 for the MXU.
    x = jnp.transpose(image, (0, 2, 3, 1)).astype(jnp.bfloat16)
    for name in ("conv1", "conv2", "conv3"):
        w2d, shift = params[name]
        x = conv_block(x, w2d, shift, stride=2)
    context = x.reshape(x.shape[0], -1)          # (B, 2304), NHWC-flatten order (free)

    # TODO(synk): Memory / MobileNetV2 (`self.memory.init/glimpse/__call__`) are not
    # defined in the source module; the `count` glimpse loop is skipped and `query`
    # is passed through as the memory readout inside the fused head kernel.
    del count
    wq, bq = params["qdown"]
    wc, bc = params["classifier"]
    return _fused_head(context, wq, bq, wc, bc)  # (B, 10) log-probabilities


# ---------------------------------------------------------------------------
if __name__ == "__main__":
    key = jax.random.PRNGKey(0)
    k_params, k_img = jax.random.split(key)

    memory_size = 32   # Linear(2304, memory_size)
    count = 2

    params = init_params(k_params, memory_size=memory_size)

    # CIFAR-sized input is required: ContextNet(32x32) -> 256*3*3 = 2304 features.
    image = jax.random.normal(k_img, (2, 3, 32, 32), jnp.float32)

    fwd = jax.jit(cifar_classifier_forward, static_argnums=(2,))
    out = fwd(params, image, count)
    jax.block_until_ready(out)

    assert out.shape == (2, 10)
    row_sums = jnp.exp(out).sum(axis=-1)                     # log-softmax sanity
    assert bool(jnp.all(jnp.abs(row_sums - 1.0) < 1e-3))
    assert bool(jnp.all(jnp.isfinite(out)))
    print("KERNEL_OK")
</pallas_src>

<mosaic_0001>
module attributes {stable_mosaic.version = 11 : i64} {
  func.func @_conv_mm_kernel(%arg0: i32, %arg1: memref<256x27xbf16, #tpu.memory_space<vmem>>, %arg2: memref<27x64xbf16, #tpu.memory_space<vmem>>, %arg3: memref<1x64xf32, #tpu.memory_space<vmem>>, %arg4: memref<256x64xbf16, #tpu.memory_space<vmem>>) attributes {dimension_semantics = [#tpu.dimension_semantics<parallel>], iteration_bounds = array<i64: 2>, scalar_prefetch = 0 : i64, scratch_operands = 0 : i64, tpu.core_type = #tpu.core_type<tc>, window_params = [{transform_indices = @transform_0, window_bounds = array<i64: 256, 27>}, {pipeline_mode = #tpu.pipeline_mode<synchronous>, transform_indices = @transform_1, window_bounds = array<i64: 27, 64>}, {pipeline_mode = #tpu.pipeline_mode<synchronous>, transform_indices = @transform_2, window_bounds = array<i64: 1, 64>}, {transform_indices = @transform_3, window_bounds = array<i64: 256, 64>}]} {
    %c0 = arith.constant 0 : index
    %c0_0 = arith.constant 0 : index
    %0 = vector.load %arg1[%c0, %c0_0] : memref<256x27xbf16, #tpu.memory_space<vmem>>, vector<256x27xbf16>
    %c0_1 = arith.constant 0 : index
    %c0_2 = arith.constant 0 : index
    %1 = vector.load %arg2[%c0_1, %c0_2] : memref<27x64xbf16, #tpu.memory_space<vmem>>, vector<27x64xbf16>
    %cst = arith.constant dense<0.000000e+00> : vector<256x64xf32>
    %2 = tpu.matmul %0, %1, %cst {dimension_numbers = #tpu.dot_dimension_numbers<[1], [0], [0], [1], [0, 0, 1, 1], [], []>} : vector<256x27xbf16>, vector<27x64xbf16>, vector<256x64xf32> -> vector<256x64xf32>
    %c0_3 = arith.constant 0 : index
    %c0_4 = arith.constant 0 : index
    %3 = vector.load %arg3[%c0_3, %c0_4] : memref<1x64xf32, #tpu.memory_space<vmem>>, vector<1x64xf32>
    %4 = vector.broadcast %3 : vector<1x64xf32> to vector<256x64xf32>
    %5 = arith.addf %2, %4 : vector<256x64xf32>
    %cst_5 = arith.constant 0.000000e+00 : f32
    %6 = vector.broadcast %cst_5 : f32 to vector<256x64xf32>
    %7 = arith.maximumf %5, %6 : vector<256x64xf32>
    %8 = arith.truncf %7 : vector<256x64xf32> to vector<256x64xbf16>
    %c0_6 = arith.constant 0 : index
    %c0_7 = arith.constant 0 : index
    %9 = vector.load %arg4[%c0_6, %c0_7] : memref<256x64xbf16, #tpu.memory_space<vmem>>, vector<256x64xbf16>
    tpu.vector_store %arg4[%c0_6, %c0_7], %8 {strides = array<i32>} : memref<256x64xbf16, #tpu.memory_space<vmem>>, vector<256x64xbf16>,
    return
  }
  func.func @transform_0(%arg0: i32) -> (i32, i32) {
    %c0_i32 = arith.constant 0 : i32
    %c0_i32_0 = arith.constant 0 : i32
    return %arg0, %c0_i32 : i32, i32
  }
  func.func @transform_1(%arg0: i32) -> (i32, i32) {
    %c0_i32 = arith.constant 0 : i32
    %c0_i32_0 = arith.constant 0 : i32
    %c0_i32_1 = arith.constant 0 : i32
    return %c0_i32, %c0_i32_0 : i32, i32
  }
  func.func @transform_2(%arg0: i32) -> (i32, i32) {
    %c0_i32 = arith.constant 0 : i32
    %c0_i32_0 = arith.constant 0 : i32
    %c0_i32_1 = arith.constant 0 : i32
    return %c0_i32, %c0_i32_0 : i32, i32
  }
  func.func @transform_3(%arg0: i32) -> (i32, i32) {
    %c0_i32 = arith.constant 0 : i32
    %c0_i32_0 = arith.constant 0 : i32
    return %arg0, %c0_i32 : i32, i32
  }
}

module attributes {stable_mosaic.version = 11 : i64} {
  func.func @_conv_mm_kernel(%arg0: i32, %arg1: memref<98x576xbf16, #tpu.memory_space<vmem>>, %arg2: memref<576x128xbf16, #tpu.memory_space<vmem>>, %arg3: memref<1x128xf32, #tpu.memory_space<vmem>>, %arg4: memref<98x128xbf16, #tpu.memory_space<vmem>>) attributes {dimension_semantics = [#tpu.dimension_semantics<parallel>], iteration_bounds = array<i64: 1>, scalar_prefetch = 0 : i64, scratch_operands = 0 : i64, tpu.core_type = #tpu.core_type<tc>, window_params = [{transform_indices = @transform_0, window_bounds = array<i64: 98, 576>}, {pipeline_mode = #tpu.pipeline_mode<synchronous>, transform_indices = @transform_1, window_bounds = array<i64: 576, 128>}, {pipeline_mode = #tpu.pipeline_mode<synchronous>, transform_indices = @transform_2, window_bounds = array<i64: 1, 128>}, {transform_indices = @transform_3, window_bounds = array<i64: 98, 128>}]} {
    %c0 = arith.constant 0 : index
    %c0_0 = arith.constant 0 : index
    %0 = vector.load %arg1[%c0, %c0_0] : memref<98x576xbf16, #tpu.memory_space<vmem>>, vector<98x576xbf16>
    %c0_1 = arith.constant 0 : index
    %c0_2 = arith.constant 0 : index
    %1 = vector.load %arg2[%c0_1, %c0_2] : memref<576x128xbf16, #tpu.memory_space<vmem>>, vector<576x128xbf16>
    %cst = arith.constant dense<0.000000e+00> : vector<98x128xf32>
    %2 = tpu.matmul %0, %1, %cst {dimension_numbers = #tpu.dot_dimension_numbers<[1], [0], [0], [1], [0, 0, 1, 1], [], []>} : vector<98x576xbf16>, vector<576x128xbf16>, vector<98x128xf32> -> vector<98x128xf32>
    %c0_3 = arith.constant 0 : index
    %c0_4 = arith.constant 0 : index
    %3 = vector.load %arg3[%c0_3, %c0_4] : memref<1x128xf32, #tpu.memory_space<vmem>>, vector<1x128xf32>
    %4 = vector.broadcast %3 : vector<1x128xf32> to vector<98x128xf32>
    %5 = arith.addf %2, %4 : vector<98x128xf32>
    %cst_5 = arith.constant 0.000000e+00 : f32
    %6 = vector.broadcast %cst_5 : f32 to vector<98x128xf32>
    %7 = arith.maximumf %5, %6 : vector<98x128xf32>
    %8 = arith.truncf %7 : vector<98x128xf32> to vector<98x128xbf16>
    %c0_6 = arith.constant 0 : index
    %c0_7 = arith.constant 0 : index
    %9 = vector.load %arg4[%c0_6, %c0_7] : memref<98x128xbf16, #tpu.memory_space<vmem>>, vector<98x128xbf16>
    tpu.vector_store %arg4[%c0_6, %c0_7], %8 {strides = array<i32>} : memref<98x128xbf16, #tpu.memory_space<vmem>>, vector<98x128xbf16>,
    return
  }
  func.func @transform_0(%arg0: i32) -> (i32, i32) {
    %c0_i32 = arith.constant 0 : i32
    %c0_i32_0 = arith.constant 0 : i32
    return %arg0, %c0_i32 : i32, i32
  }
  func.func @transform_1(%arg0: i32) -> (i32, i32) {
    %c0_i32 = arith.constant 0 : i32
    %c0_i32_0 = arith.constant 0 : i32
    %c0_i32_1 = arith.constant 0 : i32
    return %c0_i32, %c0_i32_0 : i32, i32
  }
  func.func @transform_2(%arg0: i32) -> (i32, i32) {
    %c0_i32 = arith.constant 0 : i32
    %c0_i32_0 = arith.constant 0 : i32
    %c0_i32_1 = arith.constant 0 : i32
    return %c0_i32, %c0_i32_0 : i32, i32
  }
  func.func @transform_3(%arg0: i32) -> (i32, i32) {
    %c0_i32 = arith.constant 0 : i32
    %c0_i32_0 = arith.constant 0 : i32
    return %arg0, %c0_i32 : i32, i32
  }
}

module attributes {stable_mosaic.version = 11 : i64} {
  func.func @_conv_mm_kernel(%arg0: i32, %arg1: memref<18x1152xbf16, #tpu.memory_space<vmem>>, %arg2: memref<1152x256xbf16, #tpu.memory_space<vmem>>, %arg3: memref<1x256xf32, #tpu.memory_space<vmem>>, %arg4: memref<18x256xbf16, #tpu.memory_space<vmem>>) attributes {dimension_semantics = [#tpu.dimension_semantics<parallel>], iteration_bounds = array<i64: 1>, scalar_prefetch = 0 : i64, scratch_operands = 0 : i64, tpu.core_type = #tpu.core_type<tc>, window_params = [{transform_indices = @transform_0, window_bounds = array<i64: 18, 1152>}, {pipeline_mode = #tpu.pipeline_mode<synchronous>, transform_indices = @transform_1, window_bounds = array<i64: 1152, 256>}, {pipeline_mode = #tpu.pipeline_mode<synchronous>, transform_indices = @transform_2, window_bounds = array<i64: 1, 256>}, {transform_indices = @transform_3, window_bounds = array<i64: 18, 256>}]} {
    %c0 = arith.constant 0 : index
    %c0_0 = arith.constant 0 : index
    %0 = vector.load %arg1[%c0, %c0_0] : memref<18x1152xbf16, #tpu.memory_space<vmem>>, vector<18x1152xbf16>
    %c0_1 = arith.constant 0 : index
    %c0_2 = arith.constant 0 : index
    %1 = vector.load %arg2[%c0_1, %c0_2] : memref<1152x256xbf16, #tpu.memory_space<vmem>>, vector<1152x256xbf16>
    %cst = arith.constant dense<0.000000e+00> : vector<18x256xf32>
    %2 = tpu.matmul %0, %1, %cst {dimension_numbers = #tpu.dot_dimension_numbers<[1], [0], [0], [1], [0, 0, 1, 1], [], []>} : vector<18x1152xbf16>, vector<1152x256xbf16>, vector<18x256xf32> -> vector<18x256xf32>
    %c0_3 = arith.constant 0 : index
    %c0_4 = arith.constant 0 : index
    %3 = vector.load %arg3[%c0_3, %c0_4] : memref<1x256xf32, #tpu.memory_space<vmem>>, vector<1x256xf32>
    %4 = vector.broadcast %3 : vector<1x256xf32> to vector<18x256xf32>
    %5 = arith.addf %2, %4 : vector<18x256xf32>
    %cst_5 = arith.constant 0.000000e+00 : f32
    %6 = vector.broadcast %cst_5 : f32 to vector<18x256xf32>
    %7 = arith.maximumf %5, %6 : vector<18x256xf32>
    %8 = arith.truncf %7 : vector<18x256xf32> to vector<18x256xbf16>
    %c0_6 = arith.constant 0 : index
    %c0_7 = arith.constant 0 : index
    %9 = vector.load %arg4[%c0_6, %c0_7] : memref<18x256xbf16, #tpu.memory_space<vmem>>, vector<18x256xbf16>
    tpu.vector_store %arg4[%c0_6, %c0_7], %8 {strides = array<i32>} : memref<18x256xbf16, #tpu.memory_space<vmem>>, vector<18x256xbf16>,
    return
  }
  func.func @transform_0(%arg0: i32) -> (i32, i32) {
    %c0_i32 = arith.constant 0 : i32
    %c0_i32_0 = arith.constant 0 : i32
    return %arg0, %c0_i32 : i32, i32
  }
  func.func @transform_1(%arg0: i32) -> (i32, i32) {
    %c0_i32 = arith.constant 0 : i32
    %c0_i32_0 = arith.constant 0 : i32
    %c0_i32_1 = arith.constant 0 : i32
    return %c0_i32, %c0_i32_0 : i32, i32
  }
  func.func @transform_2(%arg0: i32) -> (i32, i32) {
    %c0_i32 = arith.constant 0 : i32
    %c0_i32_0 = arith.constant 0 : i32
    %c0_i32_1 = arith.constant 0 : i32
    return %c0_i32, %c0_i32_0 : i32, i32
  }
  func.func @transform_3(%arg0: i32) -> (i32, i32) {
    %c0_i32 = arith.constant 0 : i32
    %c0_i32_0 = arith.constant 0 : i32
    return %arg0, %c0_i32 : i32, i32
  }
}

module attributes {stable_mosaic.version = 11 : i64} {
  func.func @_head_kernel(%arg0: i32, %arg1: memref<2x2304xbf16, #tpu.memory_space<vmem>>, %arg2: memref<2304x32xbf16, #tpu.memory_space<vmem>>, %arg3: memref<1x32xf32, #tpu.memory_space<vmem>>, %arg4: memref<32x10xbf16, #tpu.memory_space<vmem>>, %arg5: memref<1x10xf32, #tpu.memory_space<vmem>>, %arg6: memref<2x10xf32, #tpu.memory_space<vmem>>) attributes {dimension_semantics = [#tpu.dimension_semantics<arbitrary>], iteration_bounds = array<i64: 1>, scalar_prefetch = 0 : i64, scratch_operands = 0 : i64, tpu.core_type = #tpu.core_type<tc>, window_params = [{pipeline_mode = #tpu.pipeline_mode<synchronous>, transform_indices = @transform_0, window_bounds = array<i64: 2, 2304>}, {pipeline_mode = #tpu.pipeline_mode<synchronous>, transform_indices = @transform_1, window_bounds = array<i64: 2304, 32>}, {pipeline_mode = #tpu.pipeline_mode<synchronous>, transform_indices = @transform_2, window_bounds = array<i64: 1, 32>}, {pipeline_mode = #tpu.pipeline_mode<synchronous>, transform_indices = @transform_3, window_bounds = array<i64: 32, 10>}, {pipeline_mode = #tpu.pipeline_mode<synchronous>, transform_indices = @transform_4, window_bounds = array<i64: 1, 10>}, {pipeline_mode = #tpu.pipeline_mode<synchronous>, transform_indices = @transform_5, window_bounds = array<i64: 2, 10>}]} {
    %c0 = arith.constant 0 : index
    %c0_0 = arith.constant 0 : index
    %0 = vector.load %arg1[%c0, %c0_0] : memref<2x2304xbf16, #tpu.memory_space<vmem>>, vector<2x2304xbf16>
    %c0_1 = arith.constant 0 : index
    %c0_2 = arith.constant 0 : index
    %1 = vector.load %arg2[%c0_1, %c0_2] : memref<2304x32xbf16, #tpu.memory_space<vmem>>, vector<2304x32xbf16>
    %cst = arith.constant dense<0.000000e+00> : vector<2x32xf32>
    %2 = tpu.matmul %0, %1, %cst {dimension_numbers = #tpu.dot_dimension_numbers<[1], [0], [0], [1], [0, 0, 1, 1], [], []>} : vector<2x2304xbf16>, vector<2304x32xbf16>, vector<2x32xf32> -> vector<2x32xf32>
    %c0_3 = arith.constant 0 : index
    %c0_4 = arith.constant 0 : index
    %3 = vector.load %arg3[%c0_3, %c0_4] : memref<1x32xf32, #tpu.memory_space<vmem>>, vector<1x32xf32>
    %4 = vector.broadcast %3 : vector<1x32xf32> to vector<2x32xf32>
    %5 = arith.addf %2, %4 : vector<2x32xf32>
    %cst_5 = arith.constant 0.000000e+00 : f32
    %6 = vector.broadcast %cst_5 : f32 to vector<2x32xf32>
    %7 = arith.maximumf %5, %6 : vector<2x32xf32>
    %cst_6 = arith.constant 6.000000e+00 : f32
    %8 = vector.broadcast %cst_6 : f32 to vector<2x32xf32>
    %9 = arith.minimumf %7, %8 : vector<2x32xf32>
    %10 = arith.truncf %9 : vector<2x32xf32> to vector<2x32xbf16>
    %c0_7 = arith.constant 0 : index
    %c0_8 = arith.constant 0 : index
    %11 = vector.load %arg4[%c0_7, %c0_8] : memref<32x10xbf16, #tpu.memory_space<vmem>>, vector<32x10xbf16>
    %cst_9 = arith.constant dense<0.000000e+00> : vector<2x10xf32>
    %12 = tpu.matmul %10, %11, %cst_9 {dimension_numbers = #tpu.dot_dimension_numbers<[1], [0], [0], [1], [0, 0, 1, 1], [], []>} : vector<2x32xbf16>, vector<32x10xbf16>, vector<2x10xf32> -> vector<2x10xf32>
    %c0_10 = arith.constant 0 : index
    %c0_11 = arith.constant 0 : index
    %13 = vector.load %arg5[%c0_10, %c0_11] : memref<1x10xf32, #tpu.memory_space<vmem>>, vector<1x10xf32>
    %14 = vector.broadcast %13 : vector<1x10xf32> to vector<2x10xf32>
    %15 = arith.addf %12, %14 : vector<2x10xf32>
    %cst_12 = arith.constant dense<0xFF800000> : vector<2xf32>
    %16 = vector.multi_reduction <maximumf>, %15, %cst_12 [1] : vector<2x10xf32> to vector<2xf32>
    %17 = vector.shape_cast %16 : vector<2xf32> to vector<2x1xf32>
    %18 = vector.broadcast %17 : vector<2x1xf32> to vector<2x10xf32>
    %19 = arith.subf %15, %18 : vector<2x10xf32>
    %20 = math.exp %19 : vector<2x10xf32>
    %cst_13 = arith.constant dense<0.000000e+00> : vector<2xf32>
    %21 = vector.multi_reduction <add>, %20, %cst_13 [1] : vector<2x10xf32> to vector<2xf32>
    %22 = vector.shape_cast %21 : vector<2xf32> to vector<2x1xf32>
    %23 = math.log %22 : vector<2x1xf32>
    %24 = vector.broadcast %23 : vector<2x1xf32> to vector<2x10xf32>
    %25 = arith.subf %19, %24 : vector<2x10xf32>
    %c0_14 = arith.constant 0 : index
    %c0_15 = arith.constant 0 : index
    %26 = vector.load %arg6[%c0_14, %c0_15] : memref<2x10xf32, #tpu.memory_space<vmem>>, vector<2x10xf32>
    tpu.vector_store %arg6[%c0_14, %c0_15], %25 {strides = array<i32>} : memref<2x10xf32, #tpu.memory_space<vmem>>, vector<2x10xf32>,
    return
  }
  func.func @transform_0(%arg0: i32) -> (i32, i32) {
    %c0_i32 = arith.constant 0 : i32
    %c0_i32_0 = arith.constant 0 : i32
    %c0_i32_1 = arith.constant 0 : i32
    return %c0_i32, %c0_i32_0 : i32, i32
  }
  func.func @transform_1(%arg0: i32) -> (i32, i32) {
    %c0_i32 = arith.constant 0 : i32
    %c0_i32_0 = arith.constant 0 : i32
    %c0_i32_1 = arith.constant 0 : i32
    return %c0_i32, %c0_i32_0 : i32, i32
  }
  func.func @transform_2(%arg0: i32) -> (i32, i32) {
    %c0_i32 = arith.constant 0 : i32
    %c0_i32_0 = arith.constant 0 : i32
    %c0_i32_1 = arith.constant 0 : i32
    return %c0_i32, %c0_i32_0 : i32, i32
  }
  func.func @transform_3(%arg0: i32) -> (i32, i32) {
    %c0_i32 = arith.constant 0 : i32
    %c0_i32_0 = arith.constant 0 : i32
    %c0_i32_1 = arith.constant 0 : i32
    return %c0_i32, %c0_i32_0 : i32, i32
  }
  func.func @transform_4(%arg0: i32) -> (i32, i32) {
    %c0_i32 = arith.constant 0 : i32
    %c0_i32_0 = arith.constant 0 : i32
    %c0_i32_1 = arith.constant 0 : i32
    return %c0_i32, %c0_i32_0 : i32, i32
  }
  func.func @transform_5(%arg0: i32) -> (i32, i32) {
    %c0_i32 = arith.constant 0 : i32
    %c0_i32_0 = arith.constant 0 : i32
    %c0_i32_1 = arith.constant 0 : i32
    return %c0_i32, %c0_i32_0 : i32, i32
  }
}

</mosaic_0001>

<llo_original>
// kernel: cifar_classifier_forward.4
$region0: #{cifar_classifier_forward.4}
  #allocation0 [shape = 'u32[]', space=smem, size = 0x4, offset = 0x4, fixed_abs, tag = 'smem constant byte address 0x4 - core index']
  #allocation1 [shape = 'u32[144,128]{1,0:T(1,128)}', space=vmem, size = 0x12000, scoped, tag = 'internal scratch']
  %s0 = inlined_call_operand.vmem [shape: bf16[450,27], index: 0, kind: input, shape index: {}]
  %s1 = inlined_call_operand.vmem [shape: bf16[27,64], index: 1, kind: input, shape index: {}]
  %s2 = inlined_call_operand.vmem [shape: f32[1,64], index: 2, kind: input, shape index: {}]
  %s3 = inlined_call_operand.vmem [shape: bf16[450,64], index: 3, kind: output, shape index: {}]
  %s4 = sld [smem:[#allocation0]]
  $region89: #{cifar_classifier_forward.4} parent=0
    _
  %s6 = ssub.s32 1, %s4
  %s7 = scalar_select 0, %s6, %s4
  $region1: #{cifar_classifier_forward.4} parent=0
    #allocation2 [shape = 'u8[131072]{0}', space=vmem, size = 0x20000, scoped, tag = 'output window, operand 0']
    loop: start=0, step=1, limit=4
    $region2: #{cifar_classifier_forward.4} parent=1 // loop_pre_header
      _
    $region3: #{cifar_classifier_forward.4} parent=1 // loop_header
      %s9 = sphi 0, %s13
      %p10 = scmp.ge.s32.totalorder %s9, 4
      %s19 = sphi 0, %s21
      %s22 = sphi 0, %s19
      %s23 = sphi 0, %s22
      %s39 = sphi 0, %s23
      %s43 = sphi 0, %s43
      %s45 = sphi 0, %s43
      %s46 = sphi 0, %s45
      %s60 = sphi 0, %s46
      %s64 = sphi 0, %s64
      %s66 = sphi 0, %s64
      %s67 = sphi 0, %s66
      %s81 = sphi 0, %s67
      %s87 = sphi 0, %s89
      %s90 = sphi 0, %s87
      %s91 = sphi 0, %s90
      %s107 = sphi 0, %s91
    $region4: #{cifar_classifier_forward.4} parent=1 // loop_header_branch
      %12 = sbr.rel (%p10) target = $region8
    $region5: #{cifar_classifier_forward.4} parent=1 // loop_body
      %s14 = ssub.s32 %s9, 1
      %s15 = ssub.s32 %s9, 2
      %s16 = sadd.s32 %s9, 1
      %s17 = ssub.s32 %s9, %s16
      %p18 = scmp.eq.s32.totalorder %s17, 0
      %s20 = sadd.s32 %s19, 1
      %s21 = scalar_select %p18, %s19, %s20
      %p24 = pneg %p18
      %p25 = scmp.eq.s32.totalorder %s9, 1
      %p26 = por %p24, %p25
      %p27 = scmp.ne.s32.totalorder %s19, %s22
      %p28 = scmp.eq.s32.totalorder %s9, 0
      %p29 = por %p27, %p28
      %p30 = scmp.ne.s32.totalorder %s19, %s22
      %p31 = scmp.eq.s32.totalorder %s14, 1
      %p32 = por %p30, %p31
      %p33 = scmp.ne.s32.totalorder %s22, %s23
      %p34 = scmp.eq.s32.totalorder %s14, 0
      %p35 = por %p33, %p34
      %p36 = scmp.ne.s32.totalorder %s22, %s23
      %p37 = scmp.eq.s32.totalorder %s15, 1
      %p38 = por %p36, %p37
      %p40 = scmp.ne.s32.totalorder %s23, %s39
      %p41 = scmp.eq.s32.totalorder %s15, 0
      %p42 = por %p40, %p41
      %s44 = sadd.s32 %s43, 1
      %p47 = scmp.eq.s32.totalorder %s9, 1
      %p48 = scmp.ne.s32.totalorder %s43, %s45
      %p49 = scmp.eq.s32.totalorder %s9, 0
      %p50 = por %p48, %p49
      %p51 = scmp.ne.s32.totalorder %s43, %s45
      %p52 = scmp.eq.s32.totalorder %s14, 1
      %p53 = por %p51, %p52
      %p54 = scmp.ne.s32.totalorder %s45, %s46
      %p55 = scmp.eq.s32.totalorder %s14, 0
      %p56 = por %p54, %p55
      %p57 = scmp.ne.s32.totalorder %s45, %s46
      %p58 = scmp.eq.s32.totalorder %s15, 1
      %p59 = por %p57, %p58
      %p61 = scmp.ne.s32.totalorder %s46, %s60
      %p62 = scmp.eq.s32.totalorder %s15, 0
      %p63 = por %p61, %p62
      %s65 = sadd.s32 %s64, 1
      %p68 = scmp.eq.s32.totalorder %s9, 1
      %p69 = scmp.ne.s32.totalorder %s64, %s66
      %p70 = scmp.eq.s32.totalorder %s9, 0
      %p71 = por %p69, %p70
      %p72 = scmp.ne.s32.totalorder %s64, %s66
      %p73 = scmp.eq.s32.totalorder %s14, 1
      %p74 = por %p72, %p73
      %p75 = scmp.ne.s32.totalorder %s66, %s67
      %p76 = scmp.eq.s32.totalorder %s14, 0
      %p77 = por %p75, %p76
      %p78 = scmp.ne.s32.totalorder %s66, %s67
      %p79 = scmp.eq.s32.totalorder %s15, 1
      %p80 = por %p78, %p79
      %p82 = scmp.ne.s32.totalorder %s67, %s81
      %p83 = scmp.eq.s32.totalorder %s15, 0
      %p84 = por %p82, %p83
      %s85 = ssub.s32 %s9, %s16
      %p86 = scmp.eq.s32.totalorder %s85, 0
      %s88 = sadd.s32 %s87, 1
      %s89 = scalar_select %p86, %s87, %s88
      %p92 = pneg %p86
      %p93 = scmp.eq.s32.totalorder %s9, 1
      %p94 = por %p92, %p93
      %p95 = scmp.ne.s32.totalorder %s87, %s90
      %p96 = scmp.eq.s32.totalorder %s9, 0
      %p97 = por %p95, %p96
      %p98 = scmp.ne.s32.totalorder %s87, %s90
      %p99 = scmp.eq.s32.totalorder %s14, 1
      %p100 = por %p98, %p99
      %p101 = scmp.ne.s32.totalorder %s90, %s91
      %p102 = scmp.eq.s32.totalorder %s14, 0
      %p103 = por %p101, %p102
      %p104 = scmp.ne.s32.totalorder %s90, %s91
      %p105 = scmp.eq.s32.totalorder %s15, 1
      %p106 = por %p104, %p105
      %p108 = scmp.ne.s32.totalorder %s91, %s107
      %p109 = scmp.eq.s32.totalorder %s15, 0
      %p110 = por %p108, %p109
      %p111 = scmp.le.s32.totalorder 1, %s9
      %p112 = scmp.lt.s32.totalorder %s9, 3
      %p113 = pnand %p111, %p112
      %p114 = pneg %p113
      // Predicated region
      $region9: #{cifar_classifier_forward.4} parent=5 // pred_check
        _
      $region10: #{cifar_classifier_forward.4} parent=5 // pred_check_branch
        %116 = sbr.rel (%p113) target = $region12
      $region11: #{cifar_classifier_forward.4} parent=5 // pred_region
        %s117 = ssub.s32 %s9, 1
        // Predicated region
        $region13: #{cifar_classifier_forward.4} parent=11 // pred_check
          %p118 = pneg %p56
        $region14: #{cifar_classifier_forward.4} parent=11 // pred_check_branch
          %120 = sbr.rel (%p118) target = $region16
        $region15: #{cifar_classifier_forward.4} parent=11 // pred_region
          _
        $region16: #{cifar_classifier_forward.4} parent=11 // pred_fallthru
          _
        // Predicated region
        $region17: #{cifar_classifier_forward.4} parent=11 // pred_check
          %p121 = pneg %p77
        $region18: #{cifar_classifier_forward.4} parent=11 // pred_check_branch
          %123 = sbr.rel (%p121) target = $region20
        $region19: #{cifar_classifier_forward.4} parent=11 // pred_region
          _
        $region20: #{cifar_classifier_forward.4} parent=11 // pred_fallthru
          _
      $region12: #{cifar_classifier_forward.4} parent=5 // pred_fallthru
        _
      %p124 = scmp.lt.s32.totalorder %s9, 2
      // Predicated region
      $region21: #{cifar_classifier_forward.4} parent=5 // pred_check
        %p125 = pneg %p124
      $region22: #{cifar_classifier_forward.4} parent=5 // pred_check_branch
        %127 = sbr.rel (%p125) target = $region24
      $region23: #{cifar_classifier_forward.4} parent=5 // pred_region
        // Predicated region
        $region25: #{cifar_classifier_forward.4} parent=23 // pred_check
          %p128 = pneg %p29
        $region26: #{cifar_classifier_forward.4} parent=23 // pred_check_branch
          %130 = sbr.rel (%p128) target = $region28
        $region27: #{cifar_classifier_forward.4} parent=23 // pred_region
          %s131 = smul.u32 32, %s9
          %s132 = ssub.s32 57, %s131
          %p133 = scmp.lt.s32.totalorder %s132, 32
          %s134 = scalar_select %p133, %s132, 32
          %s135 = smul.u32 64, %s134
          %p136 = scmp.lt.s32.totalorder %s131, 56
          %s137 = scalar_select %p136, %s131, 56
          %s138 = smul.addr %s137, 4
          %s139 = scalar_lea.vmem %s0, %s138
          %s140 = smul.u32 32, %s9
          %s141 = ssub.s32 57, %s140
          %p142 = scmp.lt.s32.totalorder %s141, 32
          %s143 = scalar_select %p142, %s141, 32
          %s144 = smul.u32 64, %s143
        $region28: #{cifar_classifier_forward.4} parent=23 // pred_fallthru
          _
      $region24: #{cifar_classifier_forward.4} parent=5 // pred_fallthru
        _
      %p145 = scmp.le.s32.totalorder 1, %s9
      %p146 = scmp.lt.s32.totalorder %s9, 3
      %p147 = pnand %p145, %p146
      %p148 = pneg %p147
      // Predicated region
      $region29: #{cifar_classifier_forward.4} parent=5 // pred_check
        _
      $region30: #{cifar_classifier_forward.4} parent=5 // pred_check_branch
        %150 = sbr.rel (%p147) target = $region32
      $region31: #{cifar_classifier_forward.4} parent=5 // pred_region
        %s151 = ssub.s32 %s9, 1
        %s152 = smul.u32 32, %s14
        %s153 = ssub.s32 57, %s152
        %p154 = scmp.lt.s32.totalorder %s153, 32
        %s155 = scalar_select %p154, %s153, 32
        %s156 = smul.u32 64, %s155
        %p157 = scmp.lt.s32.totalorder %s152, 56
        %s158 = scalar_select %p157, %s152, 56
        %s159 = smul.addr %s158, 4
        %s160 = scalar_lea.vmem %s0, %s159
        %p161 = pneg %p35
        %p162 = pneg %p32
        %p163 = pneg %p56
        %p164 = pneg %p53
        %p165 = pneg %p77
        %p166 = pneg %p74
        %p167 = pneg %p103
        %p168 = pneg %p100
        %s169 = sand.u32 %s90, 1
        %s170 = sand.u32 %s90, 1
        %s171 = smul.addr %s170, 128
        %s172 = scalar_lea.vmem [#allocation2], %s171
        %s173 = smul.u32 32, %s14
        %s174 = ssub.s32 57, %s173
        %p175 = scmp.lt.s32.totalorder %s174, 32
        %s176 = scalar_select %p175, %s174, 32
        %s177 = smul.u32 64, %s176
        %p178 = scmp.lt.s32.totalorder %s173, 56
        %s179 = scalar_select %p178, %s173, 56
        %s180 = smul.addr %s179, 4
        %s181 = scalar_lea.vmem %s0, %s180
        %s182 = smul.u32 32, %s14
        %s183 = ssub.s32 57, %s182
        %p184 = scmp.lt.s32.totalorder %s183, 32
        %s185 = scalar_select %p184, %s183, 32
        %s186 = smul.u32 64, %s185
        %s187 = smul.u32 32, %s14
        %s188 = ssub.s32 57, %s187
        %p189 = scmp.lt.s32.totalorder %s188, 32
        %s190 = scalar_select %p189, %s188, 32
        %s191 = smul.u32 64, %s190
        %v193 = vld [vmem:[%s181] sm:$0xf]
        %v194 = vld [vmem:[%s181 + $0x4] sm:$0xf]
        %v195 = vld [vmem:[%s181 + $0x8] sm:$0xf]
        %v196 = vld [vmem:[%s181 + $0xc] sm:$0xf]
        %v197 = vld [vmem:[%s181 + $0x10] sm:$0xf]
        %v198 = vld [vmem:[%s181 + $0x14] sm:$0xf]
        %v199 = vld [vmem:[%s181 + $0x18] sm:$0xf]
        %v200 = vld [vmem:[%s181 + $0x1c] sm:$0xf]
        %v201 = vld [vmem:[%s181 + $0x20] sm:$0xf]
        %v202 = vld [vmem:[%s181 + $0x24] sm:$0xf]
        %v203 = vld [vmem:[%s181 + $0x28] sm:$0xf]
        %v204 = vld [vmem:[%s181 + $0x2c] sm:$0xf]
        %v205 = vld [vmem:[%s181 + $0x30] sm:$0xf]
        %v206 = vld [vmem:[%s181 + $0x34] sm:$0xf]
        %v207 = vld [vmem:[%s181 + $0x38] sm:$0xf]
        %v208 = vld [vmem:[%s181 + $0x3c] sm:$0xf]
        %v209 = vld [vmem:[%s181 + $0x40] sm:$0xf]
        %v210 = vld [vmem:[%s181 + $0x44] sm:$0xf]
        %v211 = vld [vmem:[%s181 + $0x48] sm:$0xf]
        %v212 = vld [vmem:[%s181 + $0x4c] sm:$0xf]
        %v213 = vld [vmem:[%s181 + $0x50] sm:$0xf]
        %v214 = vld [vmem:[%s181 + $0x54] sm:$0xf]
        %v215 = vld [vmem:[%s181 + $0x58] sm:$0xf]
        %v216 = vld [vmem:[%s181 + $0x5c] sm:$0xf]
        %v217 = vld [vmem:[%s181 + $0x60] sm:$0xf]
        %v218 = vld [vmem:[%s181 + $0x64] sm:$0xf]
        %v219 = vld [vmem:[%s181 + $0x68] sm:$0xf]
        %v220 = vld [vmem:[%s181 + $0x6c] sm:$0xf]
        %v221 = vld [vmem:[%s181 + $0x70] sm:$0xf]
        %v222 = vld [vmem:[%s181 + $0x74] sm:$0xf]
        %v223 = vld [vmem:[%s181 + $0x78] sm:$0xf]
        %v224 = vld [vmem:[%s181 + $0x7c] sm:$0xf]
        %v225 = vld [vmem:[%s1] sm:$0xf]
        %v226 = vld [vmem:[%s1 + $0x4] sm:$0xf]
        %v227 = vld [vmem:[%s1 + $0x8] sm:$0xf]
        %v228 = vld [vmem:[%s1 + $0xc] sm:$0x3]
        %v229 = vld [vmem:[%s2] sm:$0x1]
        %v231 = vlaneseq
        %v232 = vshrl.u32 %v231, 7
        %v233 = vsub.s32 0, %v232
        %v234 = vrot.slane %v229, %v233
        %v268 = vunpack.c.l.b16 %v193
        %v269 = vunpack.c.l.b16 %v194
        %v270 = vunpack.c.l.b16 %v195
        %v271 = vunpack.c.l.b16 %v196
        %v272 = vunpack.c.l.b16 %v197
        %v273 = vunpack.c.l.b16 %v198
        %v274 = vunpack.c.l.b16 %v199
        %v275 = vunpack.c.l.b16 %v200
        %v276 = vunpack.c.l.b16 %v201
        %v277 = vunpack.c.l.b16 %v202
        %v278 = vunpack.c.l.b16 %v203
        %v279 = vunpack.c.l.b16 %v204
        %v280 = vunpack.c.l.b16 %v205
        %v281 = vunpack.c.l.b16 %v206
        %v282 = vunpack.c.l.b16 %v207
        %v283 = vunpack.c.l.b16 %v208
        %v284 = vunpack.c.l.b16 %v209
        %v285 = vunpack.c.l.b16 %v210
        %v286 = vunpack.c.l.b16 %v211
        %v287 = vunpack.c.l.b16 %v212
        %v288 = vunpack.c.l.b16 %v213
        %v289 = vunpack.c.l.b16 %v214
        %v290 = vunpack.c.l.b16 %v215
        %v291 = vunpack.c.l.b16 %v216
        %v292 = vunpack.c.l.b16 %v217
        %v293 = vunpack.c.l.b16 %v218
        %v294 = vunpack.c.l.b16 %v219
        %v295 = vunpack.c.l.b16 %v220
        %v296 = vunpack.c.l.b16 %v221
        %v297 = vunpack.c.l.b16 %v222
        %v298 = vunpack.c.l.b16 %v223
        %v299 = vunpack.c.l.b16 %v224
        %v300 = vpack.c.b16 %v269, %v268
        %v301 = vpack.c.b16 %v271, %v270
        %v302 = vpack.c.b16 %v273, %v272
        %v303 = vpack.c.b16 %v275, %v274
        %v304 = vpack.c.b16 %v277, %v276
        %v305 = vpack.c.b16 %v279, %v278
        %v306 = vpack.c.b16 %v281, %v280
        %v307 = vpack.c.b16 %v283, %v282
        %v308 = vpack.c.b16 %v285, %v284
        %v309 = vpack.c.b16 %v287, %v286
        %v310 = vpack.c.b16 %v289, %v288
        %v311 = vpack.c.b16 %v291, %v290
        %v312 = vpack.c.b16 %v293, %v292
        %v313 = vpack.c.b16 %v295, %v294
        %v314 = vpack.c.b16 %v297, %v296
        %v315 = vpack.c.b16 %v299, %v298
        %v320 = vunpack.c.l.b16 %v225
        %v321 = vunpack.c.l.b16 %v226
        %v322 = vunpack.c.l.b16 %v227
        %v323 = vunpack.c.l.b16 %v228
        %v324 = vpack.c.b16 %v321, %v320
        %v325 = vpack.c.b16 %v323, %v322
        %vm327 = vcmask 220160
        %v329 = vsel %vm327, %v300, 0
        %v332 = vsel %vm327, %v301, 0
        %v335 = vsel %vm327, %v302, 0
        %v338 = vsel %vm327, %v303, 0
        %v341 = vsel %vm327, %v304, 0
        %v344 = vsel %vm327, %v305, 0
        %v347 = vsel %vm327, %v306, 0
        %v350 = vsel %vm327, %v307, 0
        %v353 = vsel %vm327, %v308, 0
        %v356 = vsel %vm327, %v309, 0
        %v359 = vsel %vm327, %v310, 0
        %v362 = vsel %vm327, %v311, 0
        %v365 = vsel %vm327, %v312, 0
        %v368 = vsel %vm327, %v313, 0
        %v371 = vsel %vm327, %v314, 0
        %v374 = vsel %vm327, %v315, 0
        %vm376 = vcmask 1044480
        %vm377 = vcmask 1045504
        %v378 = vsel %vm376, 4294967295, 65535
        %v379 = vsel %vm377, %v378, 0
        %v381 = vand.u32 %v325, %v379
        %383 = vmatprep.subr.bf16.mxu0 0
        %384 = vmatpush1.bf16.msra.mxu0 0
        %385 = vmatprep.subr.bf16.mxu0 0
        %386 = vmatpush1.bf16.msra.mxu0 0
        %387 = vmatprep.subr.bf16.mxu0 0
        %388 = vmatpush1.bf16.msra.mxu0 0
        %389 = vmatprep.subr.bf16.mxu0 0
        %390 = vmatpush1.bf16.msra.mxu0 0
        %391 = vmatprep.subr.bf16.mxu0 0
        %392 = vmatpush1.bf16.msra.mxu0 0
        %393 = vmatprep.subr.bf16.mxu0 0
        %394 = vmatpush1.bf16.msra.mxu0 0
        %395 = vmatprep.subr.bf16.mxu0 0
        %396 = vmatpush1.bf16.msra.mxu0 %v381
        %397 = vmatprep.subr.bf16.mxu0 0
        %398 = vmatpush1.bf16.msra.mxu0 %v324
        %399 = vmatprep.subr.bf16.mxu0 0
        %400 = vmatpush2.bf16.msra.mxu0 0
        %401 = vmatprep.subr.bf16.mxu0 0
        %402 = vmatpush2.bf16.msra.mxu0 0
        %403 = vmatprep.subr.bf16.mxu0 0
        %404 = vmatpush2.bf16.msra.mxu0 0
        %405 = vmatprep.subr.bf16.mxu0 0
        %406 = vmatpush2.bf16.msra.mxu0 0
        %407 = vmatprep.subr.bf16.mxu0 0
        %408 = vmatpush2.bf16.msra.mxu0 0
        %409 = vmatprep.subr.bf16.mxu0 0
        %410 = vmatpush2.bf16.msra.mxu0 0
        %411 = vmatprep.subr.bf16.mxu0 0
        %412 = vmatpush2.bf16.msra.mxu0 0
        %413 = vmatprep.subr.bf16.mxu0 0
        %414 = vmatpush2.bf16.msra.mxu0 0
        %415 = vmatprep.mubr.bf16.mxu0 0
        %416 = vmatmul.mubr.bf16.gmra.mxu0 %v329
        %v417 = vpop.f32.mrf.mxu0
        %v418 = vadd.f32 %v234, %v417
        %v419 = vpop.f32.mrf.mxu0
        %v420 = vpop.f32.mrf.mxu0
        %v421 = vadd.f32 %v234, %v420
        %v422 = vpop.f32.mrf.mxu0
        %423 = vmatprep.mubr.bf16.mxu0 0
        %424 = vmatmul.mubr.bf16.gmra.mxu0 %v332
        %v425 = vpop.f32.mrf.mxu0
        %v426 = vadd.f32 %v234, %v425
        %v427 = vpop.f32.mrf.mxu0
        %v428 = vpop.f32.mrf.mxu0
        %v429 = vadd.f32 %v234, %v428
        %v430 = vpop.f32.mrf.mxu0
        %431 = vmatprep.mubr.bf16.mxu0 0
        %432 = vmatmul.mubr.bf16.gmra.mxu0 %v335
        %v433 = vpop.f32.mrf.mxu0
        %v434 = vadd.f32 %v234, %v433
        %v435 = vpop.f32.mrf.mxu0
        %v436 = vpop.f32.mrf.mxu0
        %v437 = vadd.f32 %v234, %v436
        %v438 = vpop.f32.mrf.mxu0
        %439 = vmatprep.mubr.bf16.mxu0 0
        %440 = vmatmul.mubr.bf16.gmra.mxu0 %v338
        %v441 = vpop.f32.mrf.mxu0
        %v442 = vadd.f32 %v234, %v441
        %v443 = vpop.f32.mrf.mxu0
        %v444 = vpop.f32.mrf.mxu0
        %v445 = vadd.f32 %v234, %v444
        %v446 = vpop.f32.mrf.mxu0
        %447 = vmatprep.mubr.bf16.mxu0 0
        %448 = vmatmul.mubr.bf16.gmra.mxu0 %v341
        %v449 = vpop.f32.mrf.mxu0
        %v450 = vadd.f32 %v234, %v449
        %v451 = vpop.f32.mrf.mxu0
        %v452 = vpop.f32.mrf.mxu0
        %v453 = vadd.f32 %v234, %v452
        %v454 = vpop.f32.mrf.mxu0
        %455 = vmatprep.mubr.bf16.mxu0 0
        %456 = vmatmul.mubr.bf16.gmra.mxu0 %v344
        %v457 = vpop.f32.mrf.mxu0
        %v458 = vadd.f32 %v234, %v457
        %v459 = vpop.f32.mrf.mxu0
        %v460 = vpop.f32.mrf.mxu0
        %v461 = vadd.f32 %v234, %v460
        %v462 = vpop.f32.mrf.mxu0
        %463 = vmatprep.mubr.bf16.mxu0 0
        %464 = vmatmul.mubr.bf16.gmra.mxu0 %v347
        %v465 = vpop.f32.mrf.mxu0
        %v466 = vadd.f32 %v234, %v465
        %v467 = vpop.f32.mrf.mxu0
        %v468 = vpop.f32.mrf.mxu0
        %v469 = vadd.f32 %v234, %v468
        %v470 = vpop.f32.mrf.mxu0
        %471 = vmatprep.mubr.bf16.mxu0 0
        %472 = vmatmul.mubr.bf16.gmra.mxu0 %v350
        %v473 = vpop.f32.mrf.mxu0
        %v474 = vadd.f32 %v234, %v473
        %v475 = vpop.f32.mrf.mxu0
        %v476 = vpop.f32.mrf.mxu0
        %v477 = vadd.f32 %v234, %v476
        %v478 = vpop.f32.mrf.mxu0
        %479 = vmatprep.mubr.bf16.mxu0 0
        %480 = vmatmul.mubr.bf16.gmra.mxu0 %v353
        %v481 = vpop.f32.mrf.mxu0
        %v482 = vadd.f32 %v234, %v481
        %v483 = vpop.f32.mrf.mxu0
        %v484 = vpop.f32.mrf.mxu0
        %v485 = vadd.f32 %v234, %v484
        %v486 = vpop.f32.mrf.mxu0
        %487 = vmatprep.mubr.bf16.mxu0 0
        %488 = vmatmul.mubr.bf16.gmra.mxu0 %v356
        %v489 = vpop.f32.mrf.mxu0
        %v490 = vadd.f32 %v234, %v489
        %v491 = vpop.f32.mrf.mxu0
        %v492 = vpop.f32.mrf.mxu0
        %v493 = vadd.f32 %v234, %v492
        %v494 = vpop.f32.mrf.mxu0
        %495 = vmatprep.mubr.bf16.mxu0 0
        %496 = vmatmul.mubr.bf16.gmra.mxu0 %v359
        %v497 = vpop.f32.mrf.mxu0
        %v498 = vadd.f32 %v234, %v497
        %v499 = vpop.f32.mrf.mxu0
        %v500 = vpop.f32.mrf.mxu0
        %v501 = vadd.f32 %v234, %v500
        %v502 = vpop.f32.mrf.mxu0
        %503 = vmatprep.mubr.bf16.mxu0 0
        %504 = vmatmul.mubr.bf16.gmra.mxu0 %v362
        %v505 = vpop.f32.mrf.mxu0
        %v506 = vadd.f32 %v234, %v505
        %v507 = vpop.f32.mrf.mxu0
        %v508 = vpop.f32.mrf.mxu0
        %v509 = vadd.f32 %v234, %v508
        %v510 = vpop.f32.mrf.mxu0
        %511 = vmatprep.mubr.bf16.mxu0 0
        %512 = vmatmul.mubr.bf16.gmra.mxu0 %v365
        %v513 = vpop.f32.mrf.mxu0
        %v514 = vadd.f32 %v234, %v513
        %v515 = vpop.f32.mrf.mxu0
        %v516 = vpop.f32.mrf.mxu0
        %v517 = vadd.f32 %v234, %v516
        %v518 = vpop.f32.mrf.mxu0
        %519 = vmatprep.mubr.bf16.mxu0 0
        %520 = vmatmul.mubr.bf16.gmra.mxu0 %v368
        %v521 = vpop.f32.mrf.mxu0
        %v522 = vadd.f32 %v234, %v521
        %v523 = vpop.f32.mrf.mxu0
        %v524 = vpop.f32.mrf.mxu0
        %v525 = vadd.f32 %v234, %v524
        %v526 = vpop.f32.mrf.mxu0
        %527 = vmatprep.mubr.bf16.mxu0 0
        %528 = vmatmul.mubr.bf16.gmra.mxu0 %v371
        %v529 = vpop.f32.mrf.mxu0
        %v530 = vadd.f32 %v234, %v529
        %v531 = vpop.f32.mrf.mxu0
        %v532 = vpop.f32.mrf.mxu0
        %v533 = vadd.f32 %v234, %v532
        %v534 = vpop.f32.mrf.mxu0
        %535 = vmatprep.mubr.bf16.mxu0 0
        %536 = vmatmul.mubr.bf16.gmra.mxu0 %v374
        %v537 = vpop.f32.mrf.mxu0
        %v538 = vadd.f32 %v234, %v537
        %v539 = vpop.f32.mrf.mxu0
        %v540 = vpop.f32.mrf.mxu0
        %v541 = vadd.f32 %v234, %v540
        %v542 = vpop.f32.mrf.mxu0
        %543 = vdwg.mxu0
        %v544 = vmax.f32 %v418, 0.0
        %v545 = vmax.f32 %v421, 0.0
        %v546 = vmax.f32 %v426, 0.0
        %v547 = vmax.f32 %v429, 0.0
        %v548 = vmax.f32 %v434, 0.0
        %v549 = vmax.f32 %v437, 0.0
        %v550 = vmax.f32 %v442, 0.0
        %v551 = vmax.f32 %v445, 0.0
        %v552 = vmax.f32 %v450, 0.0
        %v553 = vmax.f32 %v453, 0.0
        %v554 = vmax.f32 %v458, 0.0
        %v555 = vmax.f32 %v461, 0.0
        %v556 = vmax.f32 %v466, 0.0
        %v557 = vmax.f32 %v469, 0.0
        %v558 = vmax.f32 %v474, 0.0
        %v559 = vmax.f32 %v477, 0.0
        %v560 = vmax.f32 %v482, 0.0
        %v561 = vmax.f32 %v485, 0.0
        %v562 = vmax.f32 %v490, 0.0
        %v563 = vmax.f32 %v493, 0.0
        %v564 = vmax.f32 %v498, 0.0
        %v565 = vmax.f32 %v501, 0.0
        %v566 = vmax.f32 %v506, 0.0
        %v567 = vmax.f32 %v509, 0.0
        %v568 = vmax.f32 %v514, 0.0
        %v569 = vmax.f32 %v517, 0.0
        %v570 = vmax.f32 %v522, 0.0
        %v571 = vmax.f32 %v525, 0.0
        %v572 = vmax.f32 %v530, 0.0
        %v573 = vmax.f32 %v533, 0.0
        %v574 = vmax.f32 %v538, 0.0
        %v575 = vmax.f32 %v541, 0.0
        %v576 = vpack.c.bf16 %v545, %v544
        %v577 = vpack.c.bf16 %v547, %v546
        %v578 = vpack.c.bf16 %v549, %v548
        %v579 = vpack.c.bf16 %v551, %v550
        %v580 = vpack.c.bf16 %v553, %v552
        %v581 = vpack.c.bf16 %v555, %v554
        %v582 = vpack.c.bf16 %v557, %v556
        %v583 = vpack.c.bf16 %v559, %v558
        %v584 = vpack.c.bf16 %v561, %v560
        %v585 = vpack.c.bf16 %v563, %v562
        %v586 = vpack.c.bf16 %v565, %v564
        %v587 = vpack.c.bf16 %v567, %v566
        %v588 = vpack.c.bf16 %v569, %v568
        %v589 = vpack.c.bf16 %v571, %v570
        %v590 = vpack.c.bf16 %v573, %v572
        %v591 = vpack.c.bf16 %v575, %v574
        %v608 = vunpack.c.l.b16 %v576
        %v609 = vunpack.c.h.b16 %v576
        %v610 = vunpack.c.l.b16 %v577
        %v611 = vunpack.c.h.b16 %v577
        %v612 = vunpack.c.l.b16 %v578
        %v613 = vunpack.c.h.b16 %v578
        %v614 = vunpack.c.l.b16 %v579
        %v615 = vunpack.c.h.b16 %v579
        %v616 = vunpack.c.l.b16 %v580
        %v617 = vunpack.c.h.b16 %v580
        %v618 = vunpack.c.l.b16 %v581
        %v619 = vunpack.c.h.b16 %v581
        %v620 = vunpack.c.l.b16 %v582
        %v621 = vunpack.c.h.b16 %v582
        %v622 = vunpack.c.l.b16 %v583
        %v623 = vunpack.c.h.b16 %v583
        %v624 = vunpack.c.l.b16 %v584
        %v625 = vunpack.c.h.b16 %v584
        %v626 = vunpack.c.l.b16 %v585
        %v627 = vunpack.c.h.b16 %v585
        %v628 = vunpack.c.l.b16 %v586
        %v629 = vunpack.c.h.b16 %v586
        %v630 = vunpack.c.l.b16 %v587
        %v631 = vunpack.c.h.b16 %v587
        %v632 = vunpack.c.l.b16 %v588
        %v633 = vunpack.c.h.b16 %v588
        %v634 = vunpack.c.l.b16 %v589
        %v635 = vunpack.c.h.b16 %v589
        %v636 = vunpack.c.l.b16 %v590
        %v637 = vunpack.c.h.b16 %v590
        %v638 = vunpack.c.l.b16 %v591
        %v639 = vunpack.c.h.b16 %v591
        %v640 = vpack.c.b16 %v608, %v608
        %v641 = vpack.c.b16 %v609, %v609
        %v642 = vpack.c.b16 %v610, %v610
        %v643 = vpack.c.b16 %v611, %v611
        %v644 = vpack.c.b16 %v612, %v612
        %v645 = vpack.c.b16 %v613, %v613
        %v646 = vpack.c.b16 %v614, %v614
        %v647 = vpack.c.b16 %v615, %v615
        %v648 = vpack.c.b16 %v616, %v616
        %v649 = vpack.c.b16 %v617, %v617
        %v650 = vpack.c.b16 %v618, %v618
        %v651 = vpack.c.b16 %v619, %v619
        %v652 = vpack.c.b16 %v620, %v620
        %v653 = vpack.c.b16 %v621, %v621
        %v654 = vpack.c.b16 %v622, %v622
        %v655 = vpack.c.b16 %v623, %v623
        %v656 = vpack.c.b16 %v624, %v624
        %v657 = vpack.c.b16 %v625, %v625
        %v658 = vpack.c.b16 %v626, %v626
        %v659 = vpack.c.b16 %v627, %v627
        %v660 = vpack.c.b16 %v628, %v628
        %v661 = vpack.c.b16 %v629, %v629
        %v662 = vpack.c.b16 %v630, %v630
        %v663 = vpack.c.b16 %v631, %v631
        %v664 = vpack.c.b16 %v632, %v632
        %v665 = vpack.c.b16 %v633, %v633
        %v666 = vpack.c.b16 %v634, %v634
        %v667 = vpack.c.b16 %v635, %v635
        %v668 = vpack.c.b16 %v636, %v636
        %v669 = vpack.c.b16 %v637, %v637
        %v670 = vpack.c.b16 %v638, %v638
        %v671 = vpack.c.b16 %v639, %v639
        %vm704 = vcmask 519168
        %705 = vst.msk [vmem:[%s172] sm:$0xf] %vm704, %v640
        %706 = vst.msk [vmem:[%s172 + $0x4] sm:$0xf] %vm704, %v641
        %707 = vst.msk [vmem:[%s172 + $0x8] sm:$0xf] %vm704, %v642
        %708 = vst.msk [vmem:[%s172 + $0xc] sm:$0xf] %vm704, %v643
        %709 = vst.msk [vmem:[%s172 + $0x10] sm:$0xf] %vm704, %v644
        %710 = vst.msk [vmem:[%s172 + $0x14] sm:$0xf] %vm704, %v645
        %711 = vst.msk [vmem:[%s172 + $0x18] sm:$0xf] %vm704, %v646
        %712 = vst.msk [vmem:[%s172 + $0x1c] sm:$0xf] %vm704, %v647
        %713 = vst.msk [vmem:[%s172 + $0x20] sm:$0xf] %vm704, %v648
        %714 = vst.msk [vmem:[%s172 + $0x24] sm:$0xf] %vm704, %v649
        %715 = vst.msk [vmem:[%s172 + $0x28] sm:$0xf] %vm704, %v650
        %716 = vst.msk [vmem:[%s172 + $0x2c] sm:$0xf] %vm704, %v651
        %717 = vst.msk [vmem:[%s172 + $0x30] sm:$0xf] %vm704, %v652
        %718 = vst.msk [vmem:[%s172 + $0x34] sm:$0xf] %vm704, %v653
        %719 = vst.msk [vmem:[%s172 + $0x38] sm:$0xf] %vm704, %v654
        %720 = vst.msk [vmem:[%s172 + $0x3c] sm:$0xf] %vm704, %v655
        %721 = vst.msk [vmem:[%s172 + $0x40] sm:$0xf] %vm704, %v656
        %722 = vst.msk [vmem:[%s172 + $0x44] sm:$0xf] %vm704, %v657
        %723 = vst.msk [vmem:[%s172 + $0x48] sm:$0xf] %vm704, %v658
        %724 = vst.msk [vmem:[%s172 + $0x4c] sm:$0xf] %vm704, %v659
        %725 = vst.msk [vmem:[%s172 + $0x50] sm:$0xf] %vm704, %v660
        %726 = vst.msk [vmem:[%s172 + $0x54] sm:$0xf] %vm704, %v661
        %727 = vst.msk [vmem:[%s172 + $0x58] sm:$0xf] %vm704, %v662
        %728 = vst.msk [vmem:[%s172 + $0x5c] sm:$0xf] %vm704, %v663
        %729 = vst.msk [vmem:[%s172 + $0x60] sm:$0xf] %vm704, %v664
        %730 = vst.msk [vmem:[%s172 + $0x64] sm:$0xf] %vm704, %v665
        %731 = vst.msk [vmem:[%s172 + $0x68] sm:$0xf] %vm704, %v666
        %732 = vst.msk [vmem:[%s172 + $0x6c] sm:$0xf] %vm704, %v667
        %733 = vst.msk [vmem:[%s172 + $0x70] sm:$0xf] %vm704, %v668
        %734 = vst.msk [vmem:[%s172 + $0x74] sm:$0xf] %vm704, %v669
        %735 = vst.msk [vmem:[%s172 + $0x78] sm:$0xf] %vm704, %v670
        %736 = vst.msk [vmem:[%s172 + $0x7c] sm:$0xf] %vm704, %v671
        %s737 = sand.u32 %s90, 1
        %s738 = sand.u32 %s90, 1
        %s739 = smul.addr %s738, 128
        %s740 = scalar_lea.vmem [#allocation2], %s739
        // Predicated region
        $region33: #{cifar_classifier_forward.4} parent=31 // pred_check
          %p741 = pneg %p100
        $region34: #{cifar_classifier_forward.4} parent=31 // pred_check_branch
          %743 = sbr.rel (%p741) target = $region36
        $region35: #{cifar_classifier_forward.4} parent=31 // pred_region
          %s744 = smul.u32 32, %s14
          %s745 = ssub.s32 57, %s744
          %p746 = scmp.lt.s32.totalorder %s745, 32
          %s747 = scalar_select %p746, %s745, 32
          %s748 = smul.u32 64, %s747
          %p749 = scmp.ne.s32.totalorder 0, %s748
          %s750 = smul.addr %s744, 4
          %s751 = scalar_lea.vmem %s3, %s750
          // Predicated region
          $region37: #{cifar_classifier_forward.4} parent=35 // pred_check
            %p752 = pneg %p749
          $region38: #{cifar_classifier_forward.4} parent=35 // pred_check_branch
            %754 = sbr.rel (%p752) target = $region40
          $region39: #{cifar_classifier_forward.4} parent=35 // pred_region
            // Predicated region
            $region41: #{cifar_classifier_forward.4} parent=39 // pred_check
              _
            $region42: #{cifar_classifier_forward.4} parent=39 // pred_check_branch
              %756 = sbr.rel target = $region44
            $region43: #{cifar_classifier_forward.4} parent=39 // pred_region
              // Predicated region
              $region63: #{cifar_classifier_forward.4} parent=43 // pred_check
                _
              $region64: #{cifar_classifier_forward.4} parent=43 // pred_check_branch
                %868 = sbr.rel (0) target = $region66
              $region65: #{cifar_classifier_forward.4} parent=43 // pred_region
                %s870 = ssub.s32 16, 1
                %s871 = sshrl.u32 %s747, 5
                // While loop
                $region67: #{cifar_classifier_forward.4} parent=65 // loop_pre_header
                  _
                $region68: #{cifar_classifier_forward.4} parent=65 // loop_header
                  %s873 = sphi 0, %s875
                  %p874 = scmp.ge.s32.totalorder %s873, %s871
                  %s878 = sphi 0, %s947
                  %s879 = sphi %s740, %s950
                  %s880 = sphi %s751, %s951
                $region69: #{cifar_classifier_forward.4} parent=65 // loop_header_branch
                  %877 = sbr.rel (%p874) target = $region73
                $region70: #{cifar_classifier_forward.4} parent=65 // loop_body
                  %v881 = vld [vmem:[%s879] sm:%s870]
                  %882 = vst [vmem:[%s880] sm:%s870] %v881
                  %v883 = vld [vmem:[%s879 + $0x4] sm:%s870]
                  %884 = vst [vmem:[%s880 + $0x4] sm:%s870] %v883
                  %v885 = vld [vmem:[%s879 + $0x8] sm:%s870]
                  %886 = vst [vmem:[%s880 + $0x8] sm:%s870] %v885
                  %v887 = vld [vmem:[%s879 + $0xc] sm:%s870]
                  %888 = vst [vmem:[%s880 + $0xc] sm:%s870] %v887
                  %v889 = vld [vmem:[%s879 + $0x10] sm:%s870]
                  %890 = vst [vmem:[%s880 + $0x10] sm:%s870] %v889
                  %v891 = vld [vmem:[%s879 + $0x14] sm:%s870]
                  %892 = vst [vmem:[%s880 + $0x14] sm:%s870] %v891
                  %v893 = vld [vmem:[%s879 + $0x18] sm:%s870]
                  %894 = vst [vmem:[%s880 + $0x18] sm:%s870] %v893
                  %v895 = vld [vmem:[%s879 + $0x1c] sm:%s870]
                  %896 = vst [vmem:[%s880 + $0x1c] sm:%s870] %v895
                  %v897 = vld [vmem:[%s879 + $0x20] sm:%s870]
                  %898 = vst [vmem:[%s880 + $0x20] sm:%s870] %v897
                  %v899 = vld [vmem:[%s879 + $0x24] sm:%s870]
                  %900 = vst [vmem:[%s880 + $0x24] sm:%s870] %v899
                  %v901 = vld [vmem:[%s879 + $0x28] sm:%s870]
                  %902 = vst [vmem:[%s880 + $0x28] sm:%s870] %v901
                  %v903 = vld [vmem:[%s879 + $0x2c] sm:%s870]
                  %904 = vst [vmem:[%s880 + $0x2c] sm:%s870] %v903
                  %v905 = vld [vmem:[%s879 + $0x30] sm:%s870]
                  %906 = vst [vmem:[%s880 + $0x30] sm:%s870] %v905
                  %v907 = vld [vmem:[%s879 + $0x34] sm:%s870]
                  %908 = vst [vmem:[%s880 + $0x34] sm:%s870] %v907
                  %v909 = vld [vmem:[%s879 + $0x38] sm:%s870]
                  %910 = vst [vmem:[%s880 + $0x38] sm:%s870] %v909
                  %v911 = vld [vmem:[%s879 + $0x3c] sm:%s870]
                  %912 = vst [vmem:[%s880 + $0x3c] sm:%s870] %v911
                  %v913 = vld [vmem:[%s879 + $0x40] sm:%s870]
                  %914 = vst [vmem:[%s880 + $0x40] sm:%s870] %v913
                  %v915 = vld [vmem:[%s879 + $0x44] sm:%s870]
                  %916 = vst [vmem:[%s880 + $0x44] sm:%s870] %v915
                  %v917 = vld [vmem:[%s879 + $0x48] sm:%s870]
                  %918 = vst [vmem:[%s880 + $0x48] sm:%s870] %v917
                  %v919 = vld [vmem:[%s879 + $0x4c] sm:%s870]
                  %920 = vst [vmem:[%s880 + $0x4c] sm:%s870] %v919
                  %v921 = vld [vmem:[%s879 + $0x50] sm:%s870]
                  %922 = vst [vmem:[%s880 + $0x50] sm:%s870] %v921
                  %v923 = vld [vmem:[%s879 + $0x54] sm:%s870]
                  %924 = vst [vmem:[%s880 + $0x54] sm:%s870] %v923
                  %v925 = vld [vmem:[%s879 + $0x58] sm:%s870]
                  %926 = vst [vmem:[%s880 + $0x58] sm:%s870] %v925
                  %v927 = vld [vmem:[%s879 + $0x5c] sm:%s870]
                  %928 = vst [vmem:[%s880 + $0x5c] sm:%s870] %v927
                  %v929 = vld [vmem:[%s879 + $0x60] sm:%s870]
                  %930 = vst [vmem:[%s880 + $0x60] sm:%s870] %v929
                  %v931 = vld [vmem:[%s879 + $0x64] sm:%s870]
                  %932 = vst [vmem:[%s880 + $0x64] sm:%s870] %v931
                  %v933 = vld [vmem:[%s879 + $0x68] sm:%s870]
                  %934 = vst [vmem:[%s880 + $0x68] sm:%s870] %v933
                  %v935 = vld [vmem:[%s879 + $0x6c] sm:%s870]
                  %936 = vst [vmem:[%s880 + $0x6c] sm:%s870] %v935
                  %v937 = vld [vmem:[%s879 + $0x70] sm:%s870]
                  %938 = vst [vmem:[%s880 + $0x70] sm:%s870] %v937
                  %v939 = vld [vmem:[%s879 + $0x74] sm:%s870]
                  %940 = vst [vmem:[%s880 + $0x74] sm:%s870] %v939
                  %v941 = vld [vmem:[%s879 + $0x78] sm:%s870]
                  %942 = vst [vmem:[%s880 + $0x78] sm:%s870] %v941
                  %v943 = vld [vmem:[%s879 + $0x7c] sm:%s870]
                  %944 = vst [vmem:[%s880 + $0x7c] sm:%s870] %v943
                  %s945 = sadd.s32 1, %s878
                  %p946 = scmp.ge.s32.totalorder %s945, %s871
                  %s947 = scalar_select %p946, 0, %s945
                  %s948 = smul.u32 %s947, 128
                  %s949 = smul.u32 %s947, 128
                  %s950 = scalar_lea.vmem %s740, %s948 [#allocation2]
                  %s951 = scalar_lea.vmem %s751, %s949
                $region71: #{cifar_classifier_forward.4} parent=65 // loop_footer
                  %s875 = sadd.s32 %s873, 1
                $region72: #{cifar_classifier_forward.4} parent=65 // loop_footer_branch
                  %872 = sbr.rel target = $region68
                $region73: #{cifar_classifier_forward.4} parent=65 // loop_exit
                  _
                %s952 = sshrl.u32 %s747, 5
                %s953 = sand.u32 %s747, 31
                %s954 = smul.u32 %s952, 32
                %s955 = smul.u32 4, %s954
                %s956 = scalar_lea.vmem %s740, %s955 [#allocation2]
                %s957 = smul.u32 4, %s954
                %s958 = scalar_lea.vmem %s751, %s957
                // While loop
                $region74: #{cifar_classifier_forward.4} parent=65 // loop_pre_header
                  _
                $region75: #{cifar_classifier_forward.4} parent=65 // loop_header
                  %s960 = sphi 0, %s962
                  %p961 = scmp.ge.s32.totalorder %s960, %s953
                  %s965 = sphi 0, %s972
                  %s966 = sphi %s956, %s975
                  %s967 = sphi %s958, %s976
                $region76: #{cifar_classifier_forward.4} parent=65 // loop_header_branch
                  %964 = sbr.rel (%p961) target = $region80
                $region77: #{cifar_classifier_forward.4} parent=65 // loop_body
                  %v968 = vld [vmem:[%s966] sm:%s870]
                  %969 = vst [vmem:[%s967] sm:%s870] %v968
                  %s970 = sadd.s32 1, %s965
                  %p971 = scmp.ge.s32.totalorder %s970, %s953
                  %s972 = scalar_select %p971, 0, %s970
                  %s973 = smul.u32 %s972, 4
                  %s974 = smul.u32 %s972, 4
                  %s975 = scalar_lea.vmem %s956, %s973 [#allocation2]
                  %s976 = scalar_lea.vmem %s958, %s974
                $region78: #{cifar_classifier_forward.4} parent=65 // loop_footer
                  %s962 = sadd.s32 %s960, 1
                $region79: #{cifar_classifier_forward.4} parent=65 // loop_footer_branch
                  %959 = sbr.rel target = $region75
                $region80: #{cifar_classifier_forward.4} parent=65 // loop_exit
                  _
              $region66: #{cifar_classifier_forward.4} parent=43 // pred_fallthru
                _
            $region44: #{cifar_classifier_forward.4} parent=39 // pred_fallthru
              _
            // Predicated region
            $region45: #{cifar_classifier_forward.4} parent=39 // pred_check
              _
            $region46: #{cifar_classifier_forward.4} parent=39 // pred_check_branch
              %758 = sbr.rel (0) target = $region48
            $region47: #{cifar_classifier_forward.4} parent=39 // pred_region
              %s760 = ssub.s32 16, 1
              %s761 = sshrl.u32 %s747, 5
              // While loop
              $region49: #{cifar_classifier_forward.4} parent=47 // loop_pre_header
                _
              $region50: #{cifar_classifier_forward.4} parent=47 // loop_header
                %s763 = sphi 0, %s765
                %p764 = scmp.ge.s32.totalorder %s763, %s761
                %s768 = sphi 0, %s837
                %s769 = sphi %s740, %s840
                %s770 = sphi %s751, %s841
              $region51: #{cifar_classifier_forward.4} parent=47 // loop_header_branch
                %767 = sbr.rel (%p764) target = $region55
              $region52: #{cifar_classifier_forward.4} parent=47 // loop_body
                %v771 = vld [vmem:[%s769] sm:%s760]
                %772 = vst [vmem:[%s770] sm:%s760] %v771
                %v773 = vld [vmem:[%s769 + $0x4] sm:%s760]
                %774 = vst [vmem:[%s770 + $0x4] sm:%s760] %v773
                %v775 = vld [vmem:[%s769 + $0x8] sm:%s760]
                %776 = vst [vmem:[%s770 + $0x8] sm:%s760] %v775
                %v777 = vld [vmem:[%s769 + $0xc] sm:%s760]
                %778 = vst [vmem:[%s770 + $0xc] sm:%s760] %v777
                %v779 = vld [vmem:[%s769 + $0x10] sm:%s760]
                %780 = vst [vmem:[%s770 + $0x10] sm:%s760] %v779
                %v781 = vld [vmem:[%s769 + $0x14] sm:%s760]
                %782 = vst [vmem:[%s770 + $0x14] sm:%s760] %v781
                %v783 = vld [vmem:[%s769 + $0x18] sm:%s760]
                %784 = vst [vmem:[%s770 + $0x18] sm:%s760] %v783
                %v785 = vld [vmem:[%s769 + $0x1c] sm:%s760]
                %786 = vst [vmem:[%s770 + $0x1c] sm:%s760] %v785
                %v787 = vld [vmem:[%s769 + $0x20] sm:%s760]
                %788 = vst [vmem:[%s770 + $0x20] sm:%s760] %v787
                %v789 = vld [vmem:[%s769 + $0x24] sm:%s760]
                %790 = vst [vmem:[%s770 + $0x24] sm:%s760] %v789
                %v791 = vld [vmem:[%s769 + $0x28] sm:%s760]
                %792 = vst [vmem:[%s770 + $0x28] sm:%s760] %v791
                %v793 = vld [vmem:[%s769 + $0x2c] sm:%s760]
                %794 = vst [vmem:[%s770 + $0x2c] sm:%s760] %v793
                %v795 = vld [vmem:[%s769 + $0x30] sm:%s760]
                %796 = vst [vmem:[%s770 + $0x30] sm:%s760] %v795
                %v797 = vld [vmem:[%s769 + $0x34] sm:%s760]
                %798 = vst [vmem:[%s770 + $0x34] sm:%s760] %v797
                %v799 = vld [vmem:[%s769 + $0x38] sm:%s760]
                %800 = vst [vmem:[%s770 + $0x38] sm:%s760] %v799
                %v801 = vld [vmem:[%s769 + $0x3c] sm:%s760]
                %802 = vst [vmem:[%s770 + $0x3c] sm:%s760] %v801
                %v803 = vld [vmem:[%s769 + $0x40] sm:%s760]
                %804 = vst [vmem:[%s770 + $0x40] sm:%s760] %v803
                %v805 = vld [vmem:[%s769 + $0x44] sm:%s760]
                %806 = vst [vmem:[%s770 + $0x44] sm:%s760] %v805
                %v807 = vld [vmem:[%s769 + $0x48] sm:%s760]
                %808 = vst [vmem:[%s770 + $0x48] sm:%s760] %v807
                %v809 = vld [vmem:[%s769 + $0x4c] sm:%s760]
                %810 = vst [vmem:[%s770 + $0x4c] sm:%s760] %v809
                %v811 = vld [vmem:[%s769 + $0x50] sm:%s760]
                %812 = vst [vmem:[%s770 + $0x50] sm:%s760] %v811
                %v813 = vld [vmem:[%s769 + $0x54] sm:%s760]
                %814 = vst [vmem:[%s770 + $0x54] sm:%s760] %v813
                %v815 = vld [vmem:[%s769 + $0x58] sm:%s760]
                %816 = vst [vmem:[%s770 + $0x58] sm:%s760] %v815
                %v817 = vld [vmem:[%s769 + $0x5c] sm:%s760]
                %818 = vst [vmem:[%s770 + $0x5c] sm:%s760] %v817
                %v819 = vld [vmem:[%s769 + $0x60] sm:%s760]
                %820 = vst [vmem:[%s770 + $0x60] sm:%s760] %v819
                %v821 = vld [vmem:[%s769 + $0x64] sm:%s760]
                %822 = vst [vmem:[%s770 + $0x64] sm:%s760] %v821
                %v823 = vld [vmem:[%s769 + $0x68] sm:%s760]
                %824 = vst [vmem:[%s770 + $0x68] sm:%s760] %v823
                %v825 = vld [vmem:[%s769 + $0x6c] sm:%s760]
                %826 = vst [vmem:[%s770 + $0x6c] sm:%s760] %v825
                %v827 = vld [vmem:[%s769 + $0x70] sm:%s760]
                %828 = vst [vmem:[%s770 + $0x70] sm:%s760] %v827
                %v829 = vld [vmem:[%s769 + $0x74] sm:%s760]
                %830 = vst [vmem:[%s770 + $0x74] sm:%s760] %v829
                %v831 = vld [vmem:[%s769 + $0x78] sm:%s760]
                %832 = vst [vmem:[%s770 + $0x78] sm:%s760] %v831
                %v833 = vld [vmem:[%s769 + $0x7c] sm:%s760]
                %834 = vst [vmem:[%s770 + $0x7c] sm:%s760] %v833
                %s835 = sadd.s32 1, %s768
                %p836 = scmp.ge.s32.totalorder %s835, %s761
                %s837 = scalar_select %p836, 0, %s835
                %s838 = smul.u32 %s837, 128
                %s839 = smul.u32 %s837, 128
                %s840 = scalar_lea.vmem %s740, %s838 [#allocation2]
                %s841 = scalar_lea.vmem %s751, %s839
              $region53: #{cifar_classifier_forward.4} parent=47 // loop_footer
                %s765 = sadd.s32 %s763, 1
              $region54: #{cifar_classifier_forward.4} parent=47 // loop_footer_branch
                %762 = sbr.rel target = $region50
              $region55: #{cifar_classifier_forward.4} parent=47 // loop_exit
                _
              %s842 = sshrl.u32 %s747, 5
              %s843 = sand.u32 %s747, 31
              %s844 = smul.u32 %s842, 32
              %s845 = smul.u32 4, %s844
              %s846 = scalar_lea.vmem %s740, %s845 [#allocation2]
              %s847 = smul.u32 4, %s844
              %s848 = scalar_lea.vmem %s751, %s847
              // While loop
              $region56: #{cifar_classifier_forward.4} parent=47 // loop_pre_header
                _
              $region57: #{cifar_classifier_forward.4} parent=47 // loop_header
                %s850 = sphi 0, %s852
                %p851 = scmp.ge.s32.totalorder %s850, %s843
                %s855 = sphi 0, %s862
                %s856 = sphi %s846, %s865
                %s857 = sphi %s848, %s866
              $region58: #{cifar_classifier_forward.4} parent=47 // loop_header_branch
                %854 = sbr.rel (%p851) target = $region62
              $region59: #{cifar_classifier_forward.4} parent=47 // loop_body
                %v858 = vld [vmem:[%s856] sm:%s760]
                %859 = vst [vmem:[%s857] sm:%s760] %v858
                %s860 = sadd.s32 1, %s855
                %p861 = scmp.ge.s32.totalorder %s860, %s843
                %s862 = scalar_select %p861, 0, %s860
                %s863 = smul.u32 %s862, 4
                %s864 = smul.u32 %s862, 4
                %s865 = scalar_lea.vmem %s846, %s863 [#allocation2]
                %s866 = scalar_lea.vmem %s848, %s864
              $region60: #{cifar_classifier_forward.4} parent=47 // loop_footer
                %s852 = sadd.s32 %s850, 1
              $region61: #{cifar_classifier_forward.4} parent=47 // loop_footer_branch
                %849 = sbr.rel target = $region57
              $region62: #{cifar_classifier_forward.4} parent=47 // loop_exit
                _
            $region48: #{cifar_classifier_forward.4} parent=39 // pred_fallthru
              _
          $region40: #{cifar_classifier_forward.4} parent=35 // pred_fallthru
            _
          %977 = vnop
        $region36: #{cifar_classifier_forward.4} parent=31 // pred_fallthru
          _
      $region32: #{cifar_classifier_forward.4} parent=5 // pred_fallthru
        _
      %p978 = scmp.le.s32.totalorder 2, %s9
      // Predicated region
      $region81: #{cifar_classifier_forward.4} parent=5 // pred_check
        %p979 = pneg %p978
      $region82: #{cifar_classifier_forward.4} parent=5 // pred_check_branch
        %981 = sbr.rel (%p979) target = $region84
      $region83: #{cifar_classifier_forward.4} parent=5 // pred_region
        %s982 = ssub.s32 %s9, 2
        // Predicated region
        $region85: #{cifar_classifier_forward.4} parent=83 // pred_check
          %p983 = pneg %p106
        $region86: #{cifar_classifier_forward.4} parent=83 // pred_check_branch
          %985 = sbr.rel (%p983) target = $region88
        $region87: #{cifar_classifier_forward.4} parent=83 // pred_region
          %s986 = sand.u32 %s91, 1
          %s987 = sand.u32 %s91, 1
          %s988 = smul.addr %s987, 128
          %s989 = scalar_lea.vmem [#allocation2], %s988
        $region88: #{cifar_classifier_forward.4} parent=83 // pred_fallthru
          _
      $region84: #{cifar_classifier_forward.4} parent=5 // pred_fallthru
        _
    $region6: #{cifar_classifier_forward.4} parent=1 // loop_footer
      %s13 = sadd.s32 1, %s9
    $region7: #{cifar_classifier_forward.4} parent=1 // loop_footer_branch
      %8 = sbr.rel target = $region3
    $region8: #{cifar_classifier_forward.4} parent=1 // loop_exit
      _

// kernel: cifar_classifier_forward.5
$region0: #{cifar_classifier_forward.5}
  #allocation0 [shape = 'u32[]', space=smem, size = 0x4, offset = 0x4, fixed_abs, tag = 'smem constant byte address 0x4 - core index']
  #allocation1 [shape = 'u32[144,128]{1,0:T(1,128)}', space=vmem, size = 0x12000, scoped, tag = 'internal scratch']
  %s0 = inlined_call_operand.vmem [shape: bf16[98,576], index: 0, kind: input, shape index: {}]
  %s1 = inlined_call_operand.vmem [shape: bf16[576,128], index: 1, kind: input, shape index: {}]
  %s2 = inlined_call_operand.vmem [shape: f32[1,128], index: 2, kind: input, shape index: {}]
  %s3 = inlined_call_operand.vmem [shape: bf16[98,128], index: 3, kind: output, shape index: {}]
  %s4 = sld [smem:[#allocation0]]
  $region22: #{cifar_classifier_forward.5} parent=0
    _
  %s6 = ssub.s32 1, %s4
  %s7 = scalar_select 0, %s6, %s4
  // Predicated region
  $region2: #{cifar_classifier_forward.5} parent=0 // pred_check
    _
  $region3: #{cifar_classifier_forward.5} parent=0 // pred_check_branch
    %9 = sbr.rel (0) target = $region5
  $region4: #{cifar_classifier_forward.5} parent=0 // pred_region
    _
  $region5: #{cifar_classifier_forward.5} parent=0 // pred_fallthru
    _
  // Predicated region
  $region6: #{cifar_classifier_forward.5} parent=0 // pred_check
    _
  $region7: #{cifar_classifier_forward.5} parent=0 // pred_check_branch
    %11 = sbr.rel (0) target = $region9
  $region8: #{cifar_classifier_forward.5} parent=0 // pred_region
    _
  $region9: #{cifar_classifier_forward.5} parent=0 // pred_fallthru
    _
  // Predicated region
  $region10: #{cifar_classifier_forward.5} parent=0 // pred_check
    _
  $region11: #{cifar_classifier_forward.5} parent=0 // pred_check_branch
    %13 = sbr.rel (0) target = $region13
  $region12: #{cifar_classifier_forward.5} parent=0 // pred_region
    _
  $region13: #{cifar_classifier_forward.5} parent=0 // pred_fallthru
    _
  %v15 = vld [vmem:[%s0] sm:$0xff]
  %v16 = vld [vmem:[%s0 + $0x8] sm:$0xff]
  %v17 = vld [vmem:[%s0 + $0x10] sm:$0xf]
  %v18 = vld [vmem:[%s0 + $0x14] sm:$0xff]
  %v19 = vld [vmem:[%s0 + $0x1c] sm:$0xff]
  %v20 = vld [vmem:[%s0 + $0x24] sm:$0xf]
  %v21 = vld [vmem:[%s0 + $0x28] sm:$0xff]
  %v22 = vld [vmem:[%s0 + $0x30] sm:$0xff]
  %v23 = vld [vmem:[%s0 + $0x38] sm:$0xf]
  %v24 = vld [vmem:[%s0 + $0x3c] sm:$0xff]
  %v25 = vld [vmem:[%s0 + $0x44] sm:$0xff]
  %v26 = vld [vmem:[%s0 + $0x4c] sm:$0xf]
  %v27 = vld [vmem:[%s0 + $0x50] sm:$0xff]
  %v28 = vld [vmem:[%s0 + $0x58] sm:$0xff]
  %v29 = vld [vmem:[%s0 + $0x60] sm:$0xf]
  %v30 = vld [vmem:[%s0 + $0x64] sm:$0xff]
  %v31 = vld [vmem:[%s0 + $0x6c] sm:$0xff]
  %v32 = vld [vmem:[%s0 + $0x74] sm:$0xf]
  %v33 = vld [vmem:[%s0 + $0x78] sm:$0xff]
  %v34 = vld [vmem:[%s0 + $0x80] sm:$0xff]
  %v35 = vld [vmem:[%s0 + $0x88] sm:$0xf]
  %v36 = vld [vmem:[%s0 + $0x8c] sm:$0xff]
  %v37 = vld [vmem:[%s0 + $0x94] sm:$0xff]
  %v38 = vld [vmem:[%s0 + $0x9c] sm:$0xf]
  %v39 = vld [vmem:[%s0 + $0xa0] sm:$0xff]
  %v40 = vld [vmem:[%s0 + $0xa8] sm:$0xff]
  %v41 = vld [vmem:[%s0 + $0xb0] sm:$0xf]
  %v42 = vld [vmem:[%s0 + $0xb4] sm:$0xff]
  %v43 = vld [vmem:[%s0 + $0xbc] sm:$0xff]
  %v44 = vld [vmem:[%s0 + $0xc4] sm:$0xf]
  %v45 = vld [vmem:[%s0 + $0xc8] sm:$0xff]
  %v46 = vld [vmem:[%s0 + $0xd0] sm:$0xff]
  %v47 = vld [vmem:[%s0 + $0xd8] sm:$0xf]
  %v48 = vld [vmem:[%s0 + $0xdc] sm:$0xff]
  %v49 = vld [vmem:[%s0 + $0xe4] sm:$0xff]
  %v50 = vld [vmem:[%s0 + $0xec] sm:$0xf]
  %v51 = vld [vmem:[%s0 + $0xf0] sm:$0x11]
  %v52 = vld [vmem:[%s0 + $0xf8] sm:$0x11]
  %v53 = vld [vmem:[%s0 + $0x100] sm:$0x1]
  %v54 = vld [vmem:[%s1] sm:$0xf]
  %v55 = vld [vmem:[%s1 + $0x4] sm:$0xf]
  %v56 = vld [vmem:[%s1 + $0x8] sm:$0xf]
  %v57 = vld [vmem:[%s1 + $0xc] sm:$0xf]
  %v58 = vld [vmem:[%s1 + $0x10] sm:$0xf]
  %v59 = vld [vmem:[%s1 + $0x14] sm:$0xf]
  %v60 = vld [vmem:[%s1 + $0x18] sm:$0xf]
  %v61 = vld [vmem:[%s1 + $0x1c] sm:$0xf]
  %v62 = vld [vmem:[%s1 + $0x20] sm:$0xf]
  %v63 = vld [vmem:[%s1 + $0x24] sm:$0xf]
  %v64 = vld [vmem:[%s1 + $0x28] sm:$0xf]
  %v65 = vld [vmem:[%s1 + $0x2c] sm:$0xf]
  %v66 = vld [vmem:[%s1 + $0x30] sm:$0xf]
  %v67 = vld [vmem:[%s1 + $0x34] sm:$0xf]
  %v68 = vld [vmem:[%s1 + $0x38] sm:$0xf]
  %v69 = vld [vmem:[%s1 + $0x3c] sm:$0xf]
  %v70 = vld [vmem:[%s1 + $0x40] sm:$0xf]
  %v71 = vld [vmem:[%s1 + $0x44] sm:$0xf]
  %v72 = vld [vmem:[%s1 + $0x48] sm:$0xf]
  %v73 = vld [vmem:[%s1 + $0x4c] sm:$0xf]
  %v74 = vld [vmem:[%s1 + $0x50] sm:$0xf]
  %v75 = vld [vmem:[%s1 + $0x54] sm:$0xf]
  %v76 = vld [vmem:[%s1 + $0x58] sm:$0xf]
  %v77 = vld [vmem:[%s1 + $0x5c] sm:$0xf]
  %v78 = vld [vmem:[%s1 + $0x60] sm:$0xf]
  %v79 = vld [vmem:[%s1 + $0x64] sm:$0xf]
  %v80 = vld [vmem:[%s1 + $0x68] sm:$0xf]
  %v81 = vld [vmem:[%s1 + $0x6c] sm:$0xf]
  %v82 = vld [vmem:[%s1 + $0x70] sm:$0xf]
  %v83 = vld [vmem:[%s1 + $0x74] sm:$0xf]
  %v84 = vld [vmem:[%s1 + $0x78] sm:$0xf]
  %v85 = vld [vmem:[%s1 + $0x7c] sm:$0xf]
  %v86 = vld [vmem:[%s1 + $0x80] sm:$0xf]
  %v87 = vld [vmem:[%s1 + $0x84] sm:$0xf]
  %v88 = vld [vmem:[%s1 + $0x88] sm:$0xf]
  %v89 = vld [vmem:[%s1 + $0x8c] sm:$0xf]
  %v90 = vld [vmem:[%s1 + $0x90] sm:$0xf]
  %v91 = vld [vmem:[%s1 + $0x94] sm:$0xf]
  %v92 = vld [vmem:[%s1 + $0x98] sm:$0xf]
  %v93 = vld [vmem:[%s1 + $0x9c] sm:$0xf]
  %v94 = vld [vmem:[%s1 + $0xa0] sm:$0xf]
  %v95 = vld [vmem:[%s1 + $0xa4] sm:$0xf]
  %v96 = vld [vmem:[%s1 + $0xa8] sm:$0xf]
  %v97 = vld [vmem:[%s1 + $0xac] sm:$0xf]
  %v98 = vld [vmem:[%s1 + $0xb0] sm:$0xf]
  %v99 = vld [vmem:[%s1 + $0xb4] sm:$0xf]
  %v100 = vld [vmem:[%s1 + $0xb8] sm:$0xf]
  %v101 = vld [vmem:[%s1 + $0xbc] sm:$0xf]
  %v102 = vld [vmem:[%s1 + $0xc0] sm:$0xf]
  %v103 = vld [vmem:[%s1 + $0xc4] sm:$0xf]
  %v104 = vld [vmem:[%s1 + $0xc8] sm:$0xf]
  %v105 = vld [vmem:[%s1 + $0xcc] sm:$0xf]
  %v106 = vld [vmem:[%s1 + $0xd0] sm:$0xf]
  %v107 = vld [vmem:[%s1 + $0xd4] sm:$0xf]
  %v108 = vld [vmem:[%s1 + $0xd8] sm:$0xf]
  %v109 = vld [vmem:[%s1 + $0xdc] sm:$0xf]
  %v110 = vld [vmem:[%s1 + $0xe0] sm:$0xf]
  %v111 = vld [vmem:[%s1 + $0xe4] sm:$0xf]
  %v112 = vld [vmem:[%s1 + $0xe8] sm:$0xf]
  %v113 = vld [vmem:[%s1 + $0xec] sm:$0xf]
  %v114 = vld [vmem:[%s1 + $0xf0] sm:$0xf]
  %v115 = vld [vmem:[%s1 + $0xf4] sm:$0xf]
  %v116 = vld [vmem:[%s1 + $0xf8] sm:$0xf]
  %v117 = vld [vmem:[%s1 + $0xfc] sm:$0xf]
  %v118 = vld [vmem:[%s1 + $0x100] sm:$0xf]
  %v119 = vld [vmem:[%s1 + $0x104] sm:$0xf]
  %v120 = vld [vmem:[%s1 + $0x108] sm:$0xf]
  %v121 = vld [vmem:[%s1 + $0x10c] sm:$0xf]
  %v122 = vld [vmem:[%s1 + $0x110] sm:$0xf]
  %v123 = vld [vmem:[%s1 + $0x114] sm:$0xf]
  %v124 = vld [vmem:[%s1 + $0x118] sm:$0xf]
  %v125 = vld [vmem:[%s1 + $0x11c] sm:$0xf]
  %v126 = vld [vmem:[%s2] sm:$0x1]
  %v128 = vlaneseq
  %v129 = vshrl.u32 %v128, 7
  %v130 = vsub.s32 0, %v129
  %v131 = vrot.slane %v126, %v130
  %v172 = vunpack.c.l.b16 %v15
  %v173 = vunpack.c.h.b16 %v15
  %v174 = vunpack.c.l.b16 %v16
  %v175 = vunpack.c.h.b16 %v16
  %v176 = vunpack.c.l.b16 %v17
  %v177 = vunpack.c.l.b16 %v18
  %v178 = vunpack.c.h.b16 %v18
  %v179 = vunpack.c.l.b16 %v19
  %v180 = vunpack.c.h.b16 %v19
  %v181 = vunpack.c.l.b16 %v20
  %v182 = vunpack.c.l.b16 %v21
  %v183 = vunpack.c.h.b16 %v21
  %v184 = vunpack.c.l.b16 %v22
  %v185 = vunpack.c.h.b16 %v22
  %v186 = vunpack.c.l.b16 %v23
  %v187 = vunpack.c.l.b16 %v24
  %v188 = vunpack.c.h.b16 %v24
  %v189 = vunpack.c.l.b16 %v25
  %v190 = vunpack.c.h.b16 %v25
  %v191 = vunpack.c.l.b16 %v26
  %v192 = vunpack.c.l.b16 %v27
  %v193 = vunpack.c.h.b16 %v27
  %v194 = vunpack.c.l.b16 %v28
  %v195 = vunpack.c.h.b16 %v28
  %v196 = vunpack.c.l.b16 %v29
  %v197 = vunpack.c.l.b16 %v30
  %v198 = vunpack.c.h.b16 %v30
  %v199 = vunpack.c.l.b16 %v31
  %v200 = vunpack.c.h.b16 %v31
  %v201 = vunpack.c.l.b16 %v32
  %v202 = vunpack.c.l.b16 %v33
  %v203 = vunpack.c.h.b16 %v33
  %v204 = vunpack.c.l.b16 %v34
  %v205 = vunpack.c.h.b16 %v34
  %v206 = vunpack.c.l.b16 %v35
  %v207 = vunpack.c.l.b16 %v36
  %v208 = vunpack.c.h.b16 %v36
  %v209 = vunpack.c.l.b16 %v37
  %v210 = vunpack.c.h.b16 %v37
  %v211 = vunpack.c.l.b16 %v38
  %v212 = vunpack.c.l.b16 %v39
  %v213 = vunpack.c.h.b16 %v39
  %v214 = vunpack.c.l.b16 %v40
  %v215 = vunpack.c.h.b16 %v40
  %v216 = vunpack.c.l.b16 %v41
  %v217 = vunpack.c.l.b16 %v42
  %v218 = vunpack.c.h.b16 %v42
  %v219 = vunpack.c.l.b16 %v43
  %v220 = vunpack.c.h.b16 %v43
  %v221 = vunpack.c.l.b16 %v44
  %v222 = vunpack.c.l.b16 %v45
  %v223 = vunpack.c.h.b16 %v45
  %v224 = vunpack.c.l.b16 %v46
  %v225 = vunpack.c.h.b16 %v46
  %v226 = vunpack.c.l.b16 %v47
  %v227 = vunpack.c.l.b16 %v48
  %v228 = vunpack.c.h.b16 %v48
  %v229 = vunpack.c.l.b16 %v49
  %v230 = vunpack.c.h.b16 %v49
  %v231 = vunpack.c.l.b16 %v50
  %v232 = vunpack.c.l.b16 %v51
  %v233 = vunpack.c.h.b16 %v51
  %v234 = vunpack.c.l.b16 %v52
  %v235 = vunpack.c.h.b16 %v52
  %v236 = vunpack.c.l.b16 %v53
  %v237 = vpack.c.b16 %v177, %v172
  %v238 = vpack.c.b16 %v178, %v173
  %v239 = vpack.c.b16 %v179, %v174
  %v240 = vpack.c.b16 %v180, %v175
  %v241 = vpack.c.b16 %v181, %v176
  %v242 = vpack.c.b16 %v187, %v182
  %v243 = vpack.c.b16 %v188, %v183
  %v244 = vpack.c.b16 %v189, %v184
  %v245 = vpack.c.b16 %v190, %v185
  %v246 = vpack.c.b16 %v191, %v186
  %v247 = vpack.c.b16 %v197, %v192
  %v248 = vpack.c.b16 %v198, %v193
  %v249 = vpack.c.b16 %v199, %v194
  %v250 = vpack.c.b16 %v200, %v195
  %v251 = vpack.c.b16 %v201, %v196
  %v252 = vpack.c.b16 %v207, %v202
  %v253 = vpack.c.b16 %v208, %v203
  %v254 = vpack.c.b16 %v209, %v204
  %v255 = vpack.c.b16 %v210, %v205
  %v256 = vpack.c.b16 %v211, %v206
  %v257 = vpack.c.b16 %v217, %v212
  %v258 = vpack.c.b16 %v218, %v213
  %v259 = vpack.c.b16 %v219, %v214
  %v260 = vpack.c.b16 %v220, %v215
  %v261 = vpack.c.b16 %v221, %v216
  %v262 = vpack.c.b16 %v227, %v222
  %v263 = vpack.c.b16 %v228, %v223
  %v264 = vpack.c.b16 %v229, %v224
  %v265 = vpack.c.b16 %v230, %v225
  %v266 = vpack.c.b16 %v231, %v226
  %v267 = vpack.c.b16 %v232, %v232
  %v268 = vpack.c.b16 %v233, %v233
  %v269 = vpack.c.b16 %v234, %v234
  %v270 = vpack.c.b16 %v235, %v235
  %v271 = vpack.c.b16 %v236, %v236
  %v372 = vunpack.c.l.b16 %v54
  %v373 = vunpack.c.l.b16 %v55
  %v374 = vunpack.c.l.b16 %v56
  %v375 = vunpack.c.l.b16 %v57
  %v376 = vunpack.c.l.b16 %v58
  %v377 = vunpack.c.l.b16 %v59
  %v378 = vunpack.c.l.b16 %v60
  %v379 = vunpack.c.l.b16 %v61
  %v380 = vunpack.c.l.b16 %v62
  %v381 = vunpack.c.l.b16 %v63
  %v382 = vunpack.c.l.b16 %v64
  %v383 = vunpack.c.l.b16 %v65
  %v384 = vunpack.c.l.b16 %v66
  %v385 = vunpack.c.l.b16 %v67
  %v386 = vunpack.c.l.b16 %v68
  %v387 = vunpack.c.l.b16 %v69
  %v388 = vunpack.c.l.b16 %v70
  %v389 = vunpack.c.l.b16 %v71
  %v390 = vunpack.c.l.b16 %v72
  %v391 = vunpack.c.l.b16 %v73
  %v392 = vunpack.c.l.b16 %v74
  %v393 = vunpack.c.l.b16 %v75
  %v394 = vunpack.c.l.b16 %v76
  %v395 = vunpack.c.l.b16 %v77
  %v396 = vunpack.c.l.b16 %v78
  %v397 = vunpack.c.l.b16 %v79
  %v398 = vunpack.c.l.b16 %v80
  %v399 = vunpack.c.l.b16 %v81
  %v400 = vunpack.c.l.b16 %v82
  %v401 = vunpack.c.l.b16 %v83
  %v402 = vunpack.c.l.b16 %v84
  %v403 = vunpack.c.l.b16 %v85
  %v404 = vunpack.c.l.b16 %v86
  %v405 = vunpack.c.l.b16 %v87
  %v406 = vunpack.c.l.b16 %v88
  %v407 = vunpack.c.l.b16 %v89
  %v408 = vunpack.c.l.b16 %v90
  %v409 = vunpack.c.l.b16 %v91
  %v410 = vunpack.c.l.b16 %v92
  %v411 = vunpack.c.l.b16 %v93
  %v412 = vunpack.c.l.b16 %v94
  %v413 = vunpack.c.l.b16 %v95
  %v414 = vunpack.c.l.b16 %v96
  %v415 = vunpack.c.l.b16 %v97
  %v416 = vunpack.c.l.b16 %v98
  %v417 = vunpack.c.l.b16 %v99
  %v418 = vunpack.c.l.b16 %v100
  %v419 = vunpack.c.l.b16 %v101
  %v420 = vunpack.c.l.b16 %v102
  %v421 = vunpack.c.l.b16 %v103
  %v422 = vunpack.c.l.b16 %v104
  %v423 = vunpack.c.l.b16 %v105
  %v424 = vunpack.c.l.b16 %v106
  %v425 = vunpack.c.l.b16 %v107
  %v426 = vunpack.c.l.b16 %v108
  %v427 = vunpack.c.l.b16 %v109
  %v428 = vunpack.c.l.b16 %v110
  %v429 = vunpack.c.l.b16 %v111
  %v430 = vunpack.c.l.b16 %v112
  %v431 = vunpack.c.l.b16 %v113
  %v432 = vunpack.c.l.b16 %v114
  %v433 = vunpack.c.l.b16 %v115
  %v434 = vunpack.c.l.b16 %v116
  %v435 = vunpack.c.l.b16 %v117
  %v436 = vunpack.c.l.b16 %v118
  %v437 = vunpack.c.l.b16 %v119
  %v438 = vunpack.c.l.b16 %v120
  %v439 = vunpack.c.l.b16 %v121
  %v440 = vunpack.c.l.b16 %v122
  %v441 = vunpack.c.l.b16 %v123
  %v442 = vunpack.c.l.b16 %v124
  %v443 = vunpack.c.l.b16 %v125
  %v444 = vpack.c.b16 %v373, %v372
  %v445 = vpack.c.b16 %v375, %v374
  %v446 = vpack.c.b16 %v377, %v376
  %v447 = vpack.c.b16 %v379, %v378
  %v448 = vpack.c.b16 %v381, %v380
  %v449 = vpack.c.b16 %v383, %v382
  %v450 = vpack.c.b16 %v385, %v384
  %v451 = vpack.c.b16 %v387, %v386
  %v452 = vpack.c.b16 %v389, %v388
  %v453 = vpack.c.b16 %v391, %v390
  %v454 = vpack.c.b16 %v393, %v392
  %v455 = vpack.c.b16 %v395, %v394
  %v456 = vpack.c.b16 %v397, %v396
  %v457 = vpack.c.b16 %v399, %v398
  %v458 = vpack.c.b16 %v401, %v400
  %v459 = vpack.c.b16 %v403, %v402
  %v460 = vpack.c.b16 %v405, %v404
  %v461 = vpack.c.b16 %v407, %v406
  %v462 = vpack.c.b16 %v409, %v408
  %v463 = vpack.c.b16 %v411, %v410
  %v464 = vpack.c.b16 %v413, %v412
  %v465 = vpack.c.b16 %v415, %v414
  %v466 = vpack.c.b16 %v417, %v416
  %v467 = vpack.c.b16 %v419, %v418
  %v468 = vpack.c.b16 %v421, %v420
  %v469 = vpack.c.b16 %v423, %v422
  %v470 = vpack.c.b16 %v425, %v424
  %v471 = vpack.c.b16 %v427, %v426
  %v472 = vpack.c.b16 %v429, %v428
  %v473 = vpack.c.b16 %v431, %v430
  %v474 = vpack.c.b16 %v433, %v432
  %v475 = vpack.c.b16 %v435, %v434
  %v476 = vpack.c.b16 %v437, %v436
  %v477 = vpack.c.b16 %v439, %v438
  %v478 = vpack.c.b16 %v441, %v440
  %v479 = vpack.c.b16 %v443, %v442
  %vm516 = vcmask 523264
  %v518 = vsel %vm516, %v241, 0
  %v521 = vsel %vm516, %v246, 0
  %v524 = vsel %vm516, %v251, 0
  %v527 = vsel %vm516, %v256, 0
  %v530 = vsel %vm516, %v261, 0
  %v533 = vsel %vm516, %v266, 0
  %v536 = vsel %vm516, %v271, 0
  %538 = vmatprep.subr.bf16.mxu0 0
  %539 = vmatpush1.bf16.msra.mxu0 %v451
  %540 = vmatprep.subr.bf16.mxu0 0
  %541 = vmatpush1.bf16.msra.mxu0 %v450
  %542 = vmatprep.subr.bf16.mxu0 0
  %543 = vmatpush1.bf16.msra.mxu0 %v449
  %544 = vmatprep.subr.bf16.mxu0 0
  %545 = vmatpush1.bf16.msra.mxu0 %v448
  %546 = vmatprep.subr.bf16.mxu0 0
  %547 = vmatpush1.bf16.msra.mxu0 %v447
  %548 = vmatprep.subr.bf16.mxu0 0
  %549 = vmatpush1.bf16.msra.mxu0 %v446
  %550 = vmatprep.subr.bf16.mxu0 0
  %551 = vmatpush1.bf16.msra.mxu0 %v445
  %552 = vmatprep.subr.bf16.mxu0 0
  %553 = vmatpush1.bf16.msra.mxu0 %v444
  %554 = vmatprep.subr.bf16.mxu0 0
  %555 = vmatpush2.bf16.msra.mxu0 %v459
  %556 = vmatprep.subr.bf16.mxu0 0
  %557 = vmatpush2.bf16.msra.mxu0 %v458
  %558 = vmatprep.subr.bf16.mxu0 0
  %559 = vmatpush2.bf16.msra.mxu0 %v457
  %560 = vmatprep.subr.bf16.mxu0 0
  %561 = vmatpush2.bf16.msra.mxu0 %v456
  %562 = vmatprep.subr.bf16.mxu0 0
  %563 = vmatpush2.bf16.msra.mxu0 %v455
  %564 = vmatprep.subr.bf16.mxu0 0
  %565 = vmatpush2.bf16.msra.mxu0 %v454
  %566 = vmatprep.subr.bf16.mxu0 0
  %567 = vmatpush2.bf16.msra.mxu0 %v453
  %568 = vmatprep.subr.bf16.mxu0 0
  %569 = vmatpush2.bf16.msra.mxu0 %v452
  %570 = vmatprep.mubr.bf16.mxu0 %v238
  %571 = vmatmul.mubr.bf16.gmra.mxu0 %v237
  %v572 = vpop.f32.mrf.mxu0
  %v573 = vadd.f32 %v131, %v572
  %v574 = vpop.f32.mrf.mxu0
  %v575 = vpop.f32.mrf.mxu0
  %v576 = vadd.f32 %v131, %v575
  %v577 = vpop.f32.mrf.mxu0
  %578 = vmatprep.mubr.bf16.mxu0 %v243
  %579 = vmatmul.mubr.bf16.gmra.mxu0 %v242
  %v580 = vpop.f32.mrf.mxu0
  %v581 = vadd.f32 %v131, %v580
  %v582 = vpop.f32.mrf.mxu0
  %v583 = vpop.f32.mrf.mxu0
  %v584 = vadd.f32 %v131, %v583
  %v585 = vpop.f32.mrf.mxu0
  %586 = vmatprep.mubr.bf16.mxu0 %v248
  %587 = vmatmul.mubr.bf16.gmra.mxu0 %v247
  %v588 = vpop.f32.mrf.mxu0
  %v589 = vadd.f32 %v131, %v588
  %v590 = vpop.f32.mrf.mxu0
  %v591 = vpop.f32.mrf.mxu0
  %v592 = vadd.f32 %v131, %v591
  %v593 = vpop.f32.mrf.mxu0
  %594 = vmatprep.mubr.bf16.mxu0 %v253
  %595 = vmatmul.mubr.bf16.gmra.mxu0 %v252
  %v596 = vpop.f32.mrf.mxu0
  %v597 = vadd.f32 %v131, %v596
  %v598 = vpop.f32.mrf.mxu0
  %v599 = vpop.f32.mrf.mxu0
  %v600 = vadd.f32 %v131, %v599
  %v601 = vpop.f32.mrf.mxu0
  %602 = vmatprep.mubr.bf16.mxu0 %v258
  %603 = vmatmul.mubr.bf16.gmra.mxu0 %v257
  %v604 = vpop.f32.mrf.mxu0
  %v605 = vadd.f32 %v131, %v604
  %v606 = vpop.f32.mrf.mxu0
  %v607 = vpop.f32.mrf.mxu0
  %v608 = vadd.f32 %v131, %v607
  %v609 = vpop.f32.mrf.mxu0
  %610 = vmatprep.mubr.bf16.mxu0 %v263
  %611 = vmatmul.mubr.bf16.gmra.mxu0 %v262
  %v612 = vpop.f32.mrf.mxu0
  %v613 = vadd.f32 %v131, %v612
  %v614 = vpop.f32.mrf.mxu0
  %v615 = vpop.f32.mrf.mxu0
  %v616 = vadd.f32 %v131, %v615
  %v617 = vpop.f32.mrf.mxu0
  %618 = vmatprep.mubr.bf16.mxu0 %v268
  %619 = vmatmul.mubr.bf16.gmra.mxu0 %v267
  %v620 = vpop.f32.mrf.mxu0
  %v621 = vadd.f32 %v131, %v620
  %v622 = vpop.f32.mrf.mxu0
  %v623 = vpop.f32.mrf.mxu0
  %v624 = vpop.f32.mrf.mxu0
  %625 = vdwg.mxu0
  %626 = vmatprep.subr.bf16.mxu0 0
  %627 = vmatpush1.bf16.msra.mxu0 %v467
  %628 = vmatprep.subr.bf16.mxu0 0
  %629 = vmatpush1.bf16.msra.mxu0 %v466
  %630 = vmatprep.subr.bf16.mxu0 0
  %631 = vmatpush1.bf16.msra.mxu0 %v465
  %632 = vmatprep.subr.bf16.mxu0 0
  %633 = vmatpush1.bf16.msra.mxu0 %v464
  %634 = vmatprep.subr.bf16.mxu0 0
  %635 = vmatpush1.bf16.msra.mxu0 %v463
  %636 = vmatprep.subr.bf16.mxu0 0
  %637 = vmatpush1.bf16.msra.mxu0 %v462
  %638 = vmatprep.subr.bf16.mxu0 0
  %639 = vmatpush1.bf16.msra.mxu0 %v461
  %640 = vmatprep.subr.bf16.mxu0 0
  %641 = vmatpush1.bf16.msra.mxu0 %v460
  %642 = vmatprep.subr.bf16.mxu0 0
  %643 = vmatpush2.bf16.msra.mxu0 %v475
  %644 = vmatprep.subr.bf16.mxu0 0
  %645 = vmatpush2.bf16.msra.mxu0 %v474
  %646 = vmatprep.subr.bf16.mxu0 0
  %647 = vmatpush2.bf16.msra.mxu0 %v473
  %648 = vmatprep.subr.bf16.mxu0 0
  %649 = vmatpush2.bf16.msra.mxu0 %v472
  %650 = vmatprep.subr.bf16.mxu0 0
  %651 = vmatpush2.bf16.msra.mxu0 %v471
  %652 = vmatprep.subr.bf16.mxu0 0
  %653 = vmatpush2.bf16.msra.mxu0 %v470
  %654 = vmatprep.subr.bf16.mxu0 0
  %655 = vmatpush2.bf16.msra.mxu0 %v469
  %656 = vmatprep.subr.bf16.mxu0 0
  %657 = vmatpush2.bf16.msra.mxu0 %v468
  %658 = vmatprep.mubr.bf16.mxu0 %v240
  %659 = vmatmul.mubr.bf16.gmra.mxu0 %v239
  %v660 = vpop.f32.mrf.mxu0
  %v661 = vadd.f32 %v573, %v660
  %v662 = vpop.f32.mrf.mxu0
  %v663 = vpop.f32.mrf.mxu0
  %v664 = vadd.f32 %v576, %v663
  %v665 = vpop.f32.mrf.mxu0
  %666 = vmatprep.mubr.bf16.mxu0 %v245
  %667 = vmatmul.mubr.bf16.gmra.mxu0 %v244
  %v668 = vpop.f32.mrf.mxu0
  %v669 = vadd.f32 %v581, %v668
  %v670 = vpop.f32.mrf.mxu0
  %v671 = vpop.f32.mrf.mxu0
  %v672 = vadd.f32 %v584, %v671
  %v673 = vpop.f32.mrf.mxu0
  %674 = vmatprep.mubr.bf16.mxu0 %v250
  %675 = vmatmul.mubr.bf16.gmra.mxu0 %v249
  %v676 = vpop.f32.mrf.mxu0
  %v677 = vadd.f32 %v589, %v676
  %v678 = vpop.f32.mrf.mxu0
  %v679 = vpop.f32.mrf.mxu0
  %v680 = vadd.f32 %v592, %v679
  %v681 = vpop.f32.mrf.mxu0
  %682 = vmatprep.mubr.bf16.mxu0 %v255
  %683 = vmatmul.mubr.bf16.gmra.mxu0 %v254
  %v684 = vpop.f32.mrf.mxu0
  %v685 = vadd.f32 %v597, %v684
  %v686 = vpop.f32.mrf.mxu0
  %v687 = vpop.f32.mrf.mxu0
  %v688 = vadd.f32 %v600, %v687
  %v689 = vpop.f32.mrf.mxu0
  %690 = vmatprep.mubr.bf16.mxu0 %v260
  %691 = vmatmul.mubr.bf16.gmra.mxu0 %v259
  %v692 = vpop.f32.mrf.mxu0
  %v693 = vadd.f32 %v605, %v692
  %v694 = vpop.f32.mrf.mxu0
  %v695 = vpop.f32.mrf.mxu0
  %v696 = vadd.f32 %v608, %v695
  %v697 = vpop.f32.mrf.mxu0
  %698 = vmatprep.mubr.bf16.mxu0 %v265
  %699 = vmatmul.mubr.bf16.gmra.mxu0 %v264
  %v700 = vpop.f32.mrf.mxu0
  %v701 = vadd.f32 %v613, %v700
  %v702 = vpop.f32.mrf.mxu0
  %v703 = vpop.f32.mrf.mxu0
  %v704 = vadd.f32 %v616, %v703
  %v705 = vpop.f32.mrf.mxu0
  %706 = vmatprep.mubr.bf16.mxu0 %v270
  %707 = vmatmul.mubr.bf16.gmra.mxu0 %v269
  %v708 = vpop.f32.mrf.mxu0
  %v709 = vadd.f32 %v621, %v708
  %v710 = vpop.f32.mrf.mxu0
  %v711 = vpop.f32.mrf.mxu0
  %v712 = vpop.f32.mrf.mxu0
  %713 = vdwg.mxu0
  %714 = vmatprep.subr.bf16.mxu0 0
  %715 = vmatpush1.bf16.msra.mxu0 0
  %716 = vmatprep.subr.bf16.mxu0 0
  %717 = vmatpush1.bf16.msra.mxu0 0
  %718 = vmatprep.subr.bf16.mxu0 0
  %719 = vmatpush1.bf16.msra.mxu0 0
  %720 = vmatprep.subr.bf16.mxu0 0
  %721 = vmatpush1.bf16.msra.mxu0 0
  %722 = vmatprep.subr.bf16.mxu0 0
  %723 = vmatpush1.bf16.msra.mxu0 %v479
  %724 = vmatprep.subr.bf16.mxu0 0
  %725 = vmatpush1.bf16.msra.mxu0 %v478
  %726 = vmatprep.subr.bf16.mxu0 0
  %727 = vmatpush1.bf16.msra.mxu0 %v477
  %728 = vmatprep.subr.bf16.mxu0 0
  %729 = vmatpush1.bf16.msra.mxu0 %v476
  %730 = vmatprep.subr.bf16.mxu0 0
  %731 = vmatpush2.bf16.msra.mxu0 0
  %732 = vmatprep.subr.bf16.mxu0 0
  %733 = vmatpush2.bf16.msra.mxu0 0
  %734 = vmatprep.subr.bf16.mxu0 0
  %735 = vmatpush2.bf16.msra.mxu0 0
  %736 = vmatprep.subr.bf16.mxu0 0
  %737 = vmatpush2.bf16.msra.mxu0 0
  %738 = vmatprep.subr.bf16.mxu0 0
  %739 = vmatpush2.bf16.msra.mxu0 0
  %740 = vmatprep.subr.bf16.mxu0 0
  %741 = vmatpush2.bf16.msra.mxu0 0
  %742 = vmatprep.subr.bf16.mxu0 0
  %743 = vmatpush2.bf16.msra.mxu0 0
  %744 = vmatprep.subr.bf16.mxu0 0
  %745 = vmatpush2.bf16.msra.mxu0 0
  %746 = vmatprep.mubr.bf16.mxu0 0
  %747 = vmatmul.mubr.bf16.gmra.mxu0 %v518
  %v748 = vpop.f32.mrf.mxu0
  %v749 = vadd.f32 %v661, %v748
  %v750 = vpop.f32.mrf.mxu0
  %v751 = vpop.f32.mrf.mxu0
  %v752 = vadd.f32 %v664, %v751
  %v753 = vpop.f32.mrf.mxu0
  %754 = vmatprep.mubr.bf16.mxu0 0
  %755 = vmatmul.mubr.bf16.gmra.mxu0 %v521
  %v756 = vpop.f32.mrf.mxu0
  %v757 = vadd.f32 %v669, %v756
  %v758 = vpop.f32.mrf.mxu0
  %v759 = vpop.f32.mrf.mxu0
  %v760 = vadd.f32 %v672, %v759
  %v761 = vpop.f32.mrf.mxu0
  %762 = vmatprep.mubr.bf16.mxu0 0
  %763 = vmatmul.mubr.bf16.gmra.mxu0 %v524
  %v764 = vpop.f32.mrf.mxu0
  %v765 = vadd.f32 %v677, %v764
  %v766 = vpop.f32.mrf.mxu0
  %v767 = vpop.f32.mrf.mxu0
  %v768 = vadd.f32 %v680, %v767
  %v769 = vpop.f32.mrf.mxu0
  %770 = vmatprep.mubr.bf16.mxu0 0
  %771 = vmatmul.mubr.bf16.gmra.mxu0 %v527
  %v772 = vpop.f32.mrf.mxu0
  %v773 = vadd.f32 %v685, %v772
  %v774 = vpop.f32.mrf.mxu0
  %v775 = vpop.f32.mrf.mxu0
  %v776 = vadd.f32 %v688, %v775
  %v777 = vpop.f32.mrf.mxu0
  %778 = vmatprep.mubr.bf16.mxu0 0
  %779 = vmatmul.mubr.bf16.gmra.mxu0 %v530
  %v780 = vpop.f32.mrf.mxu0
  %v781 = vadd.f32 %v693, %v780
  %v782 = vpop.f32.mrf.mxu0
  %v783 = vpop.f32.mrf.mxu0
  %v784 = vadd.f32 %v696, %v783
  %v785 = vpop.f32.mrf.mxu0
  %786 = vmatprep.mubr.bf16.mxu0 0
  %787 = vmatmul.mubr.bf16.gmra.mxu0 %v533
  %v788 = vpop.f32.mrf.mxu0
  %v789 = vadd.f32 %v701, %v788
  %v790 = vpop.f32.mrf.mxu0
  %v791 = vpop.f32.mrf.mxu0
  %v792 = vadd.f32 %v704, %v791
  %v793 = vpop.f32.mrf.mxu0
  %794 = vmatprep.mubr.bf16.mxu0 0
  %795 = vmatmul.mubr.bf16.gmra.mxu0 %v536
  %v796 = vpop.f32.mrf.mxu0
  %v797 = vadd.f32 %v709, %v796
  %v798 = vpop.f32.mrf.mxu0
  %v799 = vpop.f32.mrf.mxu0
  %v800 = vpop.f32.mrf.mxu0
  %801 = vdwg.mxu0
  %v802 = vmax.f32 %v749, 0.0
  %v803 = vmax.f32 %v752, 0.0
  %v804 = vmax.f32 %v757, 0.0
  %v805 = vmax.f32 %v760, 0.0
  %v806 = vmax.f32 %v765, 0.0
  %v807 = vmax.f32 %v768, 0.0
  %v808 = vmax.f32 %v773, 0.0
  %v809 = vmax.f32 %v776, 0.0
  %v810 = vmax.f32 %v781, 0.0
  %v811 = vmax.f32 %v784, 0.0
  %v812 = vmax.f32 %v789, 0.0
  %v813 = vmax.f32 %v792, 0.0
  %v814 = vmax.f32 %v797, 0.0
  %v815 = vpack.c.bf16 %v803, %v802
  %v816 = vpack.c.bf16 %v805, %v804
  %v817 = vpack.c.bf16 %v807, %v806
  %v818 = vpack.c.bf16 %v809, %v808
  %v819 = vpack.c.bf16 %v811, %v810
  %v820 = vpack.c.bf16 %v813, %v812
  %v821 = vpack.c.bf16 %v814, %v814
  %v829 = vunpack.c.l.b16 %v815
  %v830 = vunpack.c.h.b16 %v815
  %v831 = vunpack.c.l.b16 %v816
  %v832 = vunpack.c.h.b16 %v816
  %v833 = vunpack.c.l.b16 %v817
  %v834 = vunpack.c.h.b16 %v817
  %v835 = vunpack.c.l.b16 %v818
  %v836 = vunpack.c.h.b16 %v818
  %v837 = vunpack.c.l.b16 %v819
  %v838 = vunpack.c.h.b16 %v819
  %v839 = vunpack.c.l.b16 %v820
  %v840 = vunpack.c.h.b16 %v820
  %v841 = vunpack.c.l.b16 %v821
  %v842 = vpack.c.b16 %v829, %v829
  %v843 = vpack.c.b16 %v830, %v830
  %v844 = vpack.c.b16 %v831, %v831
  %v845 = vpack.c.b16 %v832, %v832
  %v846 = vpack.c.b16 %v833, %v833
  %v847 = vpack.c.b16 %v834, %v834
  %v848 = vpack.c.b16 %v835, %v835
  %v849 = vpack.c.b16 %v836, %v836
  %v850 = vpack.c.b16 %v837, %v837
  %v851 = vpack.c.b16 %v838, %v838
  %v852 = vpack.c.b16 %v839, %v839
  %v853 = vpack.c.b16 %v840, %v840
  %v854 = vpack.c.b16 %v841, %v841
  %868 = vst [vmem:[%s3] sm:$0xf] %v842
  %869 = vst [vmem:[%s3 + $0x4] sm:$0xf] %v843
  %870 = vst [vmem:[%s3 + $0x8] sm:$0xf] %v844
  %871 = vst [vmem:[%s3 + $0xc] sm:$0xf] %v845
  %872 = vst [vmem:[%s3 + $0x10] sm:$0xf] %v846
  %873 = vst [vmem:[%s3 + $0x14] sm:$0xf] %v847
  %874 = vst [vmem:[%s3 + $0x18] sm:$0xf] %v848
  %875 = vst [vmem:[%s3 + $0x1c] sm:$0xf] %v849
  %876 = vst [vmem:[%s3 + $0x20] sm:$0xf] %v850
  %877 = vst [vmem:[%s3 + $0x24] sm:$0xf] %v851
  %878 = vst [vmem:[%s3 + $0x28] sm:$0xf] %v852
  %879 = vst [vmem:[%s3 + $0x2c] sm:$0xf] %v853
  %880 = vst [vmem:[%s3 + $0x30] sm:$0x1] %v854
  // Predicated region
  $region14: #{cifar_classifier_forward.5} parent=0 // pred_check
    _
  $region15: #{cifar_classifier_forward.5} parent=0 // pred_check_branch
    %882 = sbr.rel (0) target = $region17
  $region16: #{cifar_classifier_forward.5} parent=0 // pred_region
    _
  $region17: #{cifar_classifier_forward.5} parent=0 // pred_fallthru
    _
  // Predicated region
  $region18: #{cifar_classifier_forward.5} parent=0 // pred_check
    _
  $region19: #{cifar_classifier_forward.5} parent=0 // pred_check_branch
    %884 = sbr.rel (0) target = $region21
  $region20: #{cifar_classifier_forward.5} parent=0 // pred_region
    _
  $region21: #{cifar_classifier_forward.5} parent=0 // pred_fallthru
    _

// kernel: cifar_classifier_forward.6
$region0: #{cifar_classifier_forward.6}
  #allocation0 [shape = 'u32[]', space=smem, size = 0x4, offset = 0x4, fixed_abs, tag = 'smem constant byte address 0x4 - core index']
  #allocation1 [shape = 'u32[144,128]{1,0:T(1,128)}', space=vmem, size = 0x12000, scoped, tag = 'internal scratch']
  %s0 = inlined_call_operand.vmem [shape: bf16[18,1152], index: 0, kind: input, shape index: {}]
  %s1 = inlined_call_operand.vmem [shape: bf16[1152,256], index: 1, kind: input, shape index: {}]
  %s2 = inlined_call_operand.vmem [shape: f32[1,256], index: 2, kind: input, shape index: {}]
  %s3 = inlined_call_operand.vmem [shape: bf16[18,256], index: 3, kind: output, shape index: {}]
  %s4 = sld [smem:[#allocation0]]
  $region22: #{cifar_classifier_forward.6} parent=0
    _
  %s6 = ssub.s32 1, %s4
  %s7 = scalar_select 0, %s6, %s4
  // Predicated region
  $region2: #{cifar_classifier_forward.6} parent=0 // pred_check
    _
  $region3: #{cifar_classifier_forward.6} parent=0 // pred_check_branch
    %9 = sbr.rel (0) target = $region5
  $region4: #{cifar_classifier_forward.6} parent=0 // pred_region
    _
  $region5: #{cifar_classifier_forward.6} parent=0 // pred_fallthru
    _
  // Predicated region
  $region6: #{cifar_classifier_forward.6} parent=0 // pred_check
    _
  $region7: #{cifar_classifier_forward.6} parent=0 // pred_check_branch
    %11 = sbr.rel (0) target = $region9
  $region8: #{cifar_classifier_forward.6} parent=0 // pred_region
    _
  $region9: #{cifar_classifier_forward.6} parent=0 // pred_fallthru
    _
  // Predicated region
  $region10: #{cifar_classifier_forward.6} parent=0 // pred_check
    _
  $region11: #{cifar_classifier_forward.6} parent=0 // pred_check_branch
    %13 = sbr.rel (0) target = $region13
  $region12: #{cifar_classifier_forward.6} parent=0 // pred_region
    _
  $region13: #{cifar_classifier_forward.6} parent=0 // pred_fallthru
    _
  %v15 = vld [vmem:[%s0] sm:$0xff]
  %v16 = vld [vmem:[%s0 + $0x8] sm:$0xff]
  %v17 = vld [vmem:[%s0 + $0x10] sm:$0xff]
  %v18 = vld [vmem:[%s0 + $0x18] sm:$0xff]
  %v19 = vld [vmem:[%s0 + $0x20] sm:$0xf]
  %v20 = vld [vmem:[%s0 + $0x24] sm:$0xff]
  %v21 = vld [vmem:[%s0 + $0x2c] sm:$0xff]
  %v22 = vld [vmem:[%s0 + $0x34] sm:$0xff]
  %v23 = vld [vmem:[%s0 + $0x3c] sm:$0xff]
  %v24 = vld [vmem:[%s0 + $0x44] sm:$0xf]
  %v25 = vld [vmem:[%s0 + $0x48] sm:$0x11]
  %v26 = vld [vmem:[%s0 + $0x50] sm:$0x11]
  %v27 = vld [vmem:[%s0 + $0x58] sm:$0x11]
  %v28 = vld [vmem:[%s0 + $0x60] sm:$0x11]
  %v29 = vld [vmem:[%s0 + $0x68] sm:$0x1]
  %v30 = vld [vmem:[%s1] sm:$0xff]
  %v31 = vld [vmem:[%s1 + $0x8] sm:$0xff]
  %v32 = vld [vmem:[%s1 + $0x10] sm:$0xff]
  %v33 = vld [vmem:[%s1 + $0x18] sm:$0xff]
  %v34 = vld [vmem:[%s1 + $0x20] sm:$0xff]
  %v35 = vld [vmem:[%s1 + $0x28] sm:$0xff]
  %v36 = vld [vmem:[%s1 + $0x30] sm:$0xff]
  %v37 = vld [vmem:[%s1 + $0x38] sm:$0xff]
  %v38 = vld [vmem:[%s1 + $0x40] sm:$0xff]
  %v39 = vld [vmem:[%s1 + $0x48] sm:$0xff]
  %v40 = vld [vmem:[%s1 + $0x50] sm:$0xff]
  %v41 = vld [vmem:[%s1 + $0x58] sm:$0xff]
  %v42 = vld [vmem:[%s1 + $0x60] sm:$0xff]
  %v43 = vld [vmem:[%s1 + $0x68] sm:$0xff]
  %v44 = vld [vmem:[%s1 + $0x70] sm:$0xff]
  %v45 = vld [vmem:[%s1 + $0x78] sm:$0xff]
  %v46 = vld [vmem:[%s1 + $0x80] sm:$0xff]
  %v47 = vld [vmem:[%s1 + $0x88] sm:$0xff]
  %v48 = vld [vmem:[%s1 + $0x90] sm:$0xff]
  %v49 = vld [vmem:[%s1 + $0x98] sm:$0xff]
  %v50 = vld [vmem:[%s1 + $0xa0] sm:$0xff]
  %v51 = vld [vmem:[%s1 + $0xa8] sm:$0xff]
  %v52 = vld [vmem:[%s1 + $0xb0] sm:$0xff]
  %v53 = vld [vmem:[%s1 + $0xb8] sm:$0xff]
  %v54 = vld [vmem:[%s1 + $0xc0] sm:$0xff]
  %v55 = vld [vmem:[%s1 + $0xc8] sm:$0xff]
  %v56 = vld [vmem:[%s1 + $0xd0] sm:$0xff]
  %v57 = vld [vmem:[%s1 + $0xd8] sm:$0xff]
  %v58 = vld [vmem:[%s1 + $0xe0] sm:$0xff]
  %v59 = vld [vmem:[%s1 + $0xe8] sm:$0xff]
  %v60 = vld [vmem:[%s1 + $0xf0] sm:$0xff]
  %v61 = vld [vmem:[%s1 + $0xf8] sm:$0xff]
  %v62 = vld [vmem:[%s1 + $0x100] sm:$0xff]
  %v63 = vld [vmem:[%s1 + $0x108] sm:$0xff]
  %v64 = vld [vmem:[%s1 + $0x110] sm:$0xff]
  %v65 = vld [vmem:[%s1 + $0x118] sm:$0xff]
  %v66 = vld [vmem:[%s1 + $0x120] sm:$0xff]
  %v67 = vld [vmem:[%s1 + $0x128] sm:$0xff]
  %v68 = vld [vmem:[%s1 + $0x130] sm:$0xff]
  %v69 = vld [vmem:[%s1 + $0x138] sm:$0xff]
  %v70 = vld [vmem:[%s1 + $0x140] sm:$0xff]
  %v71 = vld [vmem:[%s1 + $0x148] sm:$0xff]
  %v72 = vld [vmem:[%s1 + $0x150] sm:$0xff]
  %v73 = vld [vmem:[%s1 + $0x158] sm:$0xff]
  %v74 = vld [vmem:[%s1 + $0x160] sm:$0xff]
  %v75 = vld [vmem:[%s1 + $0x168] sm:$0xff]
  %v76 = vld [vmem:[%s1 + $0x170] sm:$0xff]
  %v77 = vld [vmem:[%s1 + $0x178] sm:$0xff]
  %v78 = vld [vmem:[%s1 + $0x180] sm:$0xff]
  %v79 = vld [vmem:[%s1 + $0x188] sm:$0xff]
  %v80 = vld [vmem:[%s1 + $0x190] sm:$0xff]
  %v81 = vld [vmem:[%s1 + $0x198] sm:$0xff]
  %v82 = vld [vmem:[%s1 + $0x1a0] sm:$0xff]
  %v83 = vld [vmem:[%s1 + $0x1a8] sm:$0xff]
  %v84 = vld [vmem:[%s1 + $0x1b0] sm:$0xff]
  %v85 = vld [vmem:[%s1 + $0x1b8] sm:$0xff]
  %v86 = vld [vmem:[%s1 + $0x1c0] sm:$0xff]
  %v87 = vld [vmem:[%s1 + $0x1c8] sm:$0xff]
  %v88 = vld [vmem:[%s1 + $0x1d0] sm:$0xff]
  %v89 = vld [vmem:[%s1 + $0x1d8] sm:$0xff]
  %v90 = vld [vmem:[%s1 + $0x1e0] sm:$0xff]
  %v91 = vld [vmem:[%s1 + $0x1e8] sm:$0xff]
  %v92 = vld [vmem:[%s1 + $0x1f0] sm:$0xff]
  %v93 = vld [vmem:[%s1 + $0x1f8] sm:$0xff]
  %v94 = vld [vmem:[%s1 + $0x200] sm:$0xff]
  %v95 = vld [vmem:[%s1 + $0x208] sm:$0xff]
  %v96 = vld [vmem:[%s1 + $0x210] sm:$0xff]
  %v97 = vld [vmem:[%s1 + $0x218] sm:$0xff]
  %v98 = vld [vmem:[%s1 + $0x220] sm:$0xff]
  %v99 = vld [vmem:[%s1 + $0x228] sm:$0xff]
  %v100 = vld [vmem:[%s1 + $0x230] sm:$0xff]
  %v101 = vld [vmem:[%s1 + $0x238] sm:$0xff]
  %v102 = vld [vmem:[%s1 + $0x240] sm:$0xff]
  %v103 = vld [vmem:[%s1 + $0x248] sm:$0xff]
  %v104 = vld [vmem:[%s1 + $0x250] sm:$0xff]
  %v105 = vld [vmem:[%s1 + $0x258] sm:$0xff]
  %v106 = vld [vmem:[%s1 + $0x260] sm:$0xff]
  %v107 = vld [vmem:[%s1 + $0x268] sm:$0xff]
  %v108 = vld [vmem:[%s1 + $0x270] sm:$0xff]
  %v109 = vld [vmem:[%s1 + $0x278] sm:$0xff]
  %v110 = vld [vmem:[%s1 + $0x280] sm:$0xff]
  %v111 = vld [vmem:[%s1 + $0x288] sm:$0xff]
  %v112 = vld [vmem:[%s1 + $0x290] sm:$0xff]
  %v113 = vld [vmem:[%s1 + $0x298] sm:$0xff]
  %v114 = vld [vmem:[%s1 + $0x2a0] sm:$0xff]
  %v115 = vld [vmem:[%s1 + $0x2a8] sm:$0xff]
  %v116 = vld [vmem:[%s1 + $0x2b0] sm:$0xff]
  %v117 = vld [vmem:[%s1 + $0x2b8] sm:$0xff]
  %v118 = vld [vmem:[%s1 + $0x2c0] sm:$0xff]
  %v119 = vld [vmem:[%s1 + $0x2c8] sm:$0xff]
  %v120 = vld [vmem:[%s1 + $0x2d0] sm:$0xff]
  %v121 = vld [vmem:[%s1 + $0x2d8] sm:$0xff]
  %v122 = vld [vmem:[%s1 + $0x2e0] sm:$0xff]
  %v123 = vld [vmem:[%s1 + $0x2e8] sm:$0xff]
  %v124 = vld [vmem:[%s1 + $0x2f0] sm:$0xff]
  %v125 = vld [vmem:[%s1 + $0x2f8] sm:$0xff]
  %v126 = vld [vmem:[%s1 + $0x300] sm:$0xff]
  %v127 = vld [vmem:[%s1 + $0x308] sm:$0xff]
  %v128 = vld [vmem:[%s1 + $0x310] sm:$0xff]
  %v129 = vld [vmem:[%s1 + $0x318] sm:$0xff]
  %v130 = vld [vmem:[%s1 + $0x320] sm:$0xff]
  %v131 = vld [vmem:[%s1 + $0x328] sm:$0xff]
  %v132 = vld [vmem:[%s1 + $0x330] sm:$0xff]
  %v133 = vld [vmem:[%s1 + $0x338] sm:$0xff]
  %v134 = vld [vmem:[%s1 + $0x340] sm:$0xff]
  %v135 = vld [vmem:[%s1 + $0x348] sm:$0xff]
  %v136 = vld [vmem:[%s1 + $0x350] sm:$0xff]
  %v137 = vld [vmem:[%s1 + $0x358] sm:$0xff]
  %v138 = vld [vmem:[%s1 + $0x360] sm:$0xff]
  %v139 = vld [vmem:[%s1 + $0x368] sm:$0xff]
  %v140 = vld [vmem:[%s1 + $0x370] sm:$0xff]
  %v141 = vld [vmem:[%s1 + $0x378] sm:$0xff]
  %v142 = vld [vmem:[%s1 + $0x380] sm:$0xff]
  %v143 = vld [vmem:[%s1 + $0x388] sm:$0xff]
  %v144 = vld [vmem:[%s1 + $0x390] sm:$0xff]
  %v145 = vld [vmem:[%s1 + $0x398] sm:$0xff]
  %v146 = vld [vmem:[%s1 + $0x3a0] sm:$0xff]
  %v147 = vld [vmem:[%s1 + $0x3a8] sm:$0xff]
  %v148 = vld [vmem:[%s1 + $0x3b0] sm:$0xff]
  %v149 = vld [vmem:[%s1 + $0x3b8] sm:$0xff]
  %v150 = vld [vmem:[%s1 + $0x3c0] sm:$0xff]
  %v151 = vld [vmem:[%s1 + $0x3c8] sm:$0xff]
  %v152 = vld [vmem:[%s1 + $0x3d0] sm:$0xff]
  %v153 = vld [vmem:[%s1 + $0x3d8] sm:$0xff]
  %v154 = vld [vmem:[%s1 + $0x3e0] sm:$0xff]
  %v155 = vld [vmem:[%s1 + $0x3e8] sm:$0xff]
  %v156 = vld [vmem:[%s1 + $0x3f0] sm:$0xff]
  %v157 = vld [vmem:[%s1 + $0x3f8] sm:$0xff]
  %v158 = vld [vmem:[%s1 + $0x400] sm:$0xff]
  %v159 = vld [vmem:[%s1 + $0x408] sm:$0xff]
  %v160 = vld [vmem:[%s1 + $0x410] sm:$0xff]
  %v161 = vld [vmem:[%s1 + $0x418] sm:$0xff]
  %v162 = vld [vmem:[%s1 + $0x420] sm:$0xff]
  %v163 = vld [vmem:[%s1 + $0x428] sm:$0xff]
  %v164 = vld [vmem:[%s1 + $0x430] sm:$0xff]
  %v165 = vld [vmem:[%s1 + $0x438] sm:$0xff]
  %v166 = vld [vmem:[%s1 + $0x440] sm:$0xff]
  %v167 = vld [vmem:[%s1 + $0x448] sm:$0xff]
  %v168 = vld [vmem:[%s1 + $0x450] sm:$0xff]
  %v169 = vld [vmem:[%s1 + $0x458] sm:$0xff]
  %v170 = vld [vmem:[%s1 + $0x460] sm:$0xff]
  %v171 = vld [vmem:[%s1 + $0x468] sm:$0xff]
  %v172 = vld [vmem:[%s1 + $0x470] sm:$0xff]
  %v173 = vld [vmem:[%s1 + $0x478] sm:$0xff]
  %v174 = vld [vmem:[%s2] sm:$0x3]
  %v176 = vlaneseq
  %v177 = vshrl.u32 %v176, 7
  %v178 = vsub.s32 0, %v177
  %v179 = vrot.slane %v174, %v178
  %v180 = vlaneseq
  %v181 = vshrl.u32 %v180, 7
  %v182 = vsub.s32 1, %v181
  %v183 = vrot.slane %v174, %v182
  %v201 = vunpack.c.l.b16 %v15
  %v202 = vunpack.c.h.b16 %v15
  %v203 = vunpack.c.l.b16 %v16
  %v204 = vunpack.c.h.b16 %v16
  %v205 = vunpack.c.l.b16 %v17
  %v206 = vunpack.c.h.b16 %v17
  %v207 = vunpack.c.l.b16 %v18
  %v208 = vunpack.c.h.b16 %v18
  %v209 = vunpack.c.l.b16 %v19
  %v210 = vunpack.c.l.b16 %v20
  %v211 = vunpack.c.h.b16 %v20
  %v212 = vunpack.c.l.b16 %v21
  %v213 = vunpack.c.h.b16 %v21
  %v214 = vunpack.c.l.b16 %v22
  %v215 = vunpack.c.h.b16 %v22
  %v216 = vunpack.c.l.b16 %v23
  %v217 = vunpack.c.h.b16 %v23
  %v218 = vunpack.c.l.b16 %v24
  %v219 = vunpack.c.l.b16 %v25
  %v220 = vunpack.c.h.b16 %v25
  %v221 = vunpack.c.l.b16 %v26
  %v222 = vunpack.c.h.b16 %v26
  %v223 = vunpack.c.l.b16 %v27
  %v224 = vunpack.c.h.b16 %v27
  %v225 = vunpack.c.l.b16 %v28
  %v226 = vunpack.c.h.b16 %v28
  %v227 = vunpack.c.l.b16 %v29
  %v228 = vpack.c.b16 %v210, %v201
  %v229 = vpack.c.b16 %v211, %v202
  %v230 = vpack.c.b16 %v212, %v203
  %v231 = vpack.c.b16 %v213, %v204
  %v232 = vpack.c.b16 %v214, %v205
  %v233 = vpack.c.b16 %v215, %v206
  %v234 = vpack.c.b16 %v216, %v207
  %v235 = vpack.c.b16 %v217, %v208
  %v236 = vpack.c.b16 %v218, %v209
  %v237 = vpack.c.b16 %v219, %v219
  %v238 = vpack.c.b16 %v220, %v220
  %v239 = vpack.c.b16 %v221, %v221
  %v240 = vpack.c.b16 %v222, %v222
  %v241 = vpack.c.b16 %v223, %v223
  %v242 = vpack.c.b16 %v224, %v224
  %v243 = vpack.c.b16 %v225, %v225
  %v244 = vpack.c.b16 %v226, %v226
  %v245 = vpack.c.b16 %v227, %v227
  %v408 = vunpack.c.l.b16 %v30
  %v409 = vunpack.c.h.b16 %v30
  %v410 = vunpack.c.l.b16 %v31
  %v411 = vunpack.c.h.b16 %v31
  %v412 = vunpack.c.l.b16 %v32
  %v413 = vunpack.c.h.b16 %v32
  %v414 = vunpack.c.l.b16 %v33
  %v415 = vunpack.c.h.b16 %v33
  %v416 = vunpack.c.l.b16 %v34
  %v417 = vunpack.c.h.b16 %v34
  %v418 = vunpack.c.l.b16 %v35
  %v419 = vunpack.c.h.b16 %v35
  %v420 = vunpack.c.l.b16 %v36
  %v421 = vunpack.c.h.b16 %v36
  %v422 = vunpack.c.l.b16 %v37
  %v423 = vunpack.c.h.b16 %v37
  %v424 = vunpack.c.l.b16 %v38
  %v425 = vunpack.c.h.b16 %v38
  %v426 = vunpack.c.l.b16 %v39
  %v427 = vunpack.c.h.b16 %v39
  %v428 = vunpack.c.l.b16 %v40
  %v429 = vunpack.c.h.b16 %v40
  %v430 = vunpack.c.l.b16 %v41
  %v431 = vunpack.c.h.b16 %v41
  %v432 = vunpack.c.l.b16 %v42
  %v433 = vunpack.c.h.b16 %v42
  %v434 = vunpack.c.l.b16 %v43
  %v435 = vunpack.c.h.b16 %v43
  %v436 = vunpack.c.l.b16 %v44
  %v437 = vunpack.c.h.b16 %v44
  %v438 = vunpack.c.l.b16 %v45
  %v439 = vunpack.c.h.b16 %v45
  %v440 = vunpack.c.l.b16 %v46
  %v441 = vunpack.c.h.b16 %v46
  %v442 = vunpack.c.l.b16 %v47
  %v443 = vunpack.c.h.b16 %v47
  %v444 = vunpack.c.l.b16 %v48
  %v445 = vunpack.c.h.b16 %v48
  %v446 = vunpack.c.l.b16 %v49
  %v447 = vunpack.c.h.b16 %v49
  %v448 = vunpack.c.l.b16 %v50
  %v449 = vunpack.c.h.b16 %v50
  %v450 = vunpack.c.l.b16 %v51
  %v451 = vunpack.c.h.b16 %v51
  %v452 = vunpack.c.l.b16 %v52
  %v453 = vunpack.c.h.b16 %v52
  %v454 = vunpack.c.l.b16 %v53
  %v455 = vunpack.c.h.b16 %v53
  %v456 = vunpack.c.l.b16 %v54
  %v457 = vunpack.c.h.b16 %v54
  %v458 = vunpack.c.l.b16 %v55
  %v459 = vunpack.c.h.b16 %v55
  %v460 = vunpack.c.l.b16 %v56
  %v461 = vunpack.c.h.b16 %v56
  %v462 = vunpack.c.l.b16 %v57
  %v463 = vunpack.c.h.b16 %v57
  %v464 = vunpack.c.l.b16 %v58
  %v465 = vunpack.c.h.b16 %v58
  %v466 = vunpack.c.l.b16 %v59
  %v467 = vunpack.c.h.b16 %v59
  %v468 = vunpack.c.l.b16 %v60
  %v469 = vunpack.c.h.b16 %v60
  %v470 = vunpack.c.l.b16 %v61
  %v471 = vunpack.c.h.b16 %v61
  %v472 = vunpack.c.l.b16 %v62
  %v473 = vunpack.c.h.b16 %v62
  %v474 = vunpack.c.l.b16 %v63
  %v475 = vunpack.c.h.b16 %v63
  %v476 = vunpack.c.l.b16 %v64
  %v477 = vunpack.c.h.b16 %v64
  %v478 = vunpack.c.l.b16 %v65
  %v479 = vunpack.c.h.b16 %v65
  %v480 = vunpack.c.l.b16 %v66
  %v481 = vunpack.c.h.b16 %v66
  %v482 = vunpack.c.l.b16 %v67
  %v483 = vunpack.c.h.b16 %v67
  %v484 = vunpack.c.l.b16 %v68
  %v485 = vunpack.c.h.b16 %v68
  %v486 = vunpack.c.l.b16 %v69
  %v487 = vunpack.c.h.b16 %v69
  %v488 = vunpack.c.l.b16 %v70
  %v489 = vunpack.c.h.b16 %v70
  %v490 = vunpack.c.l.b16 %v71
  %v491 = vunpack.c.h.b16 %v71
  %v492 = vunpack.c.l.b16 %v72
  %v493 = vunpack.c.h.b16 %v72
  %v494 = vunpack.c.l.b16 %v73
  %v495 = vunpack.c.h.b16 %v73
  %v496 = vunpack.c.l.b16 %v74
  %v497 = vunpack.c.h.b16 %v74
  %v498 = vunpack.c.l.b16 %v75
  %v499 = vunpack.c.h.b16 %v75
  %v500 = vunpack.c.l.b16 %v76
  %v501 = vunpack.c.h.b16 %v76
  %v502 = vunpack.c.l.b16 %v77
  %v503 = vunpack.c.h.b16 %v77
  %v504 = vunpack.c.l.b16 %v78
  %v505 = vunpack.c.h.b16 %v78
  %v506 = vunpack.c.l.b16 %v79
  %v507 = vunpack.c.h.b16 %v79
  %v508 = vunpack.c.l.b16 %v80
  %v509 = vunpack.c.h.b16 %v80
  %v510 = vunpack.c.l.b16 %v81
  %v511 = vunpack.c.h.b16 %v81
  %v512 = vunpack.c.l.b16 %v82
  %v513 = vunpack.c.h.b16 %v82
  %v514 = vunpack.c.l.b16 %v83
  %v515 = vunpack.c.h.b16 %v83
  %v516 = vunpack.c.l.b16 %v84
  %v517 = vunpack.c.h.b16 %v84
  %v518 = vunpack.c.l.b16 %v85
  %v519 = vunpack.c.h.b16 %v85
  %v520 = vunpack.c.l.b16 %v86
  %v521 = vunpack.c.h.b16 %v86
  %v522 = vunpack.c.l.b16 %v87
  %v523 = vunpack.c.h.b16 %v87
  %v524 = vunpack.c.l.b16 %v88
  %v525 = vunpack.c.h.b16 %v88
  %v526 = vunpack.c.l.b16 %v89
  %v527 = vunpack.c.h.b16 %v89
  %v528 = vunpack.c.l.b16 %v90
  %v529 = vunpack.c.h.b16 %v90
  %v530 = vunpack.c.l.b16 %v91
  %v531 = vunpack.c.h.b16 %v91
  %v532 = vunpack.c.l.b16 %v92
  %v533 = vunpack.c.h.b16 %v92
  %v534 = vunpack.c.l.b16 %v93
  %v535 = vunpack.c.h.b16 %v93
  %v536 = vunpack.c.l.b16 %v94
  %v537 = vunpack.c.h.b16 %v94
  %v538 = vunpack.c.l.b16 %v95
  %v539 = vunpack.c.h.b16 %v95
  %v540 = vunpack.c.l.b16 %v96
  %v541 = vunpack.c.h.b16 %v96
  %v542 = vunpack.c.l.b16 %v97
  %v543 = vunpack.c.h.b16 %v97
  %v544 = vunpack.c.l.b16 %v98
  %v545 = vunpack.c.h.b16 %v98
  %v546 = vunpack.c.l.b16 %v99
  %v547 = vunpack.c.h.b16 %v99
  %v548 = vunpack.c.l.b16 %v100
  %v549 = vunpack.c.h.b16 %v100
  %v550 = vunpack.c.l.b16 %v101
  %v551 = vunpack.c.h.b16 %v101
  %v552 = vunpack.c.l.b16 %v102
  %v553 = vunpack.c.h.b16 %v102
  %v554 = vunpack.c.l.b16 %v103
  %v555 = vunpack.c.h.b16 %v103
  %v556 = vunpack.c.l.b16 %v104
  %v557 = vunpack.c.h.b16 %v104
  %v558 = vunpack.c.l.b16 %v105
  %v559 = vunpack.c.h.b16 %v105
  %v560 = vunpack.c.l.b16 %v106
  %v561 = vunpack.c.h.b16 %v106
  %v562 = vunpack.c.l.b16 %v107
  %v563 = vunpack.c.h.b16 %v107
  %v564 = vunpack.c.l.b16 %v108
  %v565 = vunpack.c.h.b16 %v108
  %v566 = vunpack.c.l.b16 %v109
  %v567 = vunpack.c.h.b16 %v109
  %v568 = vunpack.c.l.b16 %v110
  %v569 = vunpack.c.h.b16 %v110
  %v570 = vunpack.c.l.b16 %v111
  %v571 = vunpack.c.h.b16 %v111
  %v572 = vunpack.c.l.b16 %v112
  %v573 = vunpack.c.h.b16 %v112
  %v574 = vunpack.c.l.b16 %v113
  %v575 = vunpack.c.h.b16 %v113
  %v576 = vunpack.c.l.b16 %v114
  %v577 = vunpack.c.h.b16 %v114
  %v578 = vunpack.c.l.b16 %v115
  %v579 = vunpack.c.h.b16 %v115
  %v580 = vunpack.c.l.b16 %v116
  %v581 = vunpack.c.h.b16 %v116
  %v582 = vunpack.c.l.b16 %v117
  %v583 = vunpack.c.h.b16 %v117
  %v584 = vunpack.c.l.b16 %v118
  %v585 = vunpack.c.h.b16 %v118
  %v586 = vunpack.c.l.b16 %v119
  %v587 = vunpack.c.h.b16 %v119
  %v588 = vunpack.c.l.b16 %v120
  %v589 = vunpack.c.h.b16 %v120
  %v590 = vunpack.c.l.b16 %v121
  %v591 = vunpack.c.h.b16 %v121
  %v592 = vunpack.c.l.b16 %v122
  %v593 = vunpack.c.h.b16 %v122
  %v594 = vunpack.c.l.b16 %v123
  %v595 = vunpack.c.h.b16 %v123
  %v596 = vunpack.c.l.b16 %v124
  %v597 = vunpack.c.h.b16 %v124
  %v598 = vunpack.c.l.b16 %v125
  %v599 = vunpack.c.h.b16 %v125
  %v600 = vunpack.c.l.b16 %v126
  %v601 = vunpack.c.h.b16 %v126
  %v602 = vunpack.c.l.b16 %v127
  %v603 = vunpack.c.h.b16 %v127
  %v604 = vunpack.c.l.b16 %v128
  %v605 = vunpack.c.h.b16 %v128
  %v606 = vunpack.c.l.b16 %v129
  %v607 = vunpack.c.h.b16 %v129
  %v608 = vunpack.c.l.b16 %v130
  %v609 = vunpack.c.h.b16 %v130
  %v610 = vunpack.c.l.b16 %v131
  %v611 = vunpack.c.h.b16 %v131
  %v612 = vunpack.c.l.b16 %v132
  %v613 = vunpack.c.h.b16 %v132
  %v614 = vunpack.c.l.b16 %v133
  %v615 = vunpack.c.h.b16 %v133
  %v616 = vunpack.c.l.b16 %v134
  %v617 = vunpack.c.h.b16 %v134
  %v618 = vunpack.c.l.b16 %v135
  %v619 = vunpack.c.h.b16 %v135
  %v620 = vunpack.c.l.b16 %v136
  %v621 = vunpack.c.h.b16 %v136
  %v622 = vunpack.c.l.b16 %v137
  %v623 = vunpack.c.h.b16 %v137
  %v624 = vunpack.c.l.b16 %v138
  %v625 = vunpack.c.h.b16 %v138
  %v626 = vunpack.c.l.b16 %v139
  %v627 = vunpack.c.h.b16 %v139
  %v628 = vunpack.c.l.b16 %v140
  %v629 = vunpack.c.h.b16 %v140
  %v630 = vunpack.c.l.b16 %v141
  %v631 = vunpack.c.h.b16 %v141
  %v632 = vunpack.c.l.b16 %v142
  %v633 = vunpack.c.h.b16 %v142
  %v634 = vunpack.c.l.b16 %v143
  %v635 = vunpack.c.h.b16 %v143
  %v636 = vunpack.c.l.b16 %v144
  %v637 = vunpack.c.h.b16 %v144
  %v638 = vunpack.c.l.b16 %v145
  %v639 = vunpack.c.h.b16 %v145
  %v640 = vunpack.c.l.b16 %v146
  %v641 = vunpack.c.h.b16 %v146
  %v642 = vunpack.c.l.b16 %v147
  %v643 = vunpack.c.h.b16 %v147
  %v644 = vunpack.c.l.b16 %v148
  %v645 = vunpack.c.h.b16 %v148
  %v646 = vunpack.c.l.b16 %v149
  %v647 = vunpack.c.h.b16 %v149
  %v648 = vunpack.c.l.b16 %v150
  %v649 = vunpack.c.h.b16 %v150
  %v650 = vunpack.c.l.b16 %v151
  %v651 = vunpack.c.h.b16 %v151
  %v652 = vunpack.c.l.b16 %v152
  %v653 = vunpack.c.h.b16 %v152
  %v654 = vunpack.c.l.b16 %v153
  %v655 = vunpack.c.h.b16 %v153
  %v656 = vunpack.c.l.b16 %v154
  %v657 = vunpack.c.h.b16 %v154
  %v658 = vunpack.c.l.b16 %v155
  %v659 = vunpack.c.h.b16 %v155
  %v660 = vunpack.c.l.b16 %v156
  %v661 = vunpack.c.h.b16 %v156
  %v662 = vunpack.c.l.b16 %v157
  %v663 = vunpack.c.h.b16 %v157
  %v664 = vunpack.c.l.b16 %v158
  %v665 = vunpack.c.h.b16 %v158
  %v666 = vunpack.c.l.b16 %v159
  %v667 = vunpack.c.h.b16 %v159
  %v668 = vunpack.c.l.b16 %v160
  %v669 = vunpack.c.h.b16 %v160
  %v670 = vunpack.c.l.b16 %v161
  %v671 = vunpack.c.h.b16 %v161
  %v672 = vunpack.c.l.b16 %v162
  %v673 = vunpack.c.h.b16 %v162
  %v674 = vunpack.c.l.b16 %v163
  %v675 = vunpack.c.h.b16 %v163
  %v676 = vunpack.c.l.b16 %v164
  %v677 = vunpack.c.h.b16 %v164
  %v678 = vunpack.c.l.b16 %v165
  %v679 = vunpack.c.h.b16 %v165
  %v680 = vunpack.c.l.b16 %v166
  %v681 = vunpack.c.h.b16 %v166
  %v682 = vunpack.c.l.b16 %v167
  %v683 = vunpack.c.h.b16 %v167
  %v684 = vunpack.c.l.b16 %v168
  %v685 = vunpack.c.h.b16 %v168
  %v686 = vunpack.c.l.b16 %v169
  %v687 = vunpack.c.h.b16 %v169
  %v688 = vunpack.c.l.b16 %v170
  %v689 = vunpack.c.h.b16 %v170
  %v690 = vunpack.c.l.b16 %v171
  %v691 = vunpack.c.h.b16 %v171
  %v692 = vunpack.c.l.b16 %v172
  %v693 = vunpack.c.h.b16 %v172
  %v694 = vunpack.c.l.b16 %v173
  %v695 = vunpack.c.h.b16 %v173
  %v696 = vpack.c.b16 %v410, %v408
  %v697 = vpack.c.b16 %v411, %v409
  %v698 = vpack.c.b16 %v414, %v412
  %v699 = vpack.c.b16 %v415, %v413
  %v700 = vpack.c.b16 %v418, %v416
  %v701 = vpack.c.b16 %v419, %v417
  %v702 = vpack.c.b16 %v422, %v420
  %v703 = vpack.c.b16 %v423, %v421
  %v704 = vpack.c.b16 %v426, %v424
  %v705 = vpack.c.b16 %v427, %v425
  %v706 = vpack.c.b16 %v430, %v428
  %v707 = vpack.c.b16 %v431, %v429
  %v708 = vpack.c.b16 %v434, %v432
  %v709 = vpack.c.b16 %v435, %v433
  %v710 = vpack.c.b16 %v438, %v436
  %v711 = vpack.c.b16 %v439, %v437
  %v712 = vpack.c.b16 %v442, %v440
  %v713 = vpack.c.b16 %v443, %v441
  %v714 = vpack.c.b16 %v446, %v444
  %v715 = vpack.c.b16 %v447, %v445
  %v716 = vpack.c.b16 %v450, %v448
  %v717 = vpack.c.b16 %v451, %v449
  %v718 = vpack.c.b16 %v454, %v452
  %v719 = vpack.c.b16 %v455, %v453
  %v720 = vpack.c.b16 %v458, %v456
  %v721 = vpack.c.b16 %v459, %v457
  %v722 = vpack.c.b16 %v462, %v460
  %v723 = vpack.c.b16 %v463, %v461
  %v724 = vpack.c.b16 %v466, %v464
  %v725 = vpack.c.b16 %v467, %v465
  %v726 = vpack.c.b16 %v470, %v468
  %v727 = vpack.c.b16 %v471, %v469
  %v728 = vpack.c.b16 %v474, %v472
  %v729 = vpack.c.b16 %v475, %v473
  %v730 = vpack.c.b16 %v478, %v476
  %v731 = vpack.c.b16 %v479, %v477
  %v732 = vpack.c.b16 %v482, %v480
  %v733 = vpack.c.b16 %v483, %v481
  %v734 = vpack.c.b16 %v486, %v484
  %v735 = vpack.c.b16 %v487, %v485
  %v736 = vpack.c.b16 %v490, %v488
  %v737 = vpack.c.b16 %v491, %v489
  %v738 = vpack.c.b16 %v494, %v492
  %v739 = vpack.c.b16 %v495, %v493
  %v740 = vpack.c.b16 %v498, %v496
  %v741 = vpack.c.b16 %v499, %v497
  %v742 = vpack.c.b16 %v502, %v500
  %v743 = vpack.c.b16 %v503, %v501
  %v744 = vpack.c.b16 %v506, %v504
  %v745 = vpack.c.b16 %v507, %v505
  %v746 = vpack.c.b16 %v510, %v508
  %v747 = vpack.c.b16 %v511, %v509
  %v748 = vpack.c.b16 %v514, %v512
  %v749 = vpack.c.b16 %v515, %v513
  %v750 = vpack.c.b16 %v518, %v516
  %v751 = vpack.c.b16 %v519, %v517
  %v752 = vpack.c.b16 %v522, %v520
  %v753 = vpack.c.b16 %v523, %v521
  %v754 = vpack.c.b16 %v526, %v524
  %v755 = vpack.c.b16 %v527, %v525
  %v756 = vpack.c.b16 %v530, %v528
  %v757 = vpack.c.b16 %v531, %v529
  %v758 = vpack.c.b16 %v534, %v532
  %v759 = vpack.c.b16 %v535, %v533
  %v760 = vpack.c.b16 %v538, %v536
  %v761 = vpack.c.b16 %v539, %v537
  %v762 = vpack.c.b16 %v542, %v540
  %v763 = vpack.c.b16 %v543, %v541
  %v764 = vpack.c.b16 %v546, %v544
  %v765 = vpack.c.b16 %v547, %v545
  %v766 = vpack.c.b16 %v550, %v548
  %v767 = vpack.c.b16 %v551, %v549
  %v768 = vpack.c.b16 %v554, %v552
  %v769 = vpack.c.b16 %v555, %v553
  %v770 = vpack.c.b16 %v558, %v556
  %v771 = vpack.c.b16 %v559, %v557
  %v772 = vpack.c.b16 %v562, %v560
  %v773 = vpack.c.b16 %v563, %v561
  %v774 = vpack.c.b16 %v566, %v564
  %v775 = vpack.c.b16 %v567, %v565
  %v776 = vpack.c.b16 %v570, %v568
  %v777 = vpack.c.b16 %v571, %v569
  %v778 = vpack.c.b16 %v574, %v572
  %v779 = vpack.c.b16 %v575, %v573
  %v780 = vpack.c.b16 %v578, %v576
  %v781 = vpack.c.b16 %v579, %v577
  %v782 = vpack.c.b16 %v582, %v580
  %v783 = vpack.c.b16 %v583, %v581
  %v784 = vpack.c.b16 %v586, %v584
  %v785 = vpack.c.b16 %v587, %v585
  %v786 = vpack.c.b16 %v590, %v588
  %v787 = vpack.c.b16 %v591, %v589
  %v788 = vpack.c.b16 %v594, %v592
  %v789 = vpack.c.b16 %v595, %v593
  %v790 = vpack.c.b16 %v598, %v596
  %v791 = vpack.c.b16 %v599, %v597
  %v792 = vpack.c.b16 %v602, %v600
  %v793 = vpack.c.b16 %v603, %v601
  %v794 = vpack.c.b16 %v606, %v604
  %v795 = vpack.c.b16 %v607, %v605
  %v796 = vpack.c.b16 %v610, %v608
  %v797 = vpack.c.b16 %v611, %v609
  %v798 = vpack.c.b16 %v614, %v612
  %v799 = vpack.c.b16 %v615, %v613
  %v800 = vpack.c.b16 %v618, %v616
  %v801 = vpack.c.b16 %v619, %v617
  %v802 = vpack.c.b16 %v622, %v620
  %v803 = vpack.c.b16 %v623, %v621
  %v804 = vpack.c.b16 %v626, %v624
  %v805 = vpack.c.b16 %v627, %v625
  %v806 = vpack.c.b16 %v630, %v628
  %v807 = vpack.c.b16 %v631, %v629
  %v808 = vpack.c.b16 %v634, %v632
  %v809 = vpack.c.b16 %v635, %v633
  %v810 = vpack.c.b16 %v638, %v636
  %v811 = vpack.c.b16 %v639, %v637
  %v812 = vpack.c.b16 %v642, %v640
  %v813 = vpack.c.b16 %v643, %v641
  %v814 = vpack.c.b16 %v646, %v644
  %v815 = vpack.c.b16 %v647, %v645
  %v816 = vpack.c.b16 %v650, %v648
  %v817 = vpack.c.b16 %v651, %v649
  %v818 = vpack.c.b16 %v654, %v652
  %v819 = vpack.c.b16 %v655, %v653
  %v820 = vpack.c.b16 %v658, %v656
  %v821 = vpack.c.b16 %v659, %v657
  %v822 = vpack.c.b16 %v662, %v660
  %v823 = vpack.c.b16 %v663, %v661
  %v824 = vpack.c.b16 %v666, %v664
  %v825 = vpack.c.b16 %v667, %v665
  %v826 = vpack.c.b16 %v670, %v668
  %v827 = vpack.c.b16 %v671, %v669
  %v828 = vpack.c.b16 %v674, %v672
  %v829 = vpack.c.b16 %v675, %v673
  %v830 = vpack.c.b16 %v678, %v676
  %v831 = vpack.c.b16 %v679, %v677
  %v832 = vpack.c.b16 %v682, %v680
  %v833 = vpack.c.b16 %v683, %v681
  %v834 = vpack.c.b16 %v686, %v684
  %v835 = vpack.c.b16 %v687, %v685
  %v836 = vpack.c.b16 %v690, %v688
  %v837 = vpack.c.b16 %v691, %v689
  %v838 = vpack.c.b16 %v694, %v692
  %v839 = vpack.c.b16 %v695, %v693
  %984 = vmatprep.subr.bf16.mxu0 %v711
  %985 = vmatpush1.bf16.msra.mxu0 %v710
  %986 = vmatprep.subr.bf16.mxu0 %v709
  %987 = vmatpush1.bf16.msra.mxu0 %v708
  %988 = vmatprep.subr.bf16.mxu0 %v707
  %989 = vmatpush1.bf16.msra.mxu0 %v706
  %990 = vmatprep.subr.bf16.mxu0 %v705
  %991 = vmatpush1.bf16.msra.mxu0 %v704
  %992 = vmatprep.subr.bf16.mxu0 %v703
  %993 = vmatpush1.bf16.msra.mxu0 %v702
  %994 = vmatprep.subr.bf16.mxu0 %v701
  %995 = vmatpush1.bf16.msra.mxu0 %v700
  %996 = vmatprep.subr.bf16.mxu0 %v699
  %997 = vmatpush1.bf16.msra.mxu0 %v698
  %998 = vmatprep.subr.bf16.mxu0 %v697
  %999 = vmatpush1.bf16.msra.mxu0 %v696
  %1000 = vmatprep.subr.bf16.mxu0 %v727
  %1001 = vmatpush2.bf16.msra.mxu0 %v726
  %1002 = vmatprep.subr.bf16.mxu0 %v725
  %1003 = vmatpush2.bf16.msra.mxu0 %v724
  %1004 = vmatprep.subr.bf16.mxu0 %v723
  %1005 = vmatpush2.bf16.msra.mxu0 %v722
  %1006 = vmatprep.subr.bf16.mxu0 %v721
  %1007 = vmatpush2.bf16.msra.mxu0 %v720
  %1008 = vmatprep.subr.bf16.mxu0 %v719
  %1009 = vmatpush2.bf16.msra.mxu0 %v718
  %1010 = vmatprep.subr.bf16.mxu0 %v717
  %1011 = vmatpush2.bf16.msra.mxu0 %v716
  %1012 = vmatprep.subr.bf16.mxu0 %v715
  %1013 = vmatpush2.bf16.msra.mxu0 %v714
  %1014 = vmatprep.subr.bf16.mxu0 %v713
  %1015 = vmatpush2.bf16.msra.mxu0 %v712
  %1016 = vmatprep.mubr.bf16.mxu0 %v229
  %1017 = vmatmul.mubr.bf16.gmra.mxu0 %v228
  %v1018 = vpop.f32.mrf.mxu0
  %v1019 = vadd.f32 %v179, %v1018
  %v1020 = vpop.f32.mrf.mxu0
  %v1021 = vadd.f32 %v183, %v1020
  %v1022 = vpop.f32.mrf.mxu0
  %v1023 = vadd.f32 %v179, %v1022
  %v1024 = vpop.f32.mrf.mxu0
  %v1025 = vadd.f32 %v183, %v1024
  %1026 = vmatprep.mubr.bf16.mxu0 %v238
  %1027 = vmatmul.mubr.bf16.gmra.mxu0 %v237
  %v1028 = vpop.f32.mrf.mxu0
  %v1029 = vadd.f32 %v179, %v1028
  %v1030 = vpop.f32.mrf.mxu0
  %v1031 = vadd.f32 %v183, %v1030
  %v1032 = vpop.f32.mrf.mxu0
  %v1033 = vpop.f32.mrf.mxu0
  %1034 = vdwg.mxu0
  %1035 = vmatprep.subr.bf16.mxu0 %v743
  %1036 = vmatpush1.bf16.msra.mxu0 %v742
  %1037 = vmatprep.subr.bf16.mxu0 %v741
  %1038 = vmatpush1.bf16.msra.mxu0 %v740
  %1039 = vmatprep.subr.bf16.mxu0 %v739
  %1040 = vmatpush1.bf16.msra.mxu0 %v738
  %1041 = vmatprep.subr.bf16.mxu0 %v737
  %1042 = vmatpush1.bf16.msra.mxu0 %v736
  %1043 = vmatprep.subr.bf16.mxu0 %v735
  %1044 = vmatpush1.bf16.msra.mxu0 %v734
  %1045 = vmatprep.subr.bf16.mxu0 %v733
  %1046 = vmatpush1.bf16.msra.mxu0 %v732
  %1047 = vmatprep.subr.bf16.mxu0 %v731
  %1048 = vmatpush1.bf16.msra.mxu0 %v730
  %1049 = vmatprep.subr.bf16.mxu0 %v729
  %1050 = vmatpush1.bf16.msra.mxu0 %v728
  %1051 = vmatprep.subr.bf16.mxu0 %v759
  %1052 = vmatpush2.bf16.msra.mxu0 %v758
  %1053 = vmatprep.subr.bf16.mxu0 %v757
  %1054 = vmatpush2.bf16.msra.mxu0 %v756
  %1055 = vmatprep.subr.bf16.mxu0 %v755
  %1056 = vmatpush2.bf16.msra.mxu0 %v754
  %1057 = vmatprep.subr.bf16.mxu0 %v753
  %1058 = vmatpush2.bf16.msra.mxu0 %v752
  %1059 = vmatprep.subr.bf16.mxu0 %v751
  %1060 = vmatpush2.bf16.msra.mxu0 %v750
  %1061 = vmatprep.subr.bf16.mxu0 %v749
  %1062 = vmatpush2.bf16.msra.mxu0 %v748
  %1063 = vmatprep.subr.bf16.mxu0 %v747
  %1064 = vmatpush2.bf16.msra.mxu0 %v746
  %1065 = vmatprep.subr.bf16.mxu0 %v745
  %1066 = vmatpush2.bf16.msra.mxu0 %v744
  %1067 = vmatprep.mubr.bf16.mxu0 %v231
  %1068 = vmatmul.mubr.bf16.gmra.mxu0 %v230
  %v1069 = vpop.f32.mrf.mxu0
  %v1070 = vadd.f32 %v1019, %v1069
  %v1071 = vpop.f32.mrf.mxu0
  %v1072 = vadd.f32 %v1021, %v1071
  %v1073 = vpop.f32.mrf.mxu0
  %v1074 = vadd.f32 %v1023, %v1073
  %v1075 = vpop.f32.mrf.mxu0
  %v1076 = vadd.f32 %v1025, %v1075
  %1077 = vmatprep.mubr.bf16.mxu0 %v240
  %1078 = vmatmul.mubr.bf16.gmra.mxu0 %v239
  %v1079 = vpop.f32.mrf.mxu0
  %v1080 = vadd.f32 %v1029, %v1079
  %v1081 = vpop.f32.mrf.mxu0
  %v1082 = vadd.f32 %v1031, %v1081
  %v1083 = vpop.f32.mrf.mxu0
  %v1084 = vpop.f32.mrf.mxu0
  %1085 = vdwg.mxu0
  %1086 = vmatprep.subr.bf16.mxu0 %v775
  %1087 = vmatpush1.bf16.msra.mxu0 %v774
  %1088 = vmatprep.subr.bf16.mxu0 %v773
  %1089 = vmatpush1.bf16.msra.mxu0 %v772
  %1090 = vmatprep.subr.bf16.mxu0 %v771
  %1091 = vmatpush1.bf16.msra.mxu0 %v770
  %1092 = vmatprep.subr.bf16.mxu0 %v769
  %1093 = vmatpush1.bf16.msra.mxu0 %v768
  %1094 = vmatprep.subr.bf16.mxu0 %v767
  %1095 = vmatpush1.bf16.msra.mxu0 %v766
  %1096 = vmatprep.subr.bf16.mxu0 %v765
  %1097 = vmatpush1.bf16.msra.mxu0 %v764
  %1098 = vmatprep.subr.bf16.mxu0 %v763
  %1099 = vmatpush1.bf16.msra.mxu0 %v762
  %1100 = vmatprep.subr.bf16.mxu0 %v761
  %1101 = vmatpush1.bf16.msra.mxu0 %v760
  %1102 = vmatprep.subr.bf16.mxu0 %v791
  %1103 = vmatpush2.bf16.msra.mxu0 %v790
  %1104 = vmatprep.subr.bf16.mxu0 %v789
  %1105 = vmatpush2.bf16.msra.mxu0 %v788
  %1106 = vmatprep.subr.bf16.mxu0 %v787
  %1107 = vmatpush2.bf16.msra.mxu0 %v786
  %1108 = vmatprep.subr.bf16.mxu0 %v785
  %1109 = vmatpush2.bf16.msra.mxu0 %v784
  %1110 = vmatprep.subr.bf16.mxu0 %v783
  %1111 = vmatpush2.bf16.msra.mxu0 %v782
  %1112 = vmatprep.subr.bf16.mxu0 %v781
  %1113 = vmatpush2.bf16.msra.mxu0 %v780
  %1114 = vmatprep.subr.bf16.mxu0 %v779
  %1115 = vmatpush2.bf16.msra.mxu0 %v778
  %1116 = vmatprep.subr.bf16.mxu0 %v777
  %1117 = vmatpush2.bf16.msra.mxu0 %v776
  %1118 = vmatprep.mubr.bf16.mxu0 %v233
  %1119 = vmatmul.mubr.bf16.gmra.mxu0 %v232
  %v1120 = vpop.f32.mrf.mxu0
  %v1121 = vadd.f32 %v1070, %v1120
  %v1122 = vpop.f32.mrf.mxu0
  %v1123 = vadd.f32 %v1072, %v1122
  %v1124 = vpop.f32.mrf.mxu0
  %v1125 = vadd.f32 %v1074, %v1124
  %v1126 = vpop.f32.mrf.mxu0
  %v1127 = vadd.f32 %v1076, %v1126
  %1128 = vmatprep.mubr.bf16.mxu0 %v242
  %1129 = vmatmul.mubr.bf16.gmra.mxu0 %v241
  %v1130 = vpop.f32.mrf.mxu0
  %v1131 = vadd.f32 %v1080, %v1130
  %v1132 = vpop.f32.mrf.mxu0
  %v1133 = vadd.f32 %v1082, %v1132
  %v1134 = vpop.f32.mrf.mxu0
  %v1135 = vpop.f32.mrf.mxu0
  %1136 = vdwg.mxu0
  %1137 = vmatprep.subr.bf16.mxu0 %v807
  %1138 = vmatpush1.bf16.msra.mxu0 %v806
  %1139 = vmatprep.subr.bf16.mxu0 %v805
  %1140 = vmatpush1.bf16.msra.mxu0 %v804
  %1141 = vmatprep.subr.bf16.mxu0 %v803
  %1142 = vmatpush1.bf16.msra.mxu0 %v802
  %1143 = vmatprep.subr.bf16.mxu0 %v801
  %1144 = vmatpush1.bf16.msra.mxu0 %v800
  %1145 = vmatprep.subr.bf16.mxu0 %v799
  %1146 = vmatpush1.bf16.msra.mxu0 %v798
  %1147 = vmatprep.subr.bf16.mxu0 %v797
  %1148 = vmatpush1.bf16.msra.mxu0 %v796
  %1149 = vmatprep.subr.bf16.mxu0 %v795
  %1150 = vmatpush1.bf16.msra.mxu0 %v794
  %1151 = vmatprep.subr.bf16.mxu0 %v793
  %1152 = vmatpush1.bf16.msra.mxu0 %v792
  %1153 = vmatprep.subr.bf16.mxu0 %v823
  %1154 = vmatpush2.bf16.msra.mxu0 %v822
  %1155 = vmatprep.subr.bf16.mxu0 %v821
  %1156 = vmatpush2.bf16.msra.mxu0 %v820
  %1157 = vmatprep.subr.bf16.mxu0 %v819
  %1158 = vmatpush2.bf16.msra.mxu0 %v818
  %1159 = vmatprep.subr.bf16.mxu0 %v817
  %1160 = vmatpush2.bf16.msra.mxu0 %v816
  %1161 = vmatprep.subr.bf16.mxu0 %v815
  %1162 = vmatpush2.bf16.msra.mxu0 %v814
  %1163 = vmatprep.subr.bf16.mxu0 %v813
  %1164 = vmatpush2.bf16.msra.mxu0 %v812
  %1165 = vmatprep.subr.bf16.mxu0 %v811
  %1166 = vmatpush2.bf16.msra.mxu0 %v810
  %1167 = vmatprep.subr.bf16.mxu0 %v809
  %1168 = vmatpush2.bf16.msra.mxu0 %v808
  %1169 = vmatprep.mubr.bf16.mxu0 %v235
  %1170 = vmatmul.mubr.bf16.gmra.mxu0 %v234
  %v1171 = vpop.f32.mrf.mxu0
  %v1172 = vadd.f32 %v1121, %v1171
  %v1173 = vpop.f32.mrf.mxu0
  %v1174 = vadd.f32 %v1123, %v1173
  %v1175 = vpop.f32.mrf.mxu0
  %v1176 = vadd.f32 %v1125, %v1175
  %v1177 = vpop.f32.mrf.mxu0
  %v1178 = vadd.f32 %v1127, %v1177
  %1179 = vmatprep.mubr.bf16.mxu0 %v244
  %1180 = vmatmul.mubr.bf16.gmra.mxu0 %v243
  %v1181 = vpop.f32.mrf.mxu0
  %v1182 = vadd.f32 %v1131, %v1181
  %v1183 = vpop.f32.mrf.mxu0
  %v1184 = vadd.f32 %v1133, %v1183
  %v1185 = vpop.f32.mrf.mxu0
  %v1186 = vpop.f32.mrf.mxu0
  %1187 = vdwg.mxu0
  %1188 = vmatprep.subr.bf16.mxu0 %v839
  %1189 = vmatpush1.bf16.msra.mxu0 %v838
  %1190 = vmatprep.subr.bf16.mxu0 %v837
  %1191 = vmatpush1.bf16.msra.mxu0 %v836
  %1192 = vmatprep.subr.bf16.mxu0 %v835
  %1193 = vmatpush1.bf16.msra.mxu0 %v834
  %1194 = vmatprep.subr.bf16.mxu0 %v833
  %1195 = vmatpush1.bf16.msra.mxu0 %v832
  %1196 = vmatprep.subr.bf16.mxu0 %v831
  %1197 = vmatpush1.bf16.msra.mxu0 %v830
  %1198 = vmatprep.subr.bf16.mxu0 %v829
  %1199 = vmatpush1.bf16.msra.mxu0 %v828
  %1200 = vmatprep.subr.bf16.mxu0 %v827
  %1201 = vmatpush1.bf16.msra.mxu0 %v826
  %1202 = vmatprep.subr.bf16.mxu0 %v825
  %1203 = vmatpush1.bf16.msra.mxu0 %v824
  %1204 = vmatprep.subr.bf16.mxu0 0
  %1205 = vmatpush2.bf16.msra.mxu0 0
  %1206 = vmatprep.subr.bf16.mxu0 0
  %1207 = vmatpush2.bf16.msra.mxu0 0
  %1208 = vmatprep.subr.bf16.mxu0 0
  %1209 = vmatpush2.bf16.msra.mxu0 0
  %1210 = vmatprep.subr.bf16.mxu0 0
  %1211 = vmatpush2.bf16.msra.mxu0 0
  %1212 = vmatprep.subr.bf16.mxu0 0
  %1213 = vmatpush2.bf16.msra.mxu0 0
  %1214 = vmatprep.subr.bf16.mxu0 0
  %1215 = vmatpush2.bf16.msra.mxu0 0
  %1216 = vmatprep.subr.bf16.mxu0 0
  %1217 = vmatpush2.bf16.msra.mxu0 0
  %1218 = vmatprep.subr.bf16.mxu0 0
  %1219 = vmatpush2.bf16.msra.mxu0 0
  %1220 = vmatprep.mubr.bf16.mxu0 0
  %1221 = vmatmul.mubr.bf16.gmra.mxu0 %v236
  %v1222 = vpop.f32.mrf.mxu0
  %v1223 = vadd.f32 %v1172, %v1222
  %v1224 = vpop.f32.mrf.mxu0
  %v1225 = vadd.f32 %v1174, %v1224
  %v1226 = vpop.f32.mrf.mxu0
  %v1227 = vadd.f32 %v1176, %v1226
  %v1228 = vpop.f32.mrf.mxu0
  %v1229 = vadd.f32 %v1178, %v1228
  %1230 = vmatprep.mubr.bf16.mxu0 0
  %1231 = vmatmul.mubr.bf16.gmra.mxu0 %v245
  %v1232 = vpop.f32.mrf.mxu0
  %v1233 = vadd.f32 %v1182, %v1232
  %v1234 = vpop.f32.mrf.mxu0
  %v1235 = vadd.f32 %v1184, %v1234
  %v1236 = vpop.f32.mrf.mxu0
  %v1237 = vpop.f32.mrf.mxu0
  %1238 = vdwg.mxu0
  %v1239 = vmax.f32 %v1223, 0.0
  %v1240 = vmax.f32 %v1225, 0.0
  %v1241 = vmax.f32 %v1227, 0.0
  %v1242 = vmax.f32 %v1229, 0.0
  %v1243 = vmax.f32 %v1233, 0.0
  %v1244 = vmax.f32 %v1235, 0.0
  %v1245 = vpack.c.bf16 %v1241, %v1239
  %v1246 = vpack.c.bf16 %v1242, %v1240
  %v1247 = vpack.c.bf16 %v1243, %v1243
  %v1248 = vpack.c.bf16 %v1244, %v1244
  %v1253 = vunpack.c.l.b16 %v1245
  %v1254 = vunpack.c.l.b16 %v1246
  %v1255 = vunpack.c.h.b16 %v1245
  %v1256 = vunpack.c.h.b16 %v1246
  %v1257 = vunpack.c.l.b16 %v1247
  %v1258 = vunpack.c.l.b16 %v1248
  %v1259 = vpack.c.b16 %v1254, %v1253
  %v1260 = vpack.c.b16 %v1256, %v1255
  %v1261 = vpack.c.b16 %v1258, %v1257
  %1265 = vst [vmem:[%s3] sm:$0xff] %v1259
  %1266 = vst [vmem:[%s3 + $0x8] sm:$0xff] %v1260
  %1267 = vst [vmem:[%s3 + $0x10] sm:$0x11] %v1261
  // Predicated region
  $region14: #{cifar_classifier_forward.6} parent=0 // pred_check
    _
  $region15: #{cifar_classifier_forward.6} parent=0 // pred_check_branch
    %1269 = sbr.rel (0) target = $region17
  $region16: #{cifar_classifier_forward.6} parent=0 // pred_region
    _
  $region17: #{cifar_classifier_forward.6} parent=0 // pred_fallthru
    _
  // Predicated region
  $region18: #{cifar_classifier_forward.6} parent=0 // pred_check
    _
  $region19: #{cifar_classifier_forward.6} parent=0 // pred_check_branch
    %1271 = sbr.rel (0) target = $region21
  $region20: #{cifar_classifier_forward.6} parent=0 // pred_region
    _
  $region21: #{cifar_classifier_forward.6} parent=0 // pred_fallthru
    _

// kernel: cifar_classifier_forward.7
$region0: #{cifar_classifier_forward.7}
  #allocation0 [shape = 'u32[]', space=smem, size = 0x4, offset = 0x4, fixed_abs, tag = 'smem constant byte address 0x4 - core index']
  #allocation1 [shape = 'u32[144,128]{1,0:T(1,128)}', space=vmem, size = 0x12000, scoped, tag = 'internal scratch']
  %s0 = inlined_call_operand.vmem [shape: bf16[2,2304], index: 0, kind: input, shape index: {}]
  %s1 = inlined_call_operand.vmem [shape: bf16[2304,32], index: 1, kind: input, shape index: {}]
  %s2 = inlined_call_operand.vmem [shape: f32[1,32], index: 2, kind: input, shape index: {}]
  %s3 = inlined_call_operand.vmem [shape: bf16[32,10], index: 3, kind: input, shape index: {}]
  %s4 = inlined_call_operand.vmem [shape: f32[1,10], index: 4, kind: input, shape index: {}]
  %s5 = inlined_call_operand.hbm [shape: f32[2,10], index: 5, kind: output, shape index: {}]
  %s6 = sld [smem:[#allocation0]]
  $region30: #{cifar_classifier_forward.7} parent=0
    _
  %s8 = ssub.s32 1, %s6
  %s9 = scalar_select 0, %s8, %s6
  $region1: #{cifar_classifier_forward.7} parent=0
    #allocation2 [shape = 'u8[1024]{0}', space=vmem, size = 0x400, scoped, tag = 'output window, operand 0, single buffered']
    #allocation3 [shape = 's32[1]{0}', space=sflag, size = 0x4, scoped, tag = 'scoped memory for cifar_classifier_forward.7']
    %10 = vsyncpa [#allocation3], 0
    // Predicated region
    $region2: #{cifar_classifier_forward.7} parent=1 // pred_check
      _
    $region3: #{cifar_classifier_forward.7} parent=1 // pred_check_branch
      %12 = sbr.rel (0) target = $region5
    $region4: #{cifar_classifier_forward.7} parent=1 // pred_region
      _
    $region5: #{cifar_classifier_forward.7} parent=1 // pred_fallthru
      _
    // Predicated region
    $region6: #{cifar_classifier_forward.7} parent=1 // pred_check
      _
    $region7: #{cifar_classifier_forward.7} parent=1 // pred_check_branch
      %14 = sbr.rel (0) target = $region9
    $region8: #{cifar_classifier_forward.7} parent=1 // pred_region
      _
    $region9: #{cifar_classifier_forward.7} parent=1 // pred_fallthru
      _
    // Predicated region
    $region10: #{cifar_classifier_forward.7} parent=1 // pred_check
      _
    $region11: #{cifar_classifier_forward.7} parent=1 // pred_check_branch
      %16 = sbr.rel (0) target = $region13
    $region12: #{cifar_classifier_forward.7} parent=1 // pred_region
      _
    $region13: #{cifar_classifier_forward.7} parent=1 // pred_fallthru
      _
    // Predicated region
    $region14: #{cifar_classifier_forward.7} parent=1 // pred_check
      _
    $region15: #{cifar_classifier_forward.7} parent=1 // pred_check_branch
      %18 = sbr.rel (0) target = $region17
    $region16: #{cifar_classifier_forward.7} parent=1 // pred_region
      _
    $region17: #{cifar_classifier_forward.7} parent=1 // pred_fallthru
      _
    // Predicated region
    $region18: #{cifar_classifier_forward.7} parent=1 // pred_check
      _
    $region19: #{cifar_classifier_forward.7} parent=1 // pred_check_branch
      %20 = sbr.rel (0) target = $region21
    $region20: #{cifar_classifier_forward.7} parent=1 // pred_region
      _
    $region21: #{cifar_classifier_forward.7} parent=1 // pred_fallthru
      _
    %v22 = vld [vmem:[%s0] sm:$0xff]
    %v23 = vld [vmem:[%s0 + $0x8] sm:$0xff]
    %v24 = vld [vmem:[%s0 + $0x10] sm:$0x3]
    %v25 = vld [vmem:[%s1] sm:$0xf]
    %v26 = vld [vmem:[%s1 + $0x4] sm:$0xf]
    %v27 = vld [vmem:[%s1 + $0x8] sm:$0xf]
    %v28 = vld [vmem:[%s1 + $0xc] sm:$0xf]
    %v29 = vld [vmem:[%s1 + $0x10] sm:$0xf]
    %v30 = vld [vmem:[%s1 + $0x14] sm:$0xf]
    %v31 = vld [vmem:[%s1 + $0x18] sm:$0xf]
    %v32 = vld [vmem:[%s1 + $0x1c] sm:$0xf]
    %v33 = vld [vmem:[%s1 + $0x20] sm:$0xf]
    %v34 = vld [vmem:[%s1 + $0x24] sm:$0xf]
    %v35 = vld [vmem:[%s1 + $0x28] sm:$0xf]
    %v36 = vld [vmem:[%s1 + $0x2c] sm:$0xf]
    %v37 = vld [vmem:[%s1 + $0x30] sm:$0xf]
    %v38 = vld [vmem:[%s1 + $0x34] sm:$0xf]
    %v39 = vld [vmem:[%s1 + $0x38] sm:$0xf]
    %v40 = vld [vmem:[%s1 + $0x3c] sm:$0xf]
    %v41 = vld [vmem:[%s1 + $0x40] sm:$0xf]
    %v42 = vld [vmem:[%s1 + $0x44] sm:$0xf]
    %v43 = vld [vmem:[%s1 + $0x48] sm:$0xf]
    %v44 = vld [vmem:[%s1 + $0x4c] sm:$0xf]
    %v45 = vld [vmem:[%s1 + $0x50] sm:$0xf]
    %v46 = vld [vmem:[%s1 + $0x54] sm:$0xf]
    %v47 = vld [vmem:[%s1 + $0x58] sm:$0xf]
    %v48 = vld [vmem:[%s1 + $0x5c] sm:$0xf]
    %v49 = vld [vmem:[%s1 + $0x60] sm:$0xf]
    %v50 = vld [vmem:[%s1 + $0x64] sm:$0xf]
    %v51 = vld [vmem:[%s1 + $0x68] sm:$0xf]
    %v52 = vld [vmem:[%s1 + $0x6c] sm:$0xf]
    %v53 = vld [vmem:[%s1 + $0x70] sm:$0xf]
    %v54 = vld [vmem:[%s1 + $0x74] sm:$0xf]
    %v55 = vld [vmem:[%s1 + $0x78] sm:$0xf]
    %v56 = vld [vmem:[%s1 + $0x7c] sm:$0xf]
    %v57 = vld [vmem:[%s1 + $0x80] sm:$0xf]
    %v58 = vld [vmem:[%s1 + $0x84] sm:$0xf]
    %v59 = vld [vmem:[%s1 + $0x88] sm:$0xf]
    %v60 = vld [vmem:[%s1 + $0x8c] sm:$0xf]
    %v61 = vld [vmem:[%s1 + $0x90] sm:$0xf]
    %v62 = vld [vmem:[%s1 + $0x94] sm:$0xf]
    %v63 = vld [vmem:[%s1 + $0x98] sm:$0xf]
    %v64 = vld [vmem:[%s1 + $0x9c] sm:$0xf]
    %v65 = vld [vmem:[%s1 + $0xa0] sm:$0xf]
    %v66 = vld [vmem:[%s1 + $0xa4] sm:$0xf]
    %v67 = vld [vmem:[%s1 + $0xa8] sm:$0xf]
    %v68 = vld [vmem:[%s1 + $0xac] sm:$0xf]
    %v69 = vld [vmem:[%s1 + $0xb0] sm:$0xf]
    %v70 = vld [vmem:[%s1 + $0xb4] sm:$0xf]
    %v71 = vld [vmem:[%s1 + $0xb8] sm:$0xf]
    %v72 = vld [vmem:[%s1 + $0xbc] sm:$0xf]
    %v73 = vld [vmem:[%s1 + $0xc0] sm:$0xf]
    %v74 = vld [vmem:[%s1 + $0xc4] sm:$0xf]
    %v75 = vld [vmem:[%s1 + $0xc8] sm:$0xf]
    %v76 = vld [vmem:[%s1 + $0xcc] sm:$0xf]
    %v77 = vld [vmem:[%s1 + $0xd0] sm:$0xf]
    %v78 = vld [vmem:[%s1 + $0xd4] sm:$0xf]
    %v79 = vld [vmem:[%s1 + $0xd8] sm:$0xf]
    %v80 = vld [vmem:[%s1 + $0xdc] sm:$0xf]
    %v81 = vld [vmem:[%s1 + $0xe0] sm:$0xf]
    %v82 = vld [vmem:[%s1 + $0xe4] sm:$0xf]
    %v83 = vld [vmem:[%s1 + $0xe8] sm:$0xf]
    %v84 = vld [vmem:[%s1 + $0xec] sm:$0xf]
    %v85 = vld [vmem:[%s1 + $0xf0] sm:$0xf]
    %v86 = vld [vmem:[%s1 + $0xf4] sm:$0xf]
    %v87 = vld [vmem:[%s1 + $0xf8] sm:$0xf]
    %v88 = vld [vmem:[%s1 + $0xfc] sm:$0xf]
    %v89 = vld [vmem:[%s1 + $0x100] sm:$0xf]
    %v90 = vld [vmem:[%s1 + $0x104] sm:$0xf]
    %v91 = vld [vmem:[%s1 + $0x108] sm:$0xf]
    %v92 = vld [vmem:[%s1 + $0x10c] sm:$0xf]
    %v93 = vld [vmem:[%s1 + $0x110] sm:$0xf]
    %v94 = vld [vmem:[%s1 + $0x114] sm:$0xf]
    %v95 = vld [vmem:[%s1 + $0x118] sm:$0xf]
    %v96 = vld [vmem:[%s1 + $0x11c] sm:$0xf]
    %v97 = vld [vmem:[%s1 + $0x120] sm:$0xf]
    %v98 = vld [vmem:[%s1 + $0x124] sm:$0xf]
    %v99 = vld [vmem:[%s1 + $0x128] sm:$0xf]
    %v100 = vld [vmem:[%s1 + $0x12c] sm:$0xf]
    %v101 = vld [vmem:[%s1 + $0x130] sm:$0xf]
    %v102 = vld [vmem:[%s1 + $0x134] sm:$0xf]
    %v103 = vld [vmem:[%s1 + $0x138] sm:$0xf]
    %v104 = vld [vmem:[%s1 + $0x13c] sm:$0xf]
    %v105 = vld [vmem:[%s1 + $0x140] sm:$0xf]
    %v106 = vld [vmem:[%s1 + $0x144] sm:$0xf]
    %v107 = vld [vmem:[%s1 + $0x148] sm:$0xf]
    %v108 = vld [vmem:[%s1 + $0x14c] sm:$0xf]
    %v109 = vld [vmem:[%s1 + $0x150] sm:$0xf]
    %v110 = vld [vmem:[%s1 + $0x154] sm:$0xf]
    %v111 = vld [vmem:[%s1 + $0x158] sm:$0xf]
    %v112 = vld [vmem:[%s1 + $0x15c] sm:$0xf]
    %v113 = vld [vmem:[%s1 + $0x160] sm:$0xf]
    %v114 = vld [vmem:[%s1 + $0x164] sm:$0xf]
    %v115 = vld [vmem:[%s1 + $0x168] sm:$0xf]
    %v116 = vld [vmem:[%s1 + $0x16c] sm:$0xf]
    %v117 = vld [vmem:[%s1 + $0x170] sm:$0xf]
    %v118 = vld [vmem:[%s1 + $0x174] sm:$0xf]
    %v119 = vld [vmem:[%s1 + $0x178] sm:$0xf]
    %v120 = vld [vmem:[%s1 + $0x17c] sm:$0xf]
    %v121 = vld [vmem:[%s1 + $0x180] sm:$0xf]
    %v122 = vld [vmem:[%s1 + $0x184] sm:$0xf]
    %v123 = vld [vmem:[%s1 + $0x188] sm:$0xf]
    %v124 = vld [vmem:[%s1 + $0x18c] sm:$0xf]
    %v125 = vld [vmem:[%s1 + $0x190] sm:$0xf]
    %v126 = vld [vmem:[%s1 + $0x194] sm:$0xf]
    %v127 = vld [vmem:[%s1 + $0x198] sm:$0xf]
    %v128 = vld [vmem:[%s1 + $0x19c] sm:$0xf]
    %v129 = vld [vmem:[%s1 + $0x1a0] sm:$0xf]
    %v130 = vld [vmem:[%s1 + $0x1a4] sm:$0xf]
    %v131 = vld [vmem:[%s1 + $0x1a8] sm:$0xf]
    %v132 = vld [vmem:[%s1 + $0x1ac] sm:$0xf]
    %v133 = vld [vmem:[%s1 + $0x1b0] sm:$0xf]
    %v134 = vld [vmem:[%s1 + $0x1b4] sm:$0xf]
    %v135 = vld [vmem:[%s1 + $0x1b8] sm:$0xf]
    %v136 = vld [vmem:[%s1 + $0x1bc] sm:$0xf]
    %v137 = vld [vmem:[%s1 + $0x1c0] sm:$0xf]
    %v138 = vld [vmem:[%s1 + $0x1c4] sm:$0xf]
    %v139 = vld [vmem:[%s1 + $0x1c8] sm:$0xf]
    %v140 = vld [vmem:[%s1 + $0x1cc] sm:$0xf]
    %v141 = vld [vmem:[%s1 + $0x1d0] sm:$0xf]
    %v142 = vld [vmem:[%s1 + $0x1d4] sm:$0xf]
    %v143 = vld [vmem:[%s1 + $0x1d8] sm:$0xf]
    %v144 = vld [vmem:[%s1 + $0x1dc] sm:$0xf]
    %v145 = vld [vmem:[%s1 + $0x1e0] sm:$0xf]
    %v146 = vld [vmem:[%s1 + $0x1e4] sm:$0xf]
    %v147 = vld [vmem:[%s1 + $0x1e8] sm:$0xf]
    %v148 = vld [vmem:[%s1 + $0x1ec] sm:$0xf]
    %v149 = vld [vmem:[%s1 + $0x1f0] sm:$0xf]
    %v150 = vld [vmem:[%s1 + $0x1f4] sm:$0xf]
    %v151 = vld [vmem:[%s1 + $0x1f8] sm:$0xf]
    %v152 = vld [vmem:[%s1 + $0x1fc] sm:$0xf]
    %v153 = vld [vmem:[%s1 + $0x200] sm:$0xf]
    %v154 = vld [vmem:[%s1 + $0x204] sm:$0xf]
    %v155 = vld [vmem:[%s1 + $0x208] sm:$0xf]
    %v156 = vld [vmem:[%s1 + $0x20c] sm:$0xf]
    %v157 = vld [vmem:[%s1 + $0x210] sm:$0xf]
    %v158 = vld [vmem:[%s1 + $0x214] sm:$0xf]
    %v159 = vld [vmem:[%s1 + $0x218] sm:$0xf]
    %v160 = vld [vmem:[%s1 + $0x21c] sm:$0xf]
    %v161 = vld [vmem:[%s1 + $0x220] sm:$0xf]
    %v162 = vld [vmem:[%s1 + $0x224] sm:$0xf]
    %v163 = vld [vmem:[%s1 + $0x228] sm:$0xf]
    %v164 = vld [vmem:[%s1 + $0x22c] sm:$0xf]
    %v165 = vld [vmem:[%s1 + $0x230] sm:$0xf]
    %v166 = vld [vmem:[%s1 + $0x234] sm:$0xf]
    %v167 = vld [vmem:[%s1 + $0x238] sm:$0xf]
    %v168 = vld [vmem:[%s1 + $0x23c] sm:$0xf]
    %v169 = vld [vmem:[%s1 + $0x240] sm:$0xf]
    %v170 = vld [vmem:[%s1 + $0x244] sm:$0xf]
    %v171 = vld [vmem:[%s1 + $0x248] sm:$0xf]
    %v172 = vld [vmem:[%s1 + $0x24c] sm:$0xf]
    %v173 = vld [vmem:[%s1 + $0x250] sm:$0xf]
    %v174 = vld [vmem:[%s1 + $0x254] sm:$0xf]
    %v175 = vld [vmem:[%s1 + $0x258] sm:$0xf]
    %v176 = vld [vmem:[%s1 + $0x25c] sm:$0xf]
    %v177 = vld [vmem:[%s1 + $0x260] sm:$0xf]
    %v178 = vld [vmem:[%s1 + $0x264] sm:$0xf]
    %v179 = vld [vmem:[%s1 + $0x268] sm:$0xf]
    %v180 = vld [vmem:[%s1 + $0x26c] sm:$0xf]
    %v181 = vld [vmem:[%s1 + $0x270] sm:$0xf]
    %v182 = vld [vmem:[%s1 + $0x274] sm:$0xf]
    %v183 = vld [vmem:[%s1 + $0x278] sm:$0xf]
    %v184 = vld [vmem:[%s1 + $0x27c] sm:$0xf]
    %v185 = vld [vmem:[%s1 + $0x280] sm:$0xf]
    %v186 = vld [vmem:[%s1 + $0x284] sm:$0xf]
    %v187 = vld [vmem:[%s1 + $0x288] sm:$0xf]
    %v188 = vld [vmem:[%s1 + $0x28c] sm:$0xf]
    %v189 = vld [vmem:[%s1 + $0x290] sm:$0xf]
    %v190 = vld [vmem:[%s1 + $0x294] sm:$0xf]
    %v191 = vld [vmem:[%s1 + $0x298] sm:$0xf]
    %v192 = vld [vmem:[%s1 + $0x29c] sm:$0xf]
    %v193 = vld [vmem:[%s1 + $0x2a0] sm:$0xf]
    %v194 = vld [vmem:[%s1 + $0x2a4] sm:$0xf]
    %v195 = vld [vmem:[%s1 + $0x2a8] sm:$0xf]
    %v196 = vld [vmem:[%s1 + $0x2ac] sm:$0xf]
    %v197 = vld [vmem:[%s1 + $0x2b0] sm:$0xf]
    %v198 = vld [vmem:[%s1 + $0x2b4] sm:$0xf]
    %v199 = vld [vmem:[%s1 + $0x2b8] sm:$0xf]
    %v200 = vld [vmem:[%s1 + $0x2bc] sm:$0xf]
    %v201 = vld [vmem:[%s1 + $0x2c0] sm:$0xf]
    %v202 = vld [vmem:[%s1 + $0x2c4] sm:$0xf]
    %v203 = vld [vmem:[%s1 + $0x2c8] sm:$0xf]
    %v204 = vld [vmem:[%s1 + $0x2cc] sm:$0xf]
    %v205 = vld [vmem:[%s1 + $0x2d0] sm:$0xf]
    %v206 = vld [vmem:[%s1 + $0x2d4] sm:$0xf]
    %v207 = vld [vmem:[%s1 + $0x2d8] sm:$0xf]
    %v208 = vld [vmem:[%s1 + $0x2dc] sm:$0xf]
    %v209 = vld [vmem:[%s1 + $0x2e0] sm:$0xf]
    %v210 = vld [vmem:[%s1 + $0x2e4] sm:$0xf]
    %v211 = vld [vmem:[%s1 + $0x2e8] sm:$0xf]
    %v212 = vld [vmem:[%s1 + $0x2ec] sm:$0xf]
    %v213 = vld [vmem:[%s1 + $0x2f0] sm:$0xf]
    %v214 = vld [vmem:[%s1 + $0x2f4] sm:$0xf]
    %v215 = vld [vmem:[%s1 + $0x2f8] sm:$0xf]
    %v216 = vld [vmem:[%s1 + $0x2fc] sm:$0xf]
    %v217 = vld [vmem:[%s1 + $0x300] sm:$0xf]
    %v218 = vld [vmem:[%s1 + $0x304] sm:$0xf]
    %v219 = vld [vmem:[%s1 + $0x308] sm:$0xf]
    %v220 = vld [vmem:[%s1 + $0x30c] sm:$0xf]
    %v221 = vld [vmem:[%s1 + $0x310] sm:$0xf]
    %v222 = vld [vmem:[%s1 + $0x314] sm:$0xf]
    %v223 = vld [vmem:[%s1 + $0x318] sm:$0xf]
    %v224 = vld [vmem:[%s1 + $0x31c] sm:$0xf]
    %v225 = vld [vmem:[%s1 + $0x320] sm:$0xf]
    %v226 = vld [vmem:[%s1 + $0x324] sm:$0xf]
    %v227 = vld [vmem:[%s1 + $0x328] sm:$0xf]
    %v228 = vld [vmem:[%s1 + $0x32c] sm:$0xf]
    %v229 = vld [vmem:[%s1 + $0x330] sm:$0xf]
    %v230 = vld [vmem:[%s1 + $0x334] sm:$0xf]
    %v231 = vld [vmem:[%s1 + $0x338] sm:$0xf]
    %v232 = vld [vmem:[%s1 + $0x33c] sm:$0xf]
    %v233 = vld [vmem:[%s1 + $0x340] sm:$0xf]
    %v234 = vld [vmem:[%s1 + $0x344] sm:$0xf]
    %v235 = vld [vmem:[%s1 + $0x348] sm:$0xf]
    %v236 = vld [vmem:[%s1 + $0x34c] sm:$0xf]
    %v237 = vld [vmem:[%s1 + $0x350] sm:$0xf]
    %v238 = vld [vmem:[%s1 + $0x354] sm:$0xf]
    %v239 = vld [vmem:[%s1 + $0x358] sm:$0xf]
    %v240 = vld [vmem:[%s1 + $0x35c] sm:$0xf]
    %v241 = vld [vmem:[%s1 + $0x360] sm:$0xf]
    %v242 = vld [vmem:[%s1 + $0x364] sm:$0xf]
    %v243 = vld [vmem:[%s1 + $0x368] sm:$0xf]
    %v244 = vld [vmem:[%s1 + $0x36c] sm:$0xf]
    %v245 = vld [vmem:[%s1 + $0x370] sm:$0xf]
    %v246 = vld [vmem:[%s1 + $0x374] sm:$0xf]
    %v247 = vld [vmem:[%s1 + $0x378] sm:$0xf]
    %v248 = vld [vmem:[%s1 + $0x37c] sm:$0xf]
    %v249 = vld [vmem:[%s1 + $0x380] sm:$0xf]
    %v250 = vld [vmem:[%s1 + $0x384] sm:$0xf]
    %v251 = vld [vmem:[%s1 + $0x388] sm:$0xf]
    %v252 = vld [vmem:[%s1 + $0x38c] sm:$0xf]
    %v253 = vld [vmem:[%s1 + $0x390] sm:$0xf]
    %v254 = vld [vmem:[%s1 + $0x394] sm:$0xf]
    %v255 = vld [vmem:[%s1 + $0x398] sm:$0xf]
    %v256 = vld [vmem:[%s1 + $0x39c] sm:$0xf]
    %v257 = vld [vmem:[%s1 + $0x3a0] sm:$0xf]
    %v258 = vld [vmem:[%s1 + $0x3a4] sm:$0xf]
    %v259 = vld [vmem:[%s1 + $0x3a8] sm:$0xf]
    %v260 = vld [vmem:[%s1 + $0x3ac] sm:$0xf]
    %v261 = vld [vmem:[%s1 + $0x3b0] sm:$0xf]
    %v262 = vld [vmem:[%s1 + $0x3b4] sm:$0xf]
    %v263 = vld [vmem:[%s1 + $0x3b8] sm:$0xf]
    %v264 = vld [vmem:[%s1 + $0x3bc] sm:$0xf]
    %v265 = vld [vmem:[%s1 + $0x3c0] sm:$0xf]
    %v266 = vld [vmem:[%s1 + $0x3c4] sm:$0xf]
    %v267 = vld [vmem:[%s1 + $0x3c8] sm:$0xf]
    %v268 = vld [vmem:[%s1 + $0x3cc] sm:$0xf]
    %v269 = vld [vmem:[%s1 + $0x3d0] sm:$0xf]
    %v270 = vld [vmem:[%s1 + $0x3d4] sm:$0xf]
    %v271 = vld [vmem:[%s1 + $0x3d8] sm:$0xf]
    %v272 = vld [vmem:[%s1 + $0x3dc] sm:$0xf]
    %v273 = vld [vmem:[%s1 + $0x3e0] sm:$0xf]
    %v274 = vld [vmem:[%s1 + $0x3e4] sm:$0xf]
    %v275 = vld [vmem:[%s1 + $0x3e8] sm:$0xf]
    %v276 = vld [vmem:[%s1 + $0x3ec] sm:$0xf]
    %v277 = vld [vmem:[%s1 + $0x3f0] sm:$0xf]
    %v278 = vld [vmem:[%s1 + $0x3f4] sm:$0xf]
    %v279 = vld [vmem:[%s1 + $0x3f8] sm:$0xf]
    %v280 = vld [vmem:[%s1 + $0x3fc] sm:$0xf]
    %v281 = vld [vmem:[%s1 + $0x400] sm:$0xf]
    %v282 = vld [vmem:[%s1 + $0x404] sm:$0xf]
    %v283 = vld [vmem:[%s1 + $0x408] sm:$0xf]
    %v284 = vld [vmem:[%s1 + $0x40c] sm:$0xf]
    %v285 = vld [vmem:[%s1 + $0x410] sm:$0xf]
    %v286 = vld [vmem:[%s1 + $0x414] sm:$0xf]
    %v287 = vld [vmem:[%s1 + $0x418] sm:$0xf]
    %v288 = vld [vmem:[%s1 + $0x41c] sm:$0xf]
    %v289 = vld [vmem:[%s1 + $0x420] sm:$0xf]
    %v290 = vld [vmem:[%s1 + $0x424] sm:$0xf]
    %v291 = vld [vmem:[%s1 + $0x428] sm:$0xf]
    %v292 = vld [vmem:[%s1 + $0x42c] sm:$0xf]
    %v293 = vld [vmem:[%s1 + $0x430] sm:$0xf]
    %v294 = vld [vmem:[%s1 + $0x434] sm:$0xf]
    %v295 = vld [vmem:[%s1 + $0x438] sm:$0xf]
    %v296 = vld [vmem:[%s1 + $0x43c] sm:$0xf]
    %v297 = vld [vmem:[%s1 + $0x440] sm:$0xf]
    %v298 = vld [vmem:[%s1 + $0x444] sm:$0xf]
    %v299 = vld [vmem:[%s1 + $0x448] sm:$0xf]
    %v300 = vld [vmem:[%s1 + $0x44c] sm:$0xf]
    %v301 = vld [vmem:[%s1 + $0x450] sm:$0xf]
    %v302 = vld [vmem:[%s1 + $0x454] sm:$0xf]
    %v303 = vld [vmem:[%s1 + $0x458] sm:$0xf]
    %v304 = vld [vmem:[%s1 + $0x45c] sm:$0xf]
    %v305 = vld [vmem:[%s1 + $0x460] sm:$0xf]
    %v306 = vld [vmem:[%s1 + $0x464] sm:$0xf]
    %v307 = vld [vmem:[%s1 + $0x468] sm:$0xf]
    %v308 = vld [vmem:[%s1 + $0x46c] sm:$0xf]
    %v309 = vld [vmem:[%s1 + $0x470] sm:$0xf]
    %v310 = vld [vmem:[%s1 + $0x474] sm:$0xf]
    %v311 = vld [vmem:[%s1 + $0x478] sm:$0xf]
    %v312 = vld [vmem:[%s1 + $0x47c] sm:$0xf]
    %v313 = vld [vmem:[%s2] sm:$0x1]
    %v315 = vlaneseq
    %v316 = vshrl.u32 %v315, 7
    %v317 = vsub.s32 0, %v316
    %v318 = vrot.slane %v313, %v317
    %v323 = vcombine.high %v22, %v22
    %v325 = vunpack.c.l.s4 1966171168
    %v326 = vunpack.c.0.s8 %v325
    %v327 = vlaneseq
    %v328 = vshrl.u32 %v327, 7
    %v329 = vsub.s32 %v326, %v328
    %v330 = vrot.slane %v22, %v329
    %v332 = vunpack.c.l.s4 1966171168
    %v333 = vunpack.c.0.s8 %v332
    %v334 = vlaneseq
    %v335 = vshrl.u32 %v334, 7
    %v336 = vsub.s32 %v333, %v335
    %v337 = vrot.slane %v323, %v336
    %v338 = vcombine.high %v330, %v330
    %v339 = vcombine.high %v337, %v337
    %v341 = vunpack.c.l.s4 1966171168
    %v342 = vunpack.c.0.s8 %v341
    %v343 = vlaneseq
    %v344 = vshrl.u32 %v343, 7
    %v345 = vsub.s32 %v342, %v344
    %v346 = vrot.slane %v330, %v345
    %v348 = vunpack.c.l.s4 1966171168
    %v349 = vunpack.c.0.s8 %v348
    %v350 = vlaneseq
    %v351 = vshrl.u32 %v350, 7
    %v352 = vsub.s32 %v349, %v351
    %v353 = vrot.slane %v337, %v352
    %v355 = vunpack.c.l.s4 1966171168
    %v356 = vunpack.c.0.s8 %v355
    %v357 = vlaneseq
    %v358 = vshrl.u32 %v357, 7
    %v359 = vsub.s32 %v356, %v358
    %v360 = vrot.slane %v338, %v359
    %v362 = vunpack.c.l.s4 1966171168
    %v363 = vunpack.c.0.s8 %v362
    %v364 = vlaneseq
    %v365 = vshrl.u32 %v364, 7
    %v366 = vsub.s32 %v363, %v365
    %v367 = vrot.slane %v339, %v366
    %v368 = vcombine.high %v346, %v346
    %v369 = vcombine.high %v353, %v353
    %v370 = vcombine.high %v360, %v360
    %v371 = vcombine.high %v367, %v367
    %v372 = vcombine.high %v23, %v23
    %v374 = vunpack.c.l.s4 1966171168
    %v375 = vunpack.c.0.s8 %v374
    %v376 = vlaneseq
    %v377 = vshrl.u32 %v376, 7
    %v378 = vsub.s32 %v375, %v377
    %v379 = vrot.slane %v23, %v378
    %v381 = vunpack.c.l.s4 1966171168
    %v382 = vunpack.c.0.s8 %v381
    %v383 = vlaneseq
    %v384 = vshrl.u32 %v383, 7
    %v385 = vsub.s32 %v382, %v384
    %v386 = vrot.slane %v372, %v385
    %v387 = vcombine.high %v379, %v379
    %v388 = vcombine.high %v386, %v386
    %v390 = vunpack.c.l.s4 1966171168
    %v391 = vunpack.c.0.s8 %v390
    %v392 = vlaneseq
    %v393 = vshrl.u32 %v392, 7
    %v394 = vsub.s32 %v391, %v393
    %v395 = vrot.slane %v379, %v394
    %v397 = vunpack.c.l.s4 1966171168
    %v398 = vunpack.c.0.s8 %v397
    %v399 = vlaneseq
    %v400 = vshrl.u32 %v399, 7
    %v401 = vsub.s32 %v398, %v400
    %v402 = vrot.slane %v386, %v401
    %v404 = vunpack.c.l.s4 1966171168
    %v405 = vunpack.c.0.s8 %v404
    %v406 = vlaneseq
    %v407 = vshrl.u32 %v406, 7
    %v408 = vsub.s32 %v405, %v407
    %v409 = vrot.slane %v387, %v408
    %v411 = vunpack.c.l.s4 1966171168
    %v412 = vunpack.c.0.s8 %v411
    %v413 = vlaneseq
    %v414 = vshrl.u32 %v413, 7
    %v415 = vsub.s32 %v412, %v414
    %v416 = vrot.slane %v388, %v415
    %v417 = vcombine.high %v395, %v395
    %v418 = vcombine.high %v402, %v402
    %v419 = vcombine.high %v409, %v409
    %v420 = vcombine.high %v416, %v416
    %v422 = vunpack.c.l.s4 1966171168
    %v423 = vunpack.c.0.s8 %v422
    %v424 = vlaneseq
    %v425 = vshrl.u32 %v424, 7
    %v426 = vsub.s32 %v423, %v425
    %v427 = vrot.slane %v24, %v426
    %v428 = vcombine.high %v427, %v427
    %v430 = vunpack.c.l.s4 1966171168
    %v431 = vunpack.c.0.s8 %v430
    %v432 = vlaneseq
    %v433 = vshrl.u32 %v432, 7
    %v434 = vsub.s32 %v431, %v433
    %v435 = vrot.slane %v427, %v434
    %v437 = vunpack.c.l.s4 1966171168
    %v438 = vunpack.c.0.s8 %v437
    %v439 = vlaneseq
    %v440 = vshrl.u32 %v439, 7
    %v441 = vsub.s32 %v438, %v440
    %v442 = vrot.slane %v428, %v441
    %v749 = vunpack.c.l.b16 %v25
    %v750 = vunpack.c.l.b16 %v26
    %v751 = vunpack.c.l.b16 %v27
    %v752 = vunpack.c.l.b16 %v28
    %v753 = vunpack.c.l.b16 %v29
    %v754 = vunpack.c.l.b16 %v30
    %v755 = vunpack.c.l.b16 %v31
    %v756 = vunpack.c.l.b16 %v32
    %v757 = vunpack.c.l.b16 %v33
    %v758 = vunpack.c.l.b16 %v34
    %v759 = vunpack.c.l.b16 %v35
    %v760 = vunpack.c.l.b16 %v36
    %v761 = vunpack.c.l.b16 %v37
    %v762 = vunpack.c.l.b16 %v38
    %v763 = vunpack.c.l.b16 %v39
    %v764 = vunpack.c.l.b16 %v40
    %v765 = vunpack.c.l.b16 %v41
    %v766 = vunpack.c.l.b16 %v42
    %v767 = vunpack.c.l.b16 %v43
    %v768 = vunpack.c.l.b16 %v44
    %v769 = vunpack.c.l.b16 %v45
    %v770 = vunpack.c.l.b16 %v46
    %v771 = vunpack.c.l.b16 %v47
    %v772 = vunpack.c.l.b16 %v48
    %v773 = vunpack.c.l.b16 %v49
    %v774 = vunpack.c.l.b16 %v50
    %v775 = vunpack.c.l.b16 %v51
    %v776 = vunpack.c.l.b16 %v52
    %v777 = vunpack.c.l.b16 %v53
    %v778 = vunpack.c.l.b16 %v54
    %v779 = vunpack.c.l.b16 %v55
    %v780 = vunpack.c.l.b16 %v56
    %v781 = vunpack.c.l.b16 %v57
    %v782 = vunpack.c.l.b16 %v58
    %v783 = vunpack.c.l.b16 %v59
    %v784 = vunpack.c.l.b16 %v60
    %v785 = vunpack.c.l.b16 %v61
    %v786 = vunpack.c.l.b16 %v62
    %v787 = vunpack.c.l.b16 %v63
    %v788 = vunpack.c.l.b16 %v64
    %v789 = vunpack.c.l.b16 %v65
    %v790 = vunpack.c.l.b16 %v66
    %v791 = vunpack.c.l.b16 %v67
    %v792 = vunpack.c.l.b16 %v68
    %v793 = vunpack.c.l.b16 %v69
    %v794 = vunpack.c.l.b16 %v70
    %v795 = vunpack.c.l.b16 %v71
    %v796 = vunpack.c.l.b16 %v72
    %v797 = vunpack.c.l.b16 %v73
    %v798 = vunpack.c.l.b16 %v74
    %v799 = vunpack.c.l.b16 %v75
    %v800 = vunpack.c.l.b16 %v76
    %v801 = vunpack.c.l.b16 %v77
    %v802 = vunpack.c.l.b16 %v78
    %v803 = vunpack.c.l.b16 %v79
    %v804 = vunpack.c.l.b16 %v80
    %v805 = vunpack.c.l.b16 %v81
    %v806 = vunpack.c.l.b16 %v82
    %v807 = vunpack.c.l.b16 %v83
    %v808 = vunpack.c.l.b16 %v84
    %v809 = vunpack.c.l.b16 %v85
    %v810 = vunpack.c.l.b16 %v86
    %v811 = vunpack.c.l.b16 %v87
    %v812 = vunpack.c.l.b16 %v88
    %v813 = vunpack.c.l.b16 %v89
    %v814 = vunpack.c.l.b16 %v90
    %v815 = vunpack.c.l.b16 %v91
    %v816 = vunpack.c.l.b16 %v92
    %v817 = vunpack.c.l.b16 %v93
    %v818 = vunpack.c.l.b16 %v94
    %v819 = vunpack.c.l.b16 %v95
    %v820 = vunpack.c.l.b16 %v96
    %v821 = vunpack.c.l.b16 %v97
    %v822 = vunpack.c.l.b16 %v98
    %v823 = vunpack.c.l.b16 %v99
    %v824 = vunpack.c.l.b16 %v100
    %v825 = vunpack.c.l.b16 %v101
    %v826 = vunpack.c.l.b16 %v102
    %v827 = vunpack.c.l.b16 %v103
    %v828 = vunpack.c.l.b16 %v104
    %v829 = vunpack.c.l.b16 %v105
    %v830 = vunpack.c.l.b16 %v106
    %v831 = vunpack.c.l.b16 %v107
    %v832 = vunpack.c.l.b16 %v108
    %v833 = vunpack.c.l.b16 %v109
    %v834 = vunpack.c.l.b16 %v110
    %v835 = vunpack.c.l.b16 %v111
    %v836 = vunpack.c.l.b16 %v112
    %v837 = vunpack.c.l.b16 %v113
    %v838 = vunpack.c.l.b16 %v114
    %v839 = vunpack.c.l.b16 %v115
    %v840 = vunpack.c.l.b16 %v116
    %v841 = vunpack.c.l.b16 %v117
    %v842 = vunpack.c.l.b16 %v118
    %v843 = vunpack.c.l.b16 %v119
    %v844 = vunpack.c.l.b16 %v120
    %v845 = vunpack.c.l.b16 %v121
    %v846 = vunpack.c.l.b16 %v122
    %v847 = vunpack.c.l.b16 %v123
    %v848 = vunpack.c.l.b16 %v124
    %v849 = vunpack.c.l.b16 %v125
    %v850 = vunpack.c.l.b16 %v126
    %v851 = vunpack.c.l.b16 %v127
    %v852 = vunpack.c.l.b16 %v128
    %v853 = vunpack.c.l.b16 %v129
    %v854 = vunpack.c.l.b16 %v130
    %v855 = vunpack.c.l.b16 %v131
    %v856 = vunpack.c.l.b16 %v132
    %v857 = vunpack.c.l.b16 %v133
    %v858 = vunpack.c.l.b16 %v134
    %v859 = vunpack.c.l.b16 %v135
    %v860 = vunpack.c.l.b16 %v136
    %v861 = vunpack.c.l.b16 %v137
    %v862 = vunpack.c.l.b16 %v138
    %v863 = vunpack.c.l.b16 %v139
    %v864 = vunpack.c.l.b16 %v140
    %v865 = vunpack.c.l.b16 %v141
    %v866 = vunpack.c.l.b16 %v142
    %v867 = vunpack.c.l.b16 %v143
    %v868 = vunpack.c.l.b16 %v144
    %v869 = vunpack.c.l.b16 %v145
    %v870 = vunpack.c.l.b16 %v146
    %v871 = vunpack.c.l.b16 %v147
    %v872 = vunpack.c.l.b16 %v148
    %v873 = vunpack.c.l.b16 %v149
    %v874 = vunpack.c.l.b16 %v150
    %v875 = vunpack.c.l.b16 %v151
    %v876 = vunpack.c.l.b16 %v152
    %v877 = vunpack.c.l.b16 %v153
    %v878 = vunpack.c.l.b16 %v154
    %v879 = vunpack.c.l.b16 %v155
    %v880 = vunpack.c.l.b16 %v156
    %v881 = vunpack.c.l.b16 %v157
    %v882 = vunpack.c.l.b16 %v158
    %v883 = vunpack.c.l.b16 %v159
    %v884 = vunpack.c.l.b16 %v160
    %v885 = vunpack.c.l.b16 %v161
    %v886 = vunpack.c.l.b16 %v162
    %v887 = vunpack.c.l.b16 %v163
    %v888 = vunpack.c.l.b16 %v164
    %v889 = vunpack.c.l.b16 %v165
    %v890 = vunpack.c.l.b16 %v166
    %v891 = vunpack.c.l.b16 %v167
    %v892 = vunpack.c.l.b16 %v168
    %v893 = vunpack.c.l.b16 %v169
    %v894 = vunpack.c.l.b16 %v170
    %v895 = vunpack.c.l.b16 %v171
    %v896 = vunpack.c.l.b16 %v172
    %v897 = vunpack.c.l.b16 %v173
    %v898 = vunpack.c.l.b16 %v174
    %v899 = vunpack.c.l.b16 %v175
    %v900 = vunpack.c.l.b16 %v176
    %v901 = vunpack.c.l.b16 %v177
    %v902 = vunpack.c.l.b16 %v178
    %v903 = vunpack.c.l.b16 %v179
    %v904 = vunpack.c.l.b16 %v180
    %v905 = vunpack.c.l.b16 %v181
    %v906 = vunpack.c.l.b16 %v182
    %v907 = vunpack.c.l.b16 %v183
    %v908 = vunpack.c.l.b16 %v184
    %v909 = vunpack.c.l.b16 %v185
    %v910 = vunpack.c.l.b16 %v186
    %v911 = vunpack.c.l.b16 %v187
    %v912 = vunpack.c.l.b16 %v188
    %v913 = vunpack.c.l.b16 %v189
    %v914 = vunpack.c.l.b16 %v190
    %v915 = vunpack.c.l.b16 %v191
    %v916 = vunpack.c.l.b16 %v192
    %v917 = vunpack.c.l.b16 %v193
    %v918 = vunpack.c.l.b16 %v194
    %v919 = vunpack.c.l.b16 %v195
    %v920 = vunpack.c.l.b16 %v196
    %v921 = vunpack.c.l.b16 %v197
    %v922 = vunpack.c.l.b16 %v198
    %v923 = vunpack.c.l.b16 %v199
    %v924 = vunpack.c.l.b16 %v200
    %v925 = vunpack.c.l.b16 %v201
    %v926 = vunpack.c.l.b16 %v202
    %v927 = vunpack.c.l.b16 %v203
    %v928 = vunpack.c.l.b16 %v204
    %v929 = vunpack.c.l.b16 %v205
    %v930 = vunpack.c.l.b16 %v206
    %v931 = vunpack.c.l.b16 %v207
    %v932 = vunpack.c.l.b16 %v208
    %v933 = vunpack.c.l.b16 %v209
    %v934 = vunpack.c.l.b16 %v210
    %v935 = vunpack.c.l.b16 %v211
    %v936 = vunpack.c.l.b16 %v212
    %v937 = vunpack.c.l.b16 %v213
    %v938 = vunpack.c.l.b16 %v214
    %v939 = vunpack.c.l.b16 %v215
    %v940 = vunpack.c.l.b16 %v216
    %v941 = vunpack.c.l.b16 %v217
    %v942 = vunpack.c.l.b16 %v218
    %v943 = vunpack.c.l.b16 %v219
    %v944 = vunpack.c.l.b16 %v220
    %v945 = vunpack.c.l.b16 %v221
    %v946 = vunpack.c.l.b16 %v222
    %v947 = vunpack.c.l.b16 %v223
    %v948 = vunpack.c.l.b16 %v224
    %v949 = vunpack.c.l.b16 %v225
    %v950 = vunpack.c.l.b16 %v226
    %v951 = vunpack.c.l.b16 %v227
    %v952 = vunpack.c.l.b16 %v228
    %v953 = vunpack.c.l.b16 %v229
    %v954 = vunpack.c.l.b16 %v230
    %v955 = vunpack.c.l.b16 %v231
    %v956 = vunpack.c.l.b16 %v232
    %v957 = vunpack.c.l.b16 %v233
    %v958 = vunpack.c.l.b16 %v234
    %v959 = vunpack.c.l.b16 %v235
    %v960 = vunpack.c.l.b16 %v236
    %v961 = vunpack.c.l.b16 %v237
    %v962 = vunpack.c.l.b16 %v238
    %v963 = vunpack.c.l.b16 %v239
    %v964 = vunpack.c.l.b16 %v240
    %v965 = vunpack.c.l.b16 %v241
    %v966 = vunpack.c.l.b16 %v242
    %v967 = vunpack.c.l.b16 %v243
    %v968 = vunpack.c.l.b16 %v244
    %v969 = vunpack.c.l.b16 %v245
    %v970 = vunpack.c.l.b16 %v246
    %v971 = vunpack.c.l.b16 %v247
    %v972 = vunpack.c.l.b16 %v248
    %v973 = vunpack.c.l.b16 %v249
    %v974 = vunpack.c.l.b16 %v250
    %v975 = vunpack.c.l.b16 %v251
    %v976 = vunpack.c.l.b16 %v252
    %v977 = vunpack.c.l.b16 %v253
    %v978 = vunpack.c.l.b16 %v254
    %v979 = vunpack.c.l.b16 %v255
    %v980 = vunpack.c.l.b16 %v256
    %v981 = vunpack.c.l.b16 %v257
    %v982 = vunpack.c.l.b16 %v258
    %v983 = vunpack.c.l.b16 %v259
    %v984 = vunpack.c.l.b16 %v260
    %v985 = vunpack.c.l.b16 %v261
    %v986 = vunpack.c.l.b16 %v262
    %v987 = vunpack.c.l.b16 %v263
    %v988 = vunpack.c.l.b16 %v264
    %v989 = vunpack.c.l.b16 %v265
    %v990 = vunpack.c.l.b16 %v266
    %v991 = vunpack.c.l.b16 %v267
    %v992 = vunpack.c.l.b16 %v268
    %v993 = vunpack.c.l.b16 %v269
    %v994 = vunpack.c.l.b16 %v270
    %v995 = vunpack.c.l.b16 %v271
    %v996 = vunpack.c.l.b16 %v272
    %v997 = vunpack.c.l.b16 %v273
    %v998 = vunpack.c.l.b16 %v274
    %v999 = vunpack.c.l.b16 %v275
    %v1000 = vunpack.c.l.b16 %v276
    %v1001 = vunpack.c.l.b16 %v277
    %v1002 = vunpack.c.l.b16 %v278
    %v1003 = vunpack.c.l.b16 %v279
    %v1004 = vunpack.c.l.b16 %v280
    %v1005 = vunpack.c.l.b16 %v281
    %v1006 = vunpack.c.l.b16 %v282
    %v1007 = vunpack.c.l.b16 %v283
    %v1008 = vunpack.c.l.b16 %v284
    %v1009 = vunpack.c.l.b16 %v285
    %v1010 = vunpack.c.l.b16 %v286
    %v1011 = vunpack.c.l.b16 %v287
    %v1012 = vunpack.c.l.b16 %v288
    %v1013 = vunpack.c.l.b16 %v289
    %v1014 = vunpack.c.l.b16 %v290
    %v1015 = vunpack.c.l.b16 %v291
    %v1016 = vunpack.c.l.b16 %v292
    %v1017 = vunpack.c.l.b16 %v293
    %v1018 = vunpack.c.l.b16 %v294
    %v1019 = vunpack.c.l.b16 %v295
    %v1020 = vunpack.c.l.b16 %v296
    %v1021 = vunpack.c.l.b16 %v297
    %v1022 = vunpack.c.l.b16 %v298
    %v1023 = vunpack.c.l.b16 %v299
    %v1024 = vunpack.c.l.b16 %v300
    %v1025 = vunpack.c.l.b16 %v301
    %v1026 = vunpack.c.l.b16 %v302
    %v1027 = vunpack.c.l.b16 %v303
    %v1028 = vunpack.c.l.b16 %v304
    %v1029 = vunpack.c.l.b16 %v305
    %v1030 = vunpack.c.l.b16 %v306
    %v1031 = vunpack.c.l.b16 %v307
    %v1032 = vunpack.c.l.b16 %v308
    %v1033 = vunpack.c.l.b16 %v309
    %v1034 = vunpack.c.l.b16 %v310
    %v1035 = vunpack.c.l.b16 %v311
    %v1036 = vunpack.c.l.b16 %v312
    %v1037 = vpack.c.b16 %v750, %v749
    %v1038 = vpack.c.b16 %v752, %v751
    %v1039 = vpack.c.b16 %v754, %v753
    %v1040 = vpack.c.b16 %v756, %v755
    %v1041 = vpack.c.b16 %v758, %v757
    %v1042 = vpack.c.b16 %v760, %v759
    %v1043 = vpack.c.b16 %v762, %v761
    %v1044 = vpack.c.b16 %v764, %v763
    %v1045 = vpack.c.b16 %v766, %v765
    %v1046 = vpack.c.b16 %v768, %v767
    %v1047 = vpack.c.b16 %v770, %v769
    %v1048 = vpack.c.b16 %v772, %v771
    %v1049 = vpack.c.b16 %v774, %v773
    %v1050 = vpack.c.b16 %v776, %v775
    %v1051 = vpack.c.b16 %v778, %v777
    %v1052 = vpack.c.b16 %v780, %v779
    %v1053 = vpack.c.b16 %v782, %v781
    %v1054 = vpack.c.b16 %v784, %v783
    %v1055 = vpack.c.b16 %v786, %v785
    %v1056 = vpack.c.b16 %v788, %v787
    %v1057 = vpack.c.b16 %v790, %v789
    %v1058 = vpack.c.b16 %v792, %v791
    %v1059 = vpack.c.b16 %v794, %v793
    %v1060 = vpack.c.b16 %v796, %v795
    %v1061 = vpack.c.b16 %v798, %v797
    %v1062 = vpack.c.b16 %v800, %v799
    %v1063 = vpack.c.b16 %v802, %v801
    %v1064 = vpack.c.b16 %v804, %v803
    %v1065 = vpack.c.b16 %v806, %v805
    %v1066 = vpack.c.b16 %v808, %v807
    %v1067 = vpack.c.b16 %v810, %v809
    %v1068 = vpack.c.b16 %v812, %v811
    %v1069 = vpack.c.b16 %v814, %v813
    %v1070 = vpack.c.b16 %v816, %v815
    %v1071 = vpack.c.b16 %v818, %v817
    %v1072 = vpack.c.b16 %v820, %v819
    %v1073 = vpack.c.b16 %v822, %v821
    %v1074 = vpack.c.b16 %v824, %v823
    %v1075 = vpack.c.b16 %v826, %v825
    %v1076 = vpack.c.b16 %v828, %v827
    %v1077 = vpack.c.b16 %v830, %v829
    %v1078 = vpack.c.b16 %v832, %v831
    %v1079 = vpack.c.b16 %v834, %v833
    %v1080 = vpack.c.b16 %v836, %v835
    %v1081 = vpack.c.b16 %v838, %v837
    %v1082 = vpack.c.b16 %v840, %v839
    %v1083 = vpack.c.b16 %v842, %v841
    %v1084 = vpack.c.b16 %v844, %v843
    %v1085 = vpack.c.b16 %v846, %v845
    %v1086 = vpack.c.b16 %v848, %v847
    %v1087 = vpack.c.b16 %v850, %v849
    %v1088 = vpack.c.b16 %v852, %v851
    %v1089 = vpack.c.b16 %v854, %v853
    %v1090 = vpack.c.b16 %v856, %v855
    %v1091 = vpack.c.b16 %v858, %v857
    %v1092 = vpack.c.b16 %v860, %v859
    %v1093 = vpack.c.b16 %v862, %v861
    %v1094 = vpack.c.b16 %v864, %v863
    %v1095 = vpack.c.b16 %v866, %v865
    %v1096 = vpack.c.b16 %v868, %v867
    %v1097 = vpack.c.b16 %v870, %v869
    %v1098 = vpack.c.b16 %v872, %v871
    %v1099 = vpack.c.b16 %v874, %v873
    %v1100 = vpack.c.b16 %v876, %v875
    %v1101 = vpack.c.b16 %v878, %v877
    %v1102 = vpack.c.b16 %v880, %v879
    %v1103 = vpack.c.b16 %v882, %v881
    %v1104 = vpack.c.b16 %v884, %v883
    %v1105 = vpack.c.b16 %v886, %v885
    %v1106 = vpack.c.b16 %v888, %v887
    %v1107 = vpack.c.b16 %v890, %v889
    %v1108 = vpack.c.b16 %v892, %v891
    %v1109 = vpack.c.b16 %v894, %v893
    %v1110 = vpack.c.b16 %v896, %v895
    %v1111 = vpack.c.b16 %v898, %v897
    %v1112 = vpack.c.b16 %v900, %v899
    %v1113 = vpack.c.b16 %v902, %v901
    %v1114 = vpack.c.b16 %v904, %v903
    %v1115 = vpack.c.b16 %v906, %v905
    %v1116 = vpack.c.b16 %v908, %v907
    %v1117 = vpack.c.b16 %v910, %v909
    %v1118 = vpack.c.b16 %v912, %v911
    %v1119 = vpack.c.b16 %v914, %v913
    %v1120 = vpack.c.b16 %v916, %v915
    %v1121 = vpack.c.b16 %v918, %v917
    %v1122 = vpack.c.b16 %v920, %v919
    %v1123 = vpack.c.b16 %v922, %v921
    %v1124 = vpack.c.b16 %v924, %v923
    %v1125 = vpack.c.b16 %v926, %v925
    %v1126 = vpack.c.b16 %v928, %v927
    %v1127 = vpack.c.b16 %v930, %v929
    %v1128 = vpack.c.b16 %v932, %v931
    %v1129 = vpack.c.b16 %v934, %v933
    %v1130 = vpack.c.b16 %v936, %v935
    %v1131 = vpack.c.b16 %v938, %v937
    %v1132 = vpack.c.b16 %v940, %v939
    %v1133 = vpack.c.b16 %v942, %v941
    %v1134 = vpack.c.b16 %v944, %v943
    %v1135 = vpack.c.b16 %v946, %v945
    %v1136 = vpack.c.b16 %v948, %v947
    %v1137 = vpack.c.b16 %v950, %v949
    %v1138 = vpack.c.b16 %v952, %v951
    %v1139 = vpack.c.b16 %v954, %v953
    %v1140 = vpack.c.b16 %v956, %v955
    %v1141 = vpack.c.b16 %v958, %v957
    %v1142 = vpack.c.b16 %v960, %v959
    %v1143 = vpack.c.b16 %v962, %v961
    %v1144 = vpack.c.b16 %v964, %v963
    %v1145 = vpack.c.b16 %v966, %v965
    %v1146 = vpack.c.b16 %v968, %v967
    %v1147 = vpack.c.b16 %v970, %v969
    %v1148 = vpack.c.b16 %v972, %v971
    %v1149 = vpack.c.b16 %v974, %v973
    %v1150 = vpack.c.b16 %v976, %v975
    %v1151 = vpack.c.b16 %v978, %v977
    %v1152 = vpack.c.b16 %v980, %v979
    %v1153 = vpack.c.b16 %v982, %v981
    %v1154 = vpack.c.b16 %v984, %v983
    %v1155 = vpack.c.b16 %v986, %v985
    %v1156 = vpack.c.b16 %v988, %v987
    %v1157 = vpack.c.b16 %v990, %v989
    %v1158 = vpack.c.b16 %v992, %v991
    %v1159 = vpack.c.b16 %v994, %v993
    %v1160 = vpack.c.b16 %v996, %v995
    %v1161 = vpack.c.b16 %v998, %v997
    %v1162 = vpack.c.b16 %v1000, %v999
    %v1163 = vpack.c.b16 %v1002, %v1001
    %v1164 = vpack.c.b16 %v1004, %v1003
    %v1165 = vpack.c.b16 %v1006, %v1005
    %v1166 = vpack.c.b16 %v1008, %v1007
    %v1167 = vpack.c.b16 %v1010, %v1009
    %v1168 = vpack.c.b16 %v1012, %v1011
    %v1169 = vpack.c.b16 %v1014, %v1013
    %v1170 = vpack.c.b16 %v1016, %v1015
    %v1171 = vpack.c.b16 %v1018, %v1017
    %v1172 = vpack.c.b16 %v1020, %v1019
    %v1173 = vpack.c.b16 %v1022, %v1021
    %v1174 = vpack.c.b16 %v1024, %v1023
    %v1175 = vpack.c.b16 %v1026, %v1025
    %v1176 = vpack.c.b16 %v1028, %v1027
    %v1177 = vpack.c.b16 %v1030, %v1029
    %v1178 = vpack.c.b16 %v1032, %v1031
    %v1179 = vpack.c.b16 %v1034, %v1033
    %v1180 = vpack.c.b16 %v1036, %v1035
    %1325 = vmatprep.subr.bf16.mxu0 0
    %1326 = vmatpush1.bf16.msra.mxu0 %v1044
    %1327 = vmatprep.subr.bf16.mxu0 0
    %1328 = vmatpush1.bf16.msra.mxu0 %v1043
    %1329 = vmatprep.subr.bf16.mxu0 0
    %1330 = vmatpush1.bf16.msra.mxu0 %v1042
    %1331 = vmatprep.subr.bf16.mxu0 0
    %1332 = vmatpush1.bf16.msra.mxu0 %v1041
    %1333 = vmatprep.subr.bf16.mxu0 0
    %1334 = vmatpush1.bf16.msra.mxu0 %v1040
    %1335 = vmatprep.subr.bf16.mxu0 0
    %1336 = vmatpush1.bf16.msra.mxu0 %v1039
    %1337 = vmatprep.subr.bf16.mxu0 0
    %1338 = vmatpush1.bf16.msra.mxu0 %v1038
    %1339 = vmatprep.subr.bf16.mxu0 0
    %1340 = vmatpush1.bf16.msra.mxu0 %v1037
    %1341 = vmatprep.subr.bf16.mxu0 0
    %1342 = vmatpush2.bf16.msra.mxu0 %v1052
    %1343 = vmatprep.subr.bf16.mxu0 0
    %1344 = vmatpush2.bf16.msra.mxu0 %v1051
    %1345 = vmatprep.subr.bf16.mxu0 0
    %1346 = vmatpush2.bf16.msra.mxu0 %v1050
    %1347 = vmatprep.subr.bf16.mxu0 0
    %1348 = vmatpush2.bf16.msra.mxu0 %v1049
    %1349 = vmatprep.subr.bf16.mxu0 0
    %1350 = vmatpush2.bf16.msra.mxu0 %v1048
    %1351 = vmatprep.subr.bf16.mxu0 0
    %1352 = vmatpush2.bf16.msra.mxu0 %v1047
    %1353 = vmatprep.subr.bf16.mxu0 0
    %1354 = vmatpush2.bf16.msra.mxu0 %v1046
    %1355 = vmatprep.subr.bf16.mxu0 0
    %1356 = vmatpush2.bf16.msra.mxu0 %v1045
    %1357 = vmatprep.mubr.bf16.mxu0 %v360
    %1358 = vmatmul.mubr.bf16.gmra.mxu0 %v346
    %v1359 = vpop.f32.mrf.mxu0
    %v1360 = vadd.f32 %v318, %v1359
    %v1361 = vpop.f32.mrf.mxu0
    %v1362 = vpop.f32.mrf.mxu0
    %v1363 = vpop.f32.mrf.mxu0
    %1364 = vdwg.mxu0
    %1365 = vmatprep.subr.bf16.mxu0 0
    %1366 = vmatpush1.bf16.msra.mxu0 %v1060
    %1367 = vmatprep.subr.bf16.mxu0 0
    %1368 = vmatpush1.bf16.msra.mxu0 %v1059
    %1369 = vmatprep.subr.bf16.mxu0 0
    %1370 = vmatpush1.bf16.msra.mxu0 %v1058
    %1371 = vmatprep.subr.bf16.mxu0 0
    %1372 = vmatpush1.bf16.msra.mxu0 %v1057
    %1373 = vmatprep.subr.bf16.mxu0 0
    %1374 = vmatpush1.bf16.msra.mxu0 %v1056
    %1375 = vmatprep.subr.bf16.mxu0 0
    %1376 = vmatpush1.bf16.msra.mxu0 %v1055
    %1377 = vmatprep.subr.bf16.mxu0 0
    %1378 = vmatpush1.bf16.msra.mxu0 %v1054
    %1379 = vmatprep.subr.bf16.mxu0 0
    %1380 = vmatpush1.bf16.msra.mxu0 %v1053
    %1381 = vmatprep.subr.bf16.mxu0 0
    %1382 = vmatpush2.bf16.msra.mxu0 %v1068
    %1383 = vmatprep.subr.bf16.mxu0 0
    %1384 = vmatpush2.bf16.msra.mxu0 %v1067
    %1385 = vmatprep.subr.bf16.mxu0 0
    %1386 = vmatpush2.bf16.msra.mxu0 %v1066
    %1387 = vmatprep.subr.bf16.mxu0 0
    %1388 = vmatpush2.bf16.msra.mxu0 %v1065
    %1389 = vmatprep.subr.bf16.mxu0 0
    %1390 = vmatpush2.bf16.msra.mxu0 %v1064
    %1391 = vmatprep.subr.bf16.mxu0 0
    %1392 = vmatpush2.bf16.msra.mxu0 %v1063
    %1393 = vmatprep.subr.bf16.mxu0 0
    %1394 = vmatpush2.bf16.msra.mxu0 %v1062
    %1395 = vmatprep.subr.bf16.mxu0 0
    %1396 = vmatpush2.bf16.msra.mxu0 %v1061
    %1397 = vmatprep.mubr.bf16.mxu0 %v370
    %1398 = vmatmul.mubr.bf16.gmra.mxu0 %v368
    %v1399 = vpop.f32.mrf.mxu0
    %v1400 = vadd.f32 %v1360, %v1399
    %v1401 = vpop.f32.mrf.mxu0
    %v1402 = vpop.f32.mrf.mxu0
    %v1403 = vpop.f32.mrf.mxu0
    %1404 = vdwg.mxu0
    %1405 = vmatprep.subr.bf16.mxu0 0
    %1406 = vmatpush1.bf16.msra.mxu0 %v1076
    %1407 = vmatprep.subr.bf16.mxu0 0
    %1408 = vmatpush1.bf16.msra.mxu0 %v1075
    %1409 = vmatprep.subr.bf16.mxu0 0
    %1410 = vmatpush1.bf16.msra.mxu0 %v1074
    %1411 = vmatprep.subr.bf16.mxu0 0
    %1412 = vmatpush1.bf16.msra.mxu0 %v1073
    %1413 = vmatprep.subr.bf16.mxu0 0
    %1414 = vmatpush1.bf16.msra.mxu0 %v1072
    %1415 = vmatprep.subr.bf16.mxu0 0
    %1416 = vmatpush1.bf16.msra.mxu0 %v1071
    %1417 = vmatprep.subr.bf16.mxu0 0
    %1418 = vmatpush1.bf16.msra.mxu0 %v1070
    %1419 = vmatprep.subr.bf16.mxu0 0
    %1420 = vmatpush1.bf16.msra.mxu0 %v1069
    %1421 = vmatprep.subr.bf16.mxu0 0
    %1422 = vmatpush2.bf16.msra.mxu0 %v1084
    %1423 = vmatprep.subr.bf16.mxu0 0
    %1424 = vmatpush2.bf16.msra.mxu0 %v1083
    %1425 = vmatprep.subr.bf16.mxu0 0
    %1426 = vmatpush2.bf16.msra.mxu0 %v1082
    %1427 = vmatprep.subr.bf16.mxu0 0
    %1428 = vmatpush2.bf16.msra.mxu0 %v1081
    %1429 = vmatprep.subr.bf16.mxu0 0
    %1430 = vmatpush2.bf16.msra.mxu0 %v1080
    %1431 = vmatprep.subr.bf16.mxu0 0
    %1432 = vmatpush2.bf16.msra.mxu0 %v1079
    %1433 = vmatprep.subr.bf16.mxu0 0
    %1434 = vmatpush2.bf16.msra.mxu0 %v1078
    %1435 = vmatprep.subr.bf16.mxu0 0
    %1436 = vmatpush2.bf16.msra.mxu0 %v1077
    %1437 = vmatprep.mubr.bf16.mxu0 %v367
    %1438 = vmatmul.mubr.bf16.gmra.mxu0 %v353
    %v1439 = vpop.f32.mrf.mxu0
    %v1440 = vadd.f32 %v1400, %v1439
    %v1441 = vpop.f32.mrf.mxu0
    %v1442 = vpop.f32.mrf.mxu0
    %v1443 = vpop.f32.mrf.mxu0
    %1444 = vdwg.mxu0
    %1445 = vmatprep.subr.bf16.mxu0 0
    %1446 = vmatpush1.bf16.msra.mxu0 %v1092
    %1447 = vmatprep.subr.bf16.mxu0 0
    %1448 = vmatpush1.bf16.msra.mxu0 %v1091
    %1449 = vmatprep.subr.bf16.mxu0 0
    %1450 = vmatpush1.bf16.msra.mxu0 %v1090
    %1451 = vmatprep.subr.bf16.mxu0 0
    %1452 = vmatpush1.bf16.msra.mxu0 %v1089
    %1453 = vmatprep.subr.bf16.mxu0 0
    %1454 = vmatpush1.bf16.msra.mxu0 %v1088
    %1455 = vmatprep.subr.bf16.mxu0 0
    %1456 = vmatpush1.bf16.msra.mxu0 %v1087
    %1457 = vmatprep.subr.bf16.mxu0 0
    %1458 = vmatpush1.bf16.msra.mxu0 %v1086
    %1459 = vmatprep.subr.bf16.mxu0 0
    %1460 = vmatpush1.bf16.msra.mxu0 %v1085
    %1461 = vmatprep.subr.bf16.mxu0 0
    %1462 = vmatpush2.bf16.msra.mxu0 %v1100
    %1463 = vmatprep.subr.bf16.mxu0 0
    %1464 = vmatpush2.bf16.msra.mxu0 %v1099
    %1465 = vmatprep.subr.bf16.mxu0 0
    %1466 = vmatpush2.bf16.msra.mxu0 %v1098
    %1467 = vmatprep.subr.bf16.mxu0 0
    %1468 = vmatpush2.bf16.msra.mxu0 %v1097
    %1469 = vmatprep.subr.bf16.mxu0 0
    %1470 = vmatpush2.bf16.msra.mxu0 %v1096
    %1471 = vmatprep.subr.bf16.mxu0 0
    %1472 = vmatpush2.bf16.msra.mxu0 %v1095
    %1473 = vmatprep.subr.bf16.mxu0 0
    %1474 = vmatpush2.bf16.msra.mxu0 %v1094
    %1475 = vmatprep.subr.bf16.mxu0 0
    %1476 = vmatpush2.bf16.msra.mxu0 %v1093
    %1477 = vmatprep.mubr.bf16.mxu0 %v371
    %1478 = vmatmul.mubr.bf16.gmra.mxu0 %v369
    %v1479 = vpop.f32.mrf.mxu0
    %v1480 = vadd.f32 %v1440, %v1479
    %v1481 = vpop.f32.mrf.mxu0
    %v1482 = vpop.f32.mrf.mxu0
    %v1483 = vpop.f32.mrf.mxu0
    %1484 = vdwg.mxu0
    %1485 = vmatprep.subr.bf16.mxu0 0
    %1486 = vmatpush1.bf16.msra.mxu0 %v1108
    %1487 = vmatprep.subr.bf16.mxu0 0
    %1488 = vmatpush1.bf16.msra.mxu0 %v1107
    %1489 = vmatprep.subr.bf16.mxu0 0
    %1490 = vmatpush1.bf16.msra.mxu0 %v1106
    %1491 = vmatprep.subr.bf16.mxu0 0
    %1492 = vmatpush1.bf16.msra.mxu0 %v1105
    %1493 = vmatprep.subr.bf16.mxu0 0
    %1494 = vmatpush1.bf16.msra.mxu0 %v1104
    %1495 = vmatprep.subr.bf16.mxu0 0
    %1496 = vmatpush1.bf16.msra.mxu0 %v1103
    %1497 = vmatprep.subr.bf16.mxu0 0
    %1498 = vmatpush1.bf16.msra.mxu0 %v1102
    %1499 = vmatprep.subr.bf16.mxu0 0
    %1500 = vmatpush1.bf16.msra.mxu0 %v1101
    %1501 = vmatprep.subr.bf16.mxu0 0
    %1502 = vmatpush2.bf16.msra.mxu0 %v1116
    %1503 = vmatprep.subr.bf16.mxu0 0
    %1504 = vmatpush2.bf16.msra.mxu0 %v1115
    %1505 = vmatprep.subr.bf16.mxu0 0
    %1506 = vmatpush2.bf16.msra.mxu0 %v1114
    %1507 = vmatprep.subr.bf16.mxu0 0
    %1508 = vmatpush2.bf16.msra.mxu0 %v1113
    %1509 = vmatprep.subr.bf16.mxu0 0
    %1510 = vmatpush2.bf16.msra.mxu0 %v1112
    %1511 = vmatprep.subr.bf16.mxu0 0
    %1512 = vmatpush2.bf16.msra.mxu0 %v1111
    %1513 = vmatprep.subr.bf16.mxu0 0
    %1514 = vmatpush2.bf16.msra.mxu0 %v1110
    %1515 = vmatprep.subr.bf16.mxu0 0
    %1516 = vmatpush2.bf16.msra.mxu0 %v1109
    %1517 = vmatprep.mubr.bf16.mxu0 %v409
    %1518 = vmatmul.mubr.bf16.gmra.mxu0 %v395
    %v1519 = vpop.f32.mrf.mxu0
    %v1520 = vadd.f32 %v1480, %v1519
    %v1521 = vpop.f32.mrf.mxu0
    %v1522 = vpop.f32.mrf.mxu0
    %v1523 = vpop.f32.mrf.mxu0
    %1524 = vdwg.mxu0
    %1525 = vmatprep.subr.bf16.mxu0 0
    %1526 = vmatpush1.bf16.msra.mxu0 %v1124
    %1527 = vmatprep.subr.bf16.mxu0 0
    %1528 = vmatpush1.bf16.msra.mxu0 %v1123
    %1529 = vmatprep.subr.bf16.mxu0 0
    %1530 = vmatpush1.bf16.msra.mxu0 %v1122
    %1531 = vmatprep.subr.bf16.mxu0 0
    %1532 = vmatpush1.bf16.msra.mxu0 %v1121
    %1533 = vmatprep.subr.bf16.mxu0 0
    %1534 = vmatpush1.bf16.msra.mxu0 %v1120
    %1535 = vmatprep.subr.bf16.mxu0 0
    %1536 = vmatpush1.bf16.msra.mxu0 %v1119
    %1537 = vmatprep.subr.bf16.mxu0 0
    %1538 = vmatpush1.bf16.msra.mxu0 %v1118
    %1539 = vmatprep.subr.bf16.mxu0 0
    %1540 = vmatpush1.bf16.msra.mxu0 %v1117
    %1541 = vmatprep.subr.bf16.mxu0 0
    %1542 = vmatpush2.bf16.msra.mxu0 %v1132
    %1543 = vmatprep.subr.bf16.mxu0 0
    %1544 = vmatpush2.bf16.msra.mxu0 %v1131
    %1545 = vmatprep.subr.bf16.mxu0 0
    %1546 = vmatpush2.bf16.msra.mxu0 %v1130
    %1547 = vmatprep.subr.bf16.mxu0 0
    %1548 = vmatpush2.bf16.msra.mxu0 %v1129
    %1549 = vmatprep.subr.bf16.mxu0 0
    %1550 = vmatpush2.bf16.msra.mxu0 %v1128
    %1551 = vmatprep.subr.bf16.mxu0 0
    %1552 = vmatpush2.bf16.msra.mxu0 %v1127
    %1553 = vmatprep.subr.bf16.mxu0 0
    %1554 = vmatpush2.bf16.msra.mxu0 %v1126
    %1555 = vmatprep.subr.bf16.mxu0 0
    %1556 = vmatpush2.bf16.msra.mxu0 %v1125
    %1557 = vmatprep.mubr.bf16.mxu0 %v419
    %1558 = vmatmul.mubr.bf16.gmra.mxu0 %v417
    %v1559 = vpop.f32.mrf.mxu0
    %v1560 = vadd.f32 %v1520, %v1559
    %v1561 = vpop.f32.mrf.mxu0
    %v1562 = vpop.f32.mrf.mxu0
    %v1563 = vpop.f32.mrf.mxu0
    %1564 = vdwg.mxu0
    %1565 = vmatprep.subr.bf16.mxu0 0
    %1566 = vmatpush1.bf16.msra.mxu0 %v1140
    %1567 = vmatprep.subr.bf16.mxu0 0
    %1568 = vmatpush1.bf16.msra.mxu0 %v1139
    %1569 = vmatprep.subr.bf16.mxu0 0
    %1570 = vmatpush1.bf16.msra.mxu0 %v1138
    %1571 = vmatprep.subr.bf16.mxu0 0
    %1572 = vmatpush1.bf16.msra.mxu0 %v1137
    %1573 = vmatprep.subr.bf16.mxu0 0
    %1574 = vmatpush1.bf16.msra.mxu0 %v1136
    %1575 = vmatprep.subr.bf16.mxu0 0
    %1576 = vmatpush1.bf16.msra.mxu0 %v1135
    %1577 = vmatprep.subr.bf16.mxu0 0
    %1578 = vmatpush1.bf16.msra.mxu0 %v1134
    %1579 = vmatprep.subr.bf16.mxu0 0
    %1580 = vmatpush1.bf16.msra.mxu0 %v1133
    %1581 = vmatprep.subr.bf16.mxu0 0
    %1582 = vmatpush2.bf16.msra.mxu0 %v1148
    %1583 = vmatprep.subr.bf16.mxu0 0
    %1584 = vmatpush2.bf16.msra.mxu0 %v1147
    %1585 = vmatprep.subr.bf16.mxu0 0
    %1586 = vmatpush2.bf16.msra.mxu0 %v1146
    %1587 = vmatprep.subr.bf16.mxu0 0
    %1588 = vmatpush2.bf16.msra.mxu0 %v1145
    %1589 = vmatprep.subr.bf16.mxu0 0
    %1590 = vmatpush2.bf16.msra.mxu0 %v1144
    %1591 = vmatprep.subr.bf16.mxu0 0
    %1592 = vmatpush2.bf16.msra.mxu0 %v1143
    %1593 = vmatprep.subr.bf16.mxu0 0
    %1594 = vmatpush2.bf16.msra.mxu0 %v1142
    %1595 = vmatprep.subr.bf16.mxu0 0
    %1596 = vmatpush2.bf16.msra.mxu0 %v1141
    %1597 = vmatprep.mubr.bf16.mxu0 %v416
    %1598 = vmatmul.mubr.bf16.gmra.mxu0 %v402
    %v1599 = vpop.f32.mrf.mxu0
    %v1600 = vadd.f32 %v1560, %v1599
    %v1601 = vpop.f32.mrf.mxu0
    %v1602 = vpop.f32.mrf.mxu0
    %v1603 = vpop.f32.mrf.mxu0
    %1604 = vdwg.mxu0
    %1605 = vmatprep.subr.bf16.mxu0 0
    %1606 = vmatpush1.bf16.msra.mxu0 %v1156
    %1607 = vmatprep.subr.bf16.mxu0 0
    %1608 = vmatpush1.bf16.msra.mxu0 %v1155
    %1609 = vmatprep.subr.bf16.mxu0 0
    %1610 = vmatpush1.bf16.msra.mxu0 %v1154
    %1611 = vmatprep.subr.bf16.mxu0 0
    %1612 = vmatpush1.bf16.msra.mxu0 %v1153
    %1613 = vmatprep.subr.bf16.mxu0 0
    %1614 = vmatpush1.bf16.msra.mxu0 %v1152
    %1615 = vmatprep.subr.bf16.mxu0 0
    %1616 = vmatpush1.bf16.msra.mxu0 %v1151
    %1617 = vmatprep.subr.bf16.mxu0 0
    %1618 = vmatpush1.bf16.msra.mxu0 %v1150
    %1619 = vmatprep.subr.bf16.mxu0 0
    %1620 = vmatpush1.bf16.msra.mxu0 %v1149
    %1621 = vmatprep.subr.bf16.mxu0 0
    %1622 = vmatpush2.bf16.msra.mxu0 %v1164
    %1623 = vmatprep.subr.bf16.mxu0 0
    %1624 = vmatpush2.bf16.msra.mxu0 %v1163
    %1625 = vmatprep.subr.bf16.mxu0 0
    %1626 = vmatpush2.bf16.msra.mxu0 %v1162
    %1627 = vmatprep.subr.bf16.mxu0 0
    %1628 = vmatpush2.bf16.msra.mxu0 %v1161
    %1629 = vmatprep.subr.bf16.mxu0 0
    %1630 = vmatpush2.bf16.msra.mxu0 %v1160
    %1631 = vmatprep.subr.bf16.mxu0 0
    %1632 = vmatpush2.bf16.msra.mxu0 %v1159
    %1633 = vmatprep.subr.bf16.mxu0 0
    %1634 = vmatpush2.bf16.msra.mxu0 %v1158
    %1635 = vmatprep.subr.bf16.mxu0 0
    %1636 = vmatpush2.bf16.msra.mxu0 %v1157
    %1637 = vmatprep.mubr.bf16.mxu0 %v420
    %1638 = vmatmul.mubr.bf16.gmra.mxu0 %v418
    %v1639 = vpop.f32.mrf.mxu0
    %v1640 = vadd.f32 %v1600, %v1639
    %v1641 = vpop.f32.mrf.mxu0
    %v1642 = vpop.f32.mrf.mxu0
    %v1643 = vpop.f32.mrf.mxu0
    %1644 = vdwg.mxu0
    %1645 = vmatprep.subr.bf16.mxu0 0
    %1646 = vmatpush1.bf16.msra.mxu0 %v1172
    %1647 = vmatprep.subr.bf16.mxu0 0
    %1648 = vmatpush1.bf16.msra.mxu0 %v1171
    %1649 = vmatprep.subr.bf16.mxu0 0
    %1650 = vmatpush1.bf16.msra.mxu0 %v1170
    %1651 = vmatprep.subr.bf16.mxu0 0
    %1652 = vmatpush1.bf16.msra.mxu0 %v1169
    %1653 = vmatprep.subr.bf16.mxu0 0
    %1654 = vmatpush1.bf16.msra.mxu0 %v1168
    %1655 = vmatprep.subr.bf16.mxu0 0
    %1656 = vmatpush1.bf16.msra.mxu0 %v1167
    %1657 = vmatprep.subr.bf16.mxu0 0
    %1658 = vmatpush1.bf16.msra.mxu0 %v1166
    %1659 = vmatprep.subr.bf16.mxu0 0
    %1660 = vmatpush1.bf16.msra.mxu0 %v1165
    %1661 = vmatprep.subr.bf16.mxu0 0
    %1662 = vmatpush2.bf16.msra.mxu0 %v1180
    %1663 = vmatprep.subr.bf16.mxu0 0
    %1664 = vmatpush2.bf16.msra.mxu0 %v1179
    %1665 = vmatprep.subr.bf16.mxu0 0
    %1666 = vmatpush2.bf16.msra.mxu0 %v1178
    %1667 = vmatprep.subr.bf16.mxu0 0
    %1668 = vmatpush2.bf16.msra.mxu0 %v1177
    %1669 = vmatprep.subr.bf16.mxu0 0
    %1670 = vmatpush2.bf16.msra.mxu0 %v1176
    %1671 = vmatprep.subr.bf16.mxu0 0
    %1672 = vmatpush2.bf16.msra.mxu0 %v1175
    %1673 = vmatprep.subr.bf16.mxu0 0
    %1674 = vmatpush2.bf16.msra.mxu0 %v1174
    %1675 = vmatprep.subr.bf16.mxu0 0
    %1676 = vmatpush2.bf16.msra.mxu0 %v1173
    %1677 = vmatprep.mubr.bf16.mxu0 %v442
    %1678 = vmatmul.mubr.bf16.gmra.mxu0 %v435
    %v1679 = vpop.f32.mrf.mxu0
    %v1680 = vadd.f32 %v1640, %v1679
    %v1681 = vpop.f32.mrf.mxu0
    %v1682 = vpop.f32.mrf.mxu0
    %v1683 = vpop.f32.mrf.mxu0
    %1684 = vdwg.mxu0
    %v1685 = vmax.f32 %v1680, 0.0
    %v1686 = vmin.f32 %v1685, 6.0
    %v1687 = vpack.c.bf16 %v1686, %v1686
    %v1688 = vld [vmem:[%s3] sm:$0xf]
    %v1689 = vld [vmem:[%s3 + $0x4] sm:$0xf]
    %v1690 = vld [vmem:[%s3 + $0x8] sm:$0xf]
    %v1691 = vld [vmem:[%s3 + $0xc] sm:$0xf]
    %v1692 = vld [vmem:[%s4] sm:$0x1]
    %v1694 = vlaneseq
    %v1695 = vshrl.u32 %v1694, 7
    %v1696 = vsub.s32 0, %v1695
    %v1697 = vrot.slane %v1692, %v1696
    %v1703 = vunpack.c.l.b16 %v1688
    %v1704 = vunpack.c.l.b16 %v1689
    %v1705 = vunpack.c.l.b16 %v1690
    %v1706 = vunpack.c.l.b16 %v1691
    %v1707 = vpack.c.b16 %v1704, %v1703
    %v1708 = vpack.c.b16 %v1706, %v1705
    %vm1711 = vcmask 261120
    %v1713 = vsel %vm1711, %v1687, 0
    %1715 = vmatprep.subr.bf16.mxu0 0
    %1716 = vmatpush1.bf16.msra.mxu0 0
    %1717 = vmatprep.subr.bf16.mxu0 0
    %1718 = vmatpush1.bf16.msra.mxu0 0
    %1719 = vmatprep.subr.bf16.mxu0 0
    %1720 = vmatpush1.bf16.msra.mxu0 0
    %1721 = vmatprep.subr.bf16.mxu0 0
    %1722 = vmatpush1.bf16.msra.mxu0 0
    %1723 = vmatprep.subr.bf16.mxu0 0
    %1724 = vmatpush1.bf16.msra.mxu0 0
    %1725 = vmatprep.subr.bf16.mxu0 0
    %1726 = vmatpush1.bf16.msra.mxu0 0
    %1727 = vmatprep.subr.bf16.mxu0 0
    %1728 = vmatpush1.bf16.msra.mxu0 %v1708
    %1729 = vmatprep.subr.bf16.mxu0 0
    %1730 = vmatpush1.bf16.msra.mxu0 %v1707
    %1731 = vmatprep.subr.bf16.mxu0 0
    %1732 = vmatpush2.bf16.msra.mxu0 0
    %1733 = vmatprep.subr.bf16.mxu0 0
    %1734 = vmatpush2.bf16.msra.mxu0 0
    %1735 = vmatprep.subr.bf16.mxu0 0
    %1736 = vmatpush2.bf16.msra.mxu0 0
    %1737 = vmatprep.subr.bf16.mxu0 0
    %1738 = vmatpush2.bf16.msra.mxu0 0
    %1739 = vmatprep.subr.bf16.mxu0 0
    %1740 = vmatpush2.bf16.msra.mxu0 0
    %1741 = vmatprep.subr.bf16.mxu0 0
    %1742 = vmatpush2.bf16.msra.mxu0 0
    %1743 = vmatprep.subr.bf16.mxu0 0
    %1744 = vmatpush2.bf16.msra.mxu0 0
    %1745 = vmatprep.subr.bf16.mxu0 0
    %1746 = vmatpush2.bf16.msra.mxu0 0
    %1747 = vmatprep.mubr.bf16.mxu0 0
    %1748 = vmatmul.mubr.bf16.gmra.mxu0 %v1713
    %v1749 = vpop.f32.mrf.mxu0
    %v1750 = vadd.f32 %v1697, %v1749
    %v1751 = vpop.f32.mrf.mxu0
    %v1752 = vpop.f32.mrf.mxu0
    %v1753 = vpop.f32.mrf.mxu0
    %1754 = vdwg.mxu0
    %vm1755 = vcmask 74752
    %v1756 = vsel %vm1755, %v1750, -inf
    %1757 = vmax.xlane.f32.xlu0 %v1756
    %v1758 = vpop.xlane.xlu0 %1757
    %v1759 = vsub.f32 %v1750, %v1758
    %v1760 = vmul.f32 %v1759, 1.442695
    %v1761 = vpow.pop %v1760
    %v1762 = vsel %vm1755, %v1761, 0.0
    %1763 = vadd.xlane.f32.xlu0 %v1762
    %v1764 = vpop.xlane.xlu0 %1763
    %v1765 = vlog2.pop %v1764
    %v1766 = vmul.f32 %v1765, 0.6931472
    %v1767 = vsub.f32 %v1759, %v1766
    %1768 = vst.msk [vmem:[#allocation2] sm:$0x3] %vm1755, %v1767
    // Predicated region
    $region22: #{cifar_classifier_forward.7} parent=1 // pred_check
      _
    $region23: #{cifar_classifier_forward.7} parent=1 // pred_check_branch
      %1770 = sbr.rel (0) target = $region25
    $region24: #{cifar_classifier_forward.7} parent=1 // pred_region
      %s1772 = ssub.s32 32, 32
      %1773 = vsyncadd [#allocation3], %s1772
      %s1775 = sshll.u32 [#allocation2], 4
      %s1776 = int_to_ptr.vmem [resolvable:$true] %s1775
      %1778 = dma.vmem_to_hbm [thread:$0]  %s1776, 32, %s5, [#allocation3]
    $region25: #{cifar_classifier_forward.7} parent=1 // pred_fallthru
      _
    // Predicated region
    $region26: #{cifar_classifier_forward.7} parent=1 // pred_check
      _
    $region27: #{cifar_classifier_forward.7} parent=1 // pred_check_branch
      %1780 = sbr.rel (0) target = $region29
    $region28: #{cifar_classifier_forward.7} parent=1 // pred_region
      %1781 = dma.done [#allocation3], 32
    $region29: #{cifar_classifier_forward.7} parent=1 // pred_fallthru
      _
    %1782 = vsyncpa [#allocation3], 1

</llo_original>
